<compile_context>
chip_gen: v7x
topology: tpu7x:2x2x1
jax: 0.10.0
libtpu: 0.0.40
codegen_flags: <defaults>
</compile_context>

<pallas_src>
import functools
import math

import jax
import jax.numpy as jnp
from jax.experimental import pallas as pl
from jax.experimental.pallas import tpu as pltpu

# ---------------- scaled-down config (module implies prefix_length=10) --------------
PREFIX_LENGTH = 10
PREFIX_SIZE = 64          # stand-in for CLIP's 512
D = 32                    # gpt_embedding_size (stand-in for 768)
N_HEAD = 4
HEAD_DIM = D // N_HEAD
N_LAYER = 2
VOCAB = 256
MAX_POS = 64

ATTN_SCALE = 1.0 / math.sqrt(HEAD_DIM)
GELU_C = math.sqrt(2.0 / math.pi)

# order of the packed weight operands passed to the fused kernel
WEIGHT_KEYS = ("cp_w1", "cp_b1", "cp_w2", "cp_b2",
               "wte", "wte_T", "wpe", "ln_all",
               "attn_w", "attn_b", "proj_w", "proj_b",
               "fc_w", "fc_b", "fcproj_w", "fcproj_b")


# --------------------- the single fused kernel (one batch row per grid step) --------
def _fused_kernel(tok_ref,                      # SMEM (B, T_tok) int32 (scalar prefetch)
                  prefix_ref,                   # VMEM (1, 1, PREFIX_SIZE)
                  cp_w1, cp_b1, cp_w2, cp_b2,   # clip_project MLP
                  wte, wte_T, wpe, ln_all,      # embeddings + packed LN params
                  attn_w, attn_b, proj_w, proj_b,
                  fc_w, fc_b, fcproj_w, fcproj_b,
                  out_ref):                     # VMEM (1, T, VOCAB)
    b = pl.program_id(0)
    t_tok = tok_ref.shape[1]
    t_all = PREFIX_LENGTH + t_tok

    def layernorm(x, g, beta):
        mu = jnp.mean(x, axis=-1, keepdims=True)
        var = jnp.mean((x - mu) * (x - mu), axis=-1, keepdims=True)
        return (x - mu) * jax.lax.rsqrt(var + 1e-5) * g + beta

    # ---- clip_project MLP: Linear -> tanh -> Linear (fused; pproj never hits HBM) ---
    px = prefix_ref[0]                                                 # (1, PREFIX_SIZE)
    hmid = jnp.tanh(
        jnp.dot(px, cp_w1[...], preferred_element_type=jnp.float32) + cp_b1[...])
    pp = jnp.dot(hmid, cp_w2[...], preferred_element_type=jnp.float32) + cp_b2[...]
    # row-major .view(-1, 10, D): (1, 10*D) -> ten (1, D) static lane slices (in vregs)
    rows = [pp[:, j * D:(j + 1) * D] for j in range(PREFIX_LENGTH)]

    # ---- embedding_text = wte(tokens): unrolled dynamic row reads (ids from SMEM) ---
    for i in range(t_tok):
        rows.append(wte[pl.ds(tok_ref[b, i], 1), :])                   # (1, D)

    # ---- torch.cat((prefix_proj, text), dim=1) + positional embeddings, in vregs ----
    h = jnp.concatenate(rows, axis=0) + wpe[0:t_all, :]                # (T, D)

    # causal mask built once, reused across all layers / heads
    row_i = jax.lax.broadcasted_iota(jnp.int32, (t_all, t_all), 0)
    col_i = jax.lax.broadcasted_iota(jnp.int32, (t_all, t_all), 1)
    causal = col_i <= row_i

    for l in range(N_LAYER):
        # ----- pre-LN causal self-attention: one fused QKV matmul + one out-proj -----
        x1 = layernorm(h, ln_all[4 * l:4 * l + 1, :], ln_all[4 * l + 1:4 * l + 2, :])
        qkv = jnp.dot(x1, attn_w[l], preferred_element_type=jnp.float32) + attn_b[l]
        heads = []
        for hd in range(N_HEAD):
            q = qkv[:, hd * HEAD_DIM:(hd + 1) * HEAD_DIM]
            k = qkv[:, D + hd * HEAD_DIM:D + (hd + 1) * HEAD_DIM]
            v = qkv[:, 2 * D + hd * HEAD_DIM:2 * D + (hd + 1) * HEAD_DIM]
            # q @ k^T without materializing a transpose
            s = jax.lax.dot_general(q, k, (((1,), (1,)), ((), ())),
                                    preferred_element_type=jnp.float32) * ATTN_SCALE
            s = jnp.where(causal, s, jnp.float32(-1e9))
            s = s - jnp.max(s, axis=-1, keepdims=True)
            p = jnp.exp(s)
            p = p / jnp.sum(p, axis=-1, keepdims=True)   # exact softmax (parity)
            heads.append(jnp.dot(p, v, preferred_element_type=jnp.float32))
        attn_out = jnp.concatenate(heads, axis=-1)                      # (T, D)
        h = h + jnp.dot(attn_out, proj_w[l],
                        preferred_element_type=jnp.float32) + proj_b[l]

        # ----- pre-LN FFN with gelu_new ----------------------------------------------
        x2 = layernorm(h, ln_all[4 * l + 2:4 * l + 3, :],
                       ln_all[4 * l + 3:4 * l + 4, :])
        f = jnp.dot(x2, fc_w[l], preferred_element_type=jnp.float32) + fc_b[l]
        f = 0.5 * f * (1.0 + jnp.tanh(GELU_C * (f + 0.044715 * f * f * f)))
        h = h + jnp.dot(f, fcproj_w[l],
                        preferred_element_type=jnp.float32) + fcproj_b[l]

    # ----- final LN + tied lm_head (pre-transposed wte, lane-dense 256-wide output) --
    hf = layernorm(h, ln_all[4 * N_LAYER:4 * N_LAYER + 1, :],
                   ln_all[4 * N_LAYER + 1:4 * N_LAYER + 2, :])
    out_ref[0] = jnp.dot(hf, wte_T[...], preferred_element_type=jnp.float32)


# ------------------------------- forward pass ---------------------------------------
def clip_caption_forward(params, tokens, prefix):
    """tokens: (B, T_tok) int32, prefix: (B, PREFIX_SIZE) f32 -> logits (B, 10+T_tok, V)."""
    B, T_tok = tokens.shape
    T = PREFIX_LENGTH + T_tok
    weights = [params[k] for k in WEIGHT_KEYS]

    def rep_spec(arr):                  # whole-array block, constant across the grid
        nd = arr.ndim
        return pl.BlockSpec(arr.shape, lambda b, tok, _nd=nd: (0,) * _nd)

    grid_spec = pltpu.PrefetchScalarGridSpec(
        num_scalar_prefetch=1,                                   # tokens -> SMEM
        grid=(B,),
        in_specs=[pl.BlockSpec((1, 1, PREFIX_SIZE), lambda b, tok: (b, 0, 0))]
                + [rep_spec(w) for w in weights],
        out_specs=pl.BlockSpec((1, T, VOCAB), lambda b, tok: (b, 0, 0)),
    )
    logits = pl.pallas_call(
        _fused_kernel,
        grid_spec=grid_spec,
        out_shape=jax.ShapeDtypeStruct((B, T, VOCAB), jnp.float32),
        compiler_params=pltpu.CompilerParams(
            dimension_semantics=("parallel",)),    # v7x: batch rows across both TCs
    )(tokens, prefix.reshape(B, 1, PREFIX_SIZE), *weights)
    # TODO(synk): when labels are given, HF also returns a cross-entropy loss; this
    # path (labels=None, mask=None) returns logits only, matching the inference forward.
    return logits


# ------------------------------ parameter init --------------------------------------
def init_params(key):
    keys = iter(jax.random.split(key, 16))

    def nrm(shape):
        return jax.random.normal(next(keys), shape, jnp.float32) * 0.02

    h1 = D * PREFIX_LENGTH // 2     # MLP branch (prefix_length <= 10)
    h2 = D * PREFIX_LENGTH
    wte = nrm((VOCAB, D))

    ln_rows, aw, ab, pw, pb, fw, fb, fpw, fpb = [], [], [], [], [], [], [], [], []
    for _ in range(N_LAYER):
        ln_rows += [jnp.ones((D,), jnp.float32), jnp.zeros((D,), jnp.float32),   # ln1
                    jnp.ones((D,), jnp.float32), jnp.zeros((D,), jnp.float32)]   # ln2
        aw.append(nrm((D, 3 * D)))                      # GPT-2 c_attn weight (fused QKV)
        ab.append(jnp.zeros((1, 3 * D), jnp.float32))
        pw.append(nrm((D, D)))                          # attn out-projection
        pb.append(jnp.zeros((1, D), jnp.float32))
        fw.append(nrm((D, 4 * D)))
        fb.append(jnp.zeros((1, 4 * D), jnp.float32))
        fpw.append(nrm((4 * D, D)))
        fpb.append(jnp.zeros((1, D), jnp.float32))
    ln_rows += [jnp.ones((D,), jnp.float32), jnp.zeros((D,), jnp.float32)]        # ln_f

    return {
        "cp_w1": nrm((PREFIX_SIZE, h1)), "cp_b1": jnp.zeros((1, h1), jnp.float32),
        "cp_w2": nrm((h1, h2)),          "cp_b2": jnp.zeros((1, h2), jnp.float32),
        "wte": wte,
        "wte_T": wte.T,                                 # tied lm_head, transposed once
        "wpe": nrm((MAX_POS, D)),
        "ln_all": jnp.stack(ln_rows),                   # (4*N_LAYER + 2, D)
        "attn_w": jnp.stack(aw),   "attn_b": jnp.stack(ab),
        "proj_w": jnp.stack(pw),   "proj_b": jnp.stack(pb),
        "fc_w": jnp.stack(fw),     "fc_b": jnp.stack(fb),
        "fcproj_w": jnp.stack(fpw), "fcproj_b": jnp.stack(fpb),
    }


# ----------------------------------- main --------------------------------------------
if __name__ == "__main__":
    key = jax.random.PRNGKey(0)
    pkey, tkey, fkey = jax.random.split(key, 3)
    params = init_params(pkey)

    B, T_tok = 2, 8
    # PyTorch uses int64 token ids; int32 on TPU (values identical for this range).
    tokens = jax.random.randint(tkey, (B, T_tok), 0, VOCAB, dtype=jnp.int32)
    prefix = jax.random.normal(fkey, (B, PREFIX_SIZE), jnp.float32)

    fwd = jax.jit(functools.partial(clip_caption_forward, params))
    logits = fwd(tokens, prefix)
    jax.block_until_ready(logits)

    assert logits.shape == (B, PREFIX_LENGTH + T_tok, VOCAB), logits.shape
    assert logits.dtype == jnp.float32
    assert bool(jnp.all(jnp.isfinite(logits)))
    print("KERNEL_OK")
</pallas_src>

<mosaic_0001>
module attributes {stable_mosaic.version = 11 : i64} {
  func.func @_fused_kernel(%arg0: i32, %arg1: memref<2x8xi32, #tpu.memory_space<smem>>, %arg2: memref<1x1x64xf32, #tpu.memory_space<vmem>>, %arg3: memref<64x160xf32, #tpu.memory_space<vmem>>, %arg4: memref<1x160xf32, #tpu.memory_space<vmem>>, %arg5: memref<160x320xf32, #tpu.memory_space<vmem>>, %arg6: memref<1x320xf32, #tpu.memory_space<vmem>>, %arg7: memref<256x32xf32, #tpu.memory_space<vmem>>, %arg8: memref<32x256xf32, #tpu.memory_space<vmem>>, %arg9: memref<64x32xf32, #tpu.memory_space<vmem>>, %arg10: memref<10x32xf32, #tpu.memory_space<vmem>>, %arg11: memref<2x32x96xf32, #tpu.memory_space<vmem>>, %arg12: memref<2x1x96xf32, #tpu.memory_space<vmem>>, %arg13: memref<2x32x32xf32, #tpu.memory_space<vmem>>, %arg14: memref<2x1x32xf32, #tpu.memory_space<vmem>>, %arg15: memref<2x32x128xf32, #tpu.memory_space<vmem>>, %arg16: memref<2x1x128xf32, #tpu.memory_space<vmem>>, %arg17: memref<2x128x32xf32, #tpu.memory_space<vmem>>, %arg18: memref<2x1x32xf32, #tpu.memory_space<vmem>>, %arg19: memref<1x18x256xf32, #tpu.memory_space<vmem>>) attributes {dimension_semantics = [#tpu.dimension_semantics<parallel>], iteration_bounds = array<i64: 2>, scalar_prefetch = 1 : i64, scratch_operands = 0 : i64, tpu.core_type = #tpu.core_type<tc>, window_params = [{transform_indices = @transform_0, window_bounds = array<i64: 1, 1, 64>}, {pipeline_mode = #tpu.pipeline_mode<synchronous>, transform_indices = @transform_1, window_bounds = array<i64: 64, 160>}, {pipeline_mode = #tpu.pipeline_mode<synchronous>, transform_indices = @transform_2, window_bounds = array<i64: 1, 160>}, {pipeline_mode = #tpu.pipeline_mode<synchronous>, transform_indices = @transform_3, window_bounds = array<i64: 160, 320>}, {pipeline_mode = #tpu.pipeline_mode<synchronous>, transform_indices = @transform_4, window_bounds = array<i64: 1, 320>}, {pipeline_mode = #tpu.pipeline_mode<synchronous>, transform_indices = @transform_5, window_bounds = array<i64: 256, 32>}, {pipeline_mode = #tpu.pipeline_mode<synchronous>, transform_indices = @transform_6, window_bounds = array<i64: 32, 256>}, {pipeline_mode = #tpu.pipeline_mode<synchronous>, transform_indices = @transform_7, window_bounds = array<i64: 64, 32>}, {pipeline_mode = #tpu.pipeline_mode<synchronous>, transform_indices = @transform_8, window_bounds = array<i64: 10, 32>}, {pipeline_mode = #tpu.pipeline_mode<synchronous>, transform_indices = @transform_9, window_bounds = array<i64: 2, 32, 96>}, {pipeline_mode = #tpu.pipeline_mode<synchronous>, transform_indices = @transform_10, window_bounds = array<i64: 2, 1, 96>}, {pipeline_mode = #tpu.pipeline_mode<synchronous>, transform_indices = @transform_11, window_bounds = array<i64: 2, 32, 32>}, {pipeline_mode = #tpu.pipeline_mode<synchronous>, transform_indices = @transform_12, window_bounds = array<i64: 2, 1, 32>}, {pipeline_mode = #tpu.pipeline_mode<synchronous>, transform_indices = @transform_13, window_bounds = array<i64: 2, 32, 128>}, {pipeline_mode = #tpu.pipeline_mode<synchronous>, transform_indices = @transform_14, window_bounds = array<i64: 2, 1, 128>}, {pipeline_mode = #tpu.pipeline_mode<synchronous>, transform_indices = @transform_15, window_bounds = array<i64: 2, 128, 32>}, {pipeline_mode = #tpu.pipeline_mode<synchronous>, transform_indices = @transform_16, window_bounds = array<i64: 2, 1, 32>}, {transform_indices = @transform_17, window_bounds = array<i64: 1, 18, 256>}]} {
    %c0 = arith.constant 0 : index
    %c0_0 = arith.constant 0 : index
    %c0_1 = arith.constant 0 : index
    %0 = vector.load %arg2[%c0, %c0_0, %c0_1] : memref<1x1x64xf32, #tpu.memory_space<vmem>>, vector<1x1x64xf32>
    %1 = vector.shape_cast %0 : vector<1x1x64xf32> to vector<1x64xf32>
    %c0_2 = arith.constant 0 : index
    %c0_3 = arith.constant 0 : index
    %2 = vector.load %arg3[%c0_2, %c0_3] : memref<64x160xf32, #tpu.memory_space<vmem>>, vector<64x160xf32>
    %cst = arith.constant dense<0.000000e+00> : vector<1x160xf32>
    %3 = tpu.matmul %1, %2, %cst {dimension_numbers = #tpu.dot_dimension_numbers<[1], [0], [0], [1], [0, 0, 1, 1], [], []>} : vector<1x64xf32>, vector<64x160xf32>, vector<1x160xf32> -> vector<1x160xf32>
    %c0_4 = arith.constant 0 : index
    %c0_5 = arith.constant 0 : index
    %4 = vector.load %arg4[%c0_4, %c0_5] : memref<1x160xf32, #tpu.memory_space<vmem>>, vector<1x160xf32>
    %5 = arith.addf %3, %4 : vector<1x160xf32>
    %6 = math.tanh %5 : vector<1x160xf32>
    %c0_6 = arith.constant 0 : index
    %c0_7 = arith.constant 0 : index
    %7 = vector.load %arg5[%c0_6, %c0_7] : memref<160x320xf32, #tpu.memory_space<vmem>>, vector<160x320xf32>
    %cst_8 = arith.constant dense<0.000000e+00> : vector<1x320xf32>
    %8 = tpu.matmul %6, %7, %cst_8 {dimension_numbers = #tpu.dot_dimension_numbers<[1], [0], [0], [1], [0, 0, 1, 1], [], []>} : vector<1x160xf32>, vector<160x320xf32>, vector<1x320xf32> -> vector<1x320xf32>
    %c0_9 = arith.constant 0 : index
    %c0_10 = arith.constant 0 : index
    %9 = vector.load %arg6[%c0_9, %c0_10] : memref<1x320xf32, #tpu.memory_space<vmem>>, vector<1x320xf32>
    %10 = arith.addf %8, %9 : vector<1x320xf32>
    %11 = vector.extract_strided_slice %10 {offsets = [0, 0], sizes = [1, 32], strides = [1, 1]} : vector<1x320xf32> to vector<1x32xf32>
    %12 = vector.extract_strided_slice %10 {offsets = [0, 32], sizes = [1, 32], strides = [1, 1]} : vector<1x320xf32> to vector<1x32xf32>
    %13 = vector.extract_strided_slice %10 {offsets = [0, 64], sizes = [1, 32], strides = [1, 1]} : vector<1x320xf32> to vector<1x32xf32>
    %14 = vector.extract_strided_slice %10 {offsets = [0, 96], sizes = [1, 32], strides = [1, 1]} : vector<1x320xf32> to vector<1x32xf32>
    %15 = vector.extract_strided_slice %10 {offsets = [0, 128], sizes = [1, 32], strides = [1, 1]} : vector<1x320xf32> to vector<1x32xf32>
    %16 = vector.extract_strided_slice %10 {offsets = [0, 160], sizes = [1, 32], strides = [1, 1]} : vector<1x320xf32> to vector<1x32xf32>
    %17 = vector.extract_strided_slice %10 {offsets = [0, 192], sizes = [1, 32], strides = [1, 1]} : vector<1x320xf32> to vector<1x32xf32>
    %18 = vector.extract_strided_slice %10 {offsets = [0, 224], sizes = [1, 32], strides = [1, 1]} : vector<1x320xf32> to vector<1x32xf32>
    %19 = vector.extract_strided_slice %10 {offsets = [0, 256], sizes = [1, 32], strides = [1, 1]} : vector<1x320xf32> to vector<1x32xf32>
    %20 = vector.extract_strided_slice %10 {offsets = [0, 288], sizes = [1, 32], strides = [1, 1]} : vector<1x320xf32> to vector<1x32xf32>
    %21 = arith.index_cast %arg0 : i32 to index
    %c0_11 = arith.constant 0 : index
    %22 = memref.load %arg1[%21, %c0_11] : memref<2x8xi32, #tpu.memory_space<smem>>
    %23 = arith.index_cast %22 : i32 to index
    %c0_12 = arith.constant 0 : index
    %24 = vector.load %arg7[%23, %c0_12] : memref<256x32xf32, #tpu.memory_space<vmem>>, vector<1x32xf32>
    %25 = arith.index_cast %arg0 : i32 to index
    %c1 = arith.constant 1 : index
    %26 = memref.load %arg1[%25, %c1] : memref<2x8xi32, #tpu.memory_space<smem>>
    %27 = arith.index_cast %26 : i32 to index
    %c0_13 = arith.constant 0 : index
    %28 = vector.load %arg7[%27, %c0_13] : memref<256x32xf32, #tpu.memory_space<vmem>>, vector<1x32xf32>
    %29 = arith.index_cast %arg0 : i32 to index
    %c2 = arith.constant 2 : index
    %30 = memref.load %arg1[%29, %c2] : memref<2x8xi32, #tpu.memory_space<smem>>
    %31 = arith.index_cast %30 : i32 to index
    %c0_14 = arith.constant 0 : index
    %32 = vector.load %arg7[%31, %c0_14] : memref<256x32xf32, #tpu.memory_space<vmem>>, vector<1x32xf32>
    %33 = arith.index_cast %arg0 : i32 to index
    %c3 = arith.constant 3 : index
    %34 = memref.load %arg1[%33, %c3] : memref<2x8xi32, #tpu.memory_space<smem>>
    %35 = arith.index_cast %34 : i32 to index
    %c0_15 = arith.constant 0 : index
    %36 = vector.load %arg7[%35, %c0_15] : memref<256x32xf32, #tpu.memory_space<vmem>>, vector<1x32xf32>
    %37 = arith.index_cast %arg0 : i32 to index
    %c4 = arith.constant 4 : index
    %38 = memref.load %arg1[%37, %c4] : memref<2x8xi32, #tpu.memory_space<smem>>
    %39 = arith.index_cast %38 : i32 to index
    %c0_16 = arith.constant 0 : index
    %40 = vector.load %arg7[%39, %c0_16] : memref<256x32xf32, #tpu.memory_space<vmem>>, vector<1x32xf32>
    %41 = arith.index_cast %arg0 : i32 to index
    %c5 = arith.constant 5 : index
    %42 = memref.load %arg1[%41, %c5] : memref<2x8xi32, #tpu.memory_space<smem>>
    %43 = arith.index_cast %42 : i32 to index
    %c0_17 = arith.constant 0 : index
    %44 = vector.load %arg7[%43, %c0_17] : memref<256x32xf32, #tpu.memory_space<vmem>>, vector<1x32xf32>
    %45 = arith.index_cast %arg0 : i32 to index
    %c6 = arith.constant 6 : index
    %46 = memref.load %arg1[%45, %c6] : memref<2x8xi32, #tpu.memory_space<smem>>
    %47 = arith.index_cast %46 : i32 to index
    %c0_18 = arith.constant 0 : index
    %48 = vector.load %arg7[%47, %c0_18] : memref<256x32xf32, #tpu.memory_space<vmem>>, vector<1x32xf32>
    %49 = arith.index_cast %arg0 : i32 to index
    %c7 = arith.constant 7 : index
    %50 = memref.load %arg1[%49, %c7] : memref<2x8xi32, #tpu.memory_space<smem>>
    %51 = arith.index_cast %50 : i32 to index
    %c0_19 = arith.constant 0 : index
    %52 = vector.load %arg7[%51, %c0_19] : memref<256x32xf32, #tpu.memory_space<vmem>>, vector<1x32xf32>
    %53 = tpu.concatenate %11, %12, %13, %14, %15, %16, %17, %18, %19, %20, %24, %28, %32, %36, %40, %44 in 0 : vector<1x32xf32>, vector<1x32xf32>, vector<1x32xf32>, vector<1x32xf32>, vector<1x32xf32>, vector<1x32xf32>, vector<1x32xf32>, vector<1x32xf32>, vector<1x32xf32>, vector<1x32xf32>, vector<1x32xf32>, vector<1x32xf32>, vector<1x32xf32>, vector<1x32xf32>, vector<1x32xf32>, vector<1x32xf32> -> vector<16x32xf32>
    %54 = tpu.concatenate %48, %52 in 0 : vector<1x32xf32>, vector<1x32xf32> -> vector<2x32xf32>
    %55 = tpu.concatenate %53, %54 in 0 : vector<16x32xf32>, vector<2x32xf32> -> vector<18x32xf32>
    %c0_20 = arith.constant 0 : index
    %c0_21 = arith.constant 0 : index
    %56 = vector.load %arg9[%c0_20, %c0_21] : memref<64x32xf32, #tpu.memory_space<vmem>>, vector<18x32xf32>
    %57 = arith.addf %55, %56 : vector<18x32xf32>
    %58 = tpu.iota {dimensions = array<i32: 0>} : vector<18x18xi32>
    %59 = tpu.iota {dimensions = array<i32: 1>} : vector<18x18xi32>
    %60 = arith.cmpi sle, %59, %58 : vector<18x18xi32>
    %c0_22 = arith.constant 0 : index
    %c0_23 = arith.constant 0 : index
    %61 = vector.load %arg10[%c0_22, %c0_23] : memref<10x32xf32, #tpu.memory_space<vmem>>, vector<1x32xf32>
    %c1_24 = arith.constant 1 : index
    %c0_25 = arith.constant 0 : index
    %62 = vector.load %arg10[%c1_24, %c0_25] : memref<10x32xf32, #tpu.memory_space<vmem>>, vector<1x32xf32>
    %cst_26 = arith.constant dense<0.000000e+00> : vector<18xf32>
    %63 = vector.multi_reduction <add>, %57, %cst_26 [1] : vector<18x32xf32> to vector<18xf32>
    %64 = vector.shape_cast %63 : vector<18xf32> to vector<18x1xf32>
    %cst_27 = arith.constant 3.200000e+01 : f32
    %65 = vector.broadcast %cst_27 : f32 to vector<18x1xf32>
    %66 = arith.divf %64, %65 : vector<18x1xf32>
    %67 = vector.broadcast %66 : vector<18x1xf32> to vector<18x32xf32>
    %68 = arith.subf %57, %67 : vector<18x32xf32>
    %69 = vector.broadcast %66 : vector<18x1xf32> to vector<18x32xf32>
    %70 = arith.subf %57, %69 : vector<18x32xf32>
    %71 = arith.mulf %68, %70 : vector<18x32xf32>
    %cst_28 = arith.constant dense<0.000000e+00> : vector<18xf32>
    %72 = vector.multi_reduction <add>, %71, %cst_28 [1] : vector<18x32xf32> to vector<18xf32>
    %73 = vector.shape_cast %72 : vector<18xf32> to vector<18x1xf32>
    %cst_29 = arith.constant 3.200000e+01 : f32
    %74 = vector.broadcast %cst_29 : f32 to vector<18x1xf32>
    %75 = arith.divf %73, %74 : vector<18x1xf32>
    %76 = vector.broadcast %66 : vector<18x1xf32> to vector<18x32xf32>
    %77 = arith.subf %57, %76 : vector<18x32xf32>
    %cst_30 = arith.constant 9.99999974E-6 : f32
    %78 = vector.broadcast %cst_30 : f32 to vector<18x1xf32>
    %79 = arith.addf %75, %78 : vector<18x1xf32>
    %80 = math.rsqrt %79 : vector<18x1xf32>
    %81 = vector.broadcast %80 : vector<18x1xf32> to vector<18x32xf32>
    %82 = arith.mulf %77, %81 : vector<18x32xf32>
    %83 = vector.broadcast %61 : vector<1x32xf32> to vector<18x32xf32>
    %84 = arith.mulf %82, %83 : vector<18x32xf32>
    %85 = vector.broadcast %62 : vector<1x32xf32> to vector<18x32xf32>
    %86 = arith.addf %84, %85 : vector<18x32xf32>
    %c0_31 = arith.constant 0 : index
    %c0_32 = arith.constant 0 : index
    %c0_33 = arith.constant 0 : index
    %87 = vector.load %arg11[%c0_31, %c0_32, %c0_33] : memref<2x32x96xf32, #tpu.memory_space<vmem>>, vector<1x32x96xf32>
    %88 = vector.shape_cast %87 : vector<1x32x96xf32> to vector<32x96xf32>
    %cst_34 = arith.constant dense<0.000000e+00> : vector<18x96xf32>
    %89 = tpu.matmul %86, %88, %cst_34 {dimension_numbers = #tpu.dot_dimension_numbers<[1], [0], [0], [1], [0, 0, 1, 1], [], []>} : vector<18x32xf32>, vector<32x96xf32>, vector<18x96xf32> -> vector<18x96xf32>
    %c0_35 = arith.constant 0 : index
    %c0_36 = arith.constant 0 : index
    %c0_37 = arith.constant 0 : index
    %90 = vector.load %arg12[%c0_35, %c0_36, %c0_37] : memref<2x1x96xf32, #tpu.memory_space<vmem>>, vector<1x1x96xf32>
    %91 = vector.shape_cast %90 : vector<1x1x96xf32> to vector<1x96xf32>
    %92 = vector.broadcast %91 : vector<1x96xf32> to vector<18x96xf32>
    %93 = arith.addf %89, %92 : vector<18x96xf32>
    %94 = vector.extract_strided_slice %93 {offsets = [0, 0], sizes = [18, 8], strides = [1, 1]} : vector<18x96xf32> to vector<18x8xf32>
    %95 = vector.extract_strided_slice %93 {offsets = [0, 32], sizes = [18, 8], strides = [1, 1]} : vector<18x96xf32> to vector<18x8xf32>
    %96 = vector.extract_strided_slice %93 {offsets = [0, 64], sizes = [18, 8], strides = [1, 1]} : vector<18x96xf32> to vector<18x8xf32>
    %cst_38 = arith.constant dense<0.000000e+00> : vector<18x18xf32>
    %97 = tpu.matmul %94, %95, %cst_38 {dimension_numbers = #tpu.dot_dimension_numbers<[1], [1], [0], [0], [0, 0, 1, 0], [], []>} : vector<18x8xf32>, vector<18x8xf32>, vector<18x18xf32> -> vector<18x18xf32>
    %cst_39 = arith.constant 0.353553385 : f32
    %98 = vector.broadcast %cst_39 : f32 to vector<18x18xf32>
    %99 = arith.mulf %97, %98 : vector<18x18xf32>
    %cst_40 = arith.constant -1.000000e+09 : f32
    %100 = vector.broadcast %cst_40 : f32 to vector<18x18xf32>
    %101 = arith.select %60, %99, %100 : vector<18x18xi1>, vector<18x18xf32>
    %cst_41 = arith.constant dense<0xFF800000> : vector<18xf32>
    %102 = vector.multi_reduction <maximumf>, %101, %cst_41 [1] : vector<18x18xf32> to vector<18xf32>
    %103 = vector.shape_cast %102 : vector<18xf32> to vector<18x1xf32>
    %104 = vector.broadcast %103 : vector<18x1xf32> to vector<18x18xf32>
    %105 = arith.subf %101, %104 : vector<18x18xf32>
    %106 = math.exp %105 : vector<18x18xf32>
    %cst_42 = arith.constant dense<0.000000e+00> : vector<18xf32>
    %107 = vector.multi_reduction <add>, %106, %cst_42 [1] : vector<18x18xf32> to vector<18xf32>
    %108 = vector.shape_cast %107 : vector<18xf32> to vector<18x1xf32>
    %109 = vector.broadcast %108 : vector<18x1xf32> to vector<18x18xf32>
    %110 = arith.divf %106, %109 : vector<18x18xf32>
    %cst_43 = arith.constant dense<0.000000e+00> : vector<18x8xf32>
    %111 = tpu.matmul %110, %96, %cst_43 {dimension_numbers = #tpu.dot_dimension_numbers<[1], [0], [0], [1], [0, 0, 1, 1], [], []>} : vector<18x18xf32>, vector<18x8xf32>, vector<18x8xf32> -> vector<18x8xf32>
    %112 = vector.extract_strided_slice %93 {offsets = [0, 8], sizes = [18, 8], strides = [1, 1]} : vector<18x96xf32> to vector<18x8xf32>
    %113 = vector.extract_strided_slice %93 {offsets = [0, 40], sizes = [18, 8], strides = [1, 1]} : vector<18x96xf32> to vector<18x8xf32>
    %114 = vector.extract_strided_slice %93 {offsets = [0, 72], sizes = [18, 8], strides = [1, 1]} : vector<18x96xf32> to vector<18x8xf32>
    %cst_44 = arith.constant dense<0.000000e+00> : vector<18x18xf32>
    %115 = tpu.matmul %112, %113, %cst_44 {dimension_numbers = #tpu.dot_dimension_numbers<[1], [1], [0], [0], [0, 0, 1, 0], [], []>} : vector<18x8xf32>, vector<18x8xf32>, vector<18x18xf32> -> vector<18x18xf32>
    %cst_45 = arith.constant 0.353553385 : f32
    %116 = vector.broadcast %cst_45 : f32 to vector<18x18xf32>
    %117 = arith.mulf %115, %116 : vector<18x18xf32>
    %cst_46 = arith.constant -1.000000e+09 : f32
    %118 = vector.broadcast %cst_46 : f32 to vector<18x18xf32>
    %119 = arith.select %60, %117, %118 : vector<18x18xi1>, vector<18x18xf32>
    %cst_47 = arith.constant dense<0xFF800000> : vector<18xf32>
    %120 = vector.multi_reduction <maximumf>, %119, %cst_47 [1] : vector<18x18xf32> to vector<18xf32>
    %121 = vector.shape_cast %120 : vector<18xf32> to vector<18x1xf32>
    %122 = vector.broadcast %121 : vector<18x1xf32> to vector<18x18xf32>
    %123 = arith.subf %119, %122 : vector<18x18xf32>
    %124 = math.exp %123 : vector<18x18xf32>
    %cst_48 = arith.constant dense<0.000000e+00> : vector<18xf32>
    %125 = vector.multi_reduction <add>, %124, %cst_48 [1] : vector<18x18xf32> to vector<18xf32>
    %126 = vector.shape_cast %125 : vector<18xf32> to vector<18x1xf32>
    %127 = vector.broadcast %126 : vector<18x1xf32> to vector<18x18xf32>
    %128 = arith.divf %124, %127 : vector<18x18xf32>
    %cst_49 = arith.constant dense<0.000000e+00> : vector<18x8xf32>
    %129 = tpu.matmul %128, %114, %cst_49 {dimension_numbers = #tpu.dot_dimension_numbers<[1], [0], [0], [1], [0, 0, 1, 1], [], []>} : vector<18x18xf32>, vector<18x8xf32>, vector<18x8xf32> -> vector<18x8xf32>
    %130 = vector.extract_strided_slice %93 {offsets = [0, 16], sizes = [18, 8], strides = [1, 1]} : vector<18x96xf32> to vector<18x8xf32>
    %131 = vector.extract_strided_slice %93 {offsets = [0, 48], sizes = [18, 8], strides = [1, 1]} : vector<18x96xf32> to vector<18x8xf32>
    %132 = vector.extract_strided_slice %93 {offsets = [0, 80], sizes = [18, 8], strides = [1, 1]} : vector<18x96xf32> to vector<18x8xf32>
    %cst_50 = arith.constant dense<0.000000e+00> : vector<18x18xf32>
    %133 = tpu.matmul %130, %131, %cst_50 {dimension_numbers = #tpu.dot_dimension_numbers<[1], [1], [0], [0], [0, 0, 1, 0], [], []>} : vector<18x8xf32>, vector<18x8xf32>, vector<18x18xf32> -> vector<18x18xf32>
    %cst_51 = arith.constant 0.353553385 : f32
    %134 = vector.broadcast %cst_51 : f32 to vector<18x18xf32>
    %135 = arith.mulf %133, %134 : vector<18x18xf32>
    %cst_52 = arith.constant -1.000000e+09 : f32
    %136 = vector.broadcast %cst_52 : f32 to vector<18x18xf32>
    %137 = arith.select %60, %135, %136 : vector<18x18xi1>, vector<18x18xf32>
    %cst_53 = arith.constant dense<0xFF800000> : vector<18xf32>
    %138 = vector.multi_reduction <maximumf>, %137, %cst_53 [1] : vector<18x18xf32> to vector<18xf32>
    %139 = vector.shape_cast %138 : vector<18xf32> to vector<18x1xf32>
    %140 = vector.broadcast %139 : vector<18x1xf32> to vector<18x18xf32>
    %141 = arith.subf %137, %140 : vector<18x18xf32>
    %142 = math.exp %141 : vector<18x18xf32>
    %cst_54 = arith.constant dense<0.000000e+00> : vector<18xf32>
    %143 = vector.multi_reduction <add>, %142, %cst_54 [1] : vector<18x18xf32> to vector<18xf32>
    %144 = vector.shape_cast %143 : vector<18xf32> to vector<18x1xf32>
    %145 = vector.broadcast %144 : vector<18x1xf32> to vector<18x18xf32>
    %146 = arith.divf %142, %145 : vector<18x18xf32>
    %cst_55 = arith.constant dense<0.000000e+00> : vector<18x8xf32>
    %147 = tpu.matmul %146, %132, %cst_55 {dimension_numbers = #tpu.dot_dimension_numbers<[1], [0], [0], [1], [0, 0, 1, 1], [], []>} : vector<18x18xf32>, vector<18x8xf32>, vector<18x8xf32> -> vector<18x8xf32>
    %148 = vector.extract_strided_slice %93 {offsets = [0, 24], sizes = [18, 8], strides = [1, 1]} : vector<18x96xf32> to vector<18x8xf32>
    %149 = vector.extract_strided_slice %93 {offsets = [0, 56], sizes = [18, 8], strides = [1, 1]} : vector<18x96xf32> to vector<18x8xf32>
    %150 = vector.extract_strided_slice %93 {offsets = [0, 88], sizes = [18, 8], strides = [1, 1]} : vector<18x96xf32> to vector<18x8xf32>
    %cst_56 = arith.constant dense<0.000000e+00> : vector<18x18xf32>
    %151 = tpu.matmul %148, %149, %cst_56 {dimension_numbers = #tpu.dot_dimension_numbers<[1], [1], [0], [0], [0, 0, 1, 0], [], []>} : vector<18x8xf32>, vector<18x8xf32>, vector<18x18xf32> -> vector<18x18xf32>
    %cst_57 = arith.constant 0.353553385 : f32
    %152 = vector.broadcast %cst_57 : f32 to vector<18x18xf32>
    %153 = arith.mulf %151, %152 : vector<18x18xf32>
    %cst_58 = arith.constant -1.000000e+09 : f32
    %154 = vector.broadcast %cst_58 : f32 to vector<18x18xf32>
    %155 = arith.select %60, %153, %154 : vector<18x18xi1>, vector<18x18xf32>
    %cst_59 = arith.constant dense<0xFF800000> : vector<18xf32>
    %156 = vector.multi_reduction <maximumf>, %155, %cst_59 [1] : vector<18x18xf32> to vector<18xf32>
    %157 = vector.shape_cast %156 : vector<18xf32> to vector<18x1xf32>
    %158 = vector.broadcast %157 : vector<18x1xf32> to vector<18x18xf32>
    %159 = arith.subf %155, %158 : vector<18x18xf32>
    %160 = math.exp %159 : vector<18x18xf32>
    %cst_60 = arith.constant dense<0.000000e+00> : vector<18xf32>
    %161 = vector.multi_reduction <add>, %160, %cst_60 [1] : vector<18x18xf32> to vector<18xf32>
    %162 = vector.shape_cast %161 : vector<18xf32> to vector<18x1xf32>
    %163 = vector.broadcast %162 : vector<18x1xf32> to vector<18x18xf32>
    %164 = arith.divf %160, %163 : vector<18x18xf32>
    %cst_61 = arith.constant dense<0.000000e+00> : vector<18x8xf32>
    %165 = tpu.matmul %164, %150, %cst_61 {dimension_numbers = #tpu.dot_dimension_numbers<[1], [0], [0], [1], [0, 0, 1, 1], [], []>} : vector<18x18xf32>, vector<18x8xf32>, vector<18x8xf32> -> vector<18x8xf32>
    %166 = tpu.concatenate %111, %129, %147, %165 in 1 : vector<18x8xf32>, vector<18x8xf32>, vector<18x8xf32>, vector<18x8xf32> -> vector<18x32xf32>
    %c0_62 = arith.constant 0 : index
    %c0_63 = arith.constant 0 : index
    %c0_64 = arith.constant 0 : index
    %167 = vector.load %arg13[%c0_62, %c0_63, %c0_64] : memref<2x32x32xf32, #tpu.memory_space<vmem>>, vector<1x32x32xf32>
    %168 = vector.shape_cast %167 : vector<1x32x32xf32> to vector<32x32xf32>
    %cst_65 = arith.constant dense<0.000000e+00> : vector<18x32xf32>
    %169 = tpu.matmul %166, %168, %cst_65 {dimension_numbers = #tpu.dot_dimension_numbers<[1], [0], [0], [1], [0, 0, 1, 1], [], []>} : vector<18x32xf32>, vector<32x32xf32>, vector<18x32xf32> -> vector<18x32xf32>
    %170 = arith.addf %57, %169 : vector<18x32xf32>
    %c0_66 = arith.constant 0 : index
    %c0_67 = arith.constant 0 : index
    %c0_68 = arith.constant 0 : index
    %171 = vector.load %arg14[%c0_66, %c0_67, %c0_68] : memref<2x1x32xf32, #tpu.memory_space<vmem>>, vector<1x1x32xf32>
    %172 = vector.shape_cast %171 : vector<1x1x32xf32> to vector<1x32xf32>
    %173 = vector.broadcast %172 : vector<1x32xf32> to vector<18x32xf32>
    %174 = arith.addf %170, %173 : vector<18x32xf32>
    %c2_69 = arith.constant 2 : index
    %c0_70 = arith.constant 0 : index
    %175 = vector.load %arg10[%c2_69, %c0_70] : memref<10x32xf32, #tpu.memory_space<vmem>>, vector<1x32xf32>
    %c3_71 = arith.constant 3 : index
    %c0_72 = arith.constant 0 : index
    %176 = vector.load %arg10[%c3_71, %c0_72] : memref<10x32xf32, #tpu.memory_space<vmem>>, vector<1x32xf32>
    %cst_73 = arith.constant dense<0.000000e+00> : vector<18xf32>
    %177 = vector.multi_reduction <add>, %174, %cst_73 [1] : vector<18x32xf32> to vector<18xf32>
    %178 = vector.shape_cast %177 : vector<18xf32> to vector<18x1xf32>
    %cst_74 = arith.constant 3.200000e+01 : f32
    %179 = vector.broadcast %cst_74 : f32 to vector<18x1xf32>
    %180 = arith.divf %178, %179 : vector<18x1xf32>
    %181 = vector.broadcast %180 : vector<18x1xf32> to vector<18x32xf32>
    %182 = arith.subf %174, %181 : vector<18x32xf32>
    %183 = vector.broadcast %180 : vector<18x1xf32> to vector<18x32xf32>
    %184 = arith.subf %174, %183 : vector<18x32xf32>
    %185 = arith.mulf %182, %184 : vector<18x32xf32>
    %cst_75 = arith.constant dense<0.000000e+00> : vector<18xf32>
    %186 = vector.multi_reduction <add>, %185, %cst_75 [1] : vector<18x32xf32> to vector<18xf32>
    %187 = vector.shape_cast %186 : vector<18xf32> to vector<18x1xf32>
    %cst_76 = arith.constant 3.200000e+01 : f32
    %188 = vector.broadcast %cst_76 : f32 to vector<18x1xf32>
    %189 = arith.divf %187, %188 : vector<18x1xf32>
    %190 = vector.broadcast %180 : vector<18x1xf32> to vector<18x32xf32>
    %191 = arith.subf %174, %190 : vector<18x32xf32>
    %cst_77 = arith.constant 9.99999974E-6 : f32
    %192 = vector.broadcast %cst_77 : f32 to vector<18x1xf32>
    %193 = arith.addf %189, %192 : vector<18x1xf32>
    %194 = math.rsqrt %193 : vector<18x1xf32>
    %195 = vector.broadcast %194 : vector<18x1xf32> to vector<18x32xf32>
    %196 = arith.mulf %191, %195 : vector<18x32xf32>
    %197 = vector.broadcast %175 : vector<1x32xf32> to vector<18x32xf32>
    %198 = arith.mulf %196, %197 : vector<18x32xf32>
    %199 = vector.broadcast %176 : vector<1x32xf32> to vector<18x32xf32>
    %200 = arith.addf %198, %199 : vector<18x32xf32>
    %c0_78 = arith.constant 0 : index
    %c0_79 = arith.constant 0 : index
    %c0_80 = arith.constant 0 : index
    %201 = vector.load %arg15[%c0_78, %c0_79, %c0_80] : memref<2x32x128xf32, #tpu.memory_space<vmem>>, vector<1x32x128xf32>
    %202 = vector.shape_cast %201 : vector<1x32x128xf32> to vector<32x128xf32>
    %cst_81 = arith.constant dense<0.000000e+00> : vector<18x128xf32>
    %203 = tpu.matmul %200, %202, %cst_81 {dimension_numbers = #tpu.dot_dimension_numbers<[1], [0], [0], [1], [0, 0, 1, 1], [], []>} : vector<18x32xf32>, vector<32x128xf32>, vector<18x128xf32> -> vector<18x128xf32>
    %c0_82 = arith.constant 0 : index
    %c0_83 = arith.constant 0 : index
    %c0_84 = arith.constant 0 : index
    %204 = vector.load %arg16[%c0_82, %c0_83, %c0_84] : memref<2x1x128xf32, #tpu.memory_space<vmem>>, vector<1x1x128xf32>
    %205 = vector.shape_cast %204 : vector<1x1x128xf32> to vector<1x128xf32>
    %206 = vector.broadcast %205 : vector<1x128xf32> to vector<18x128xf32>
    %207 = arith.addf %203, %206 : vector<18x128xf32>
    %cst_85 = arith.constant 5.000000e-01 : f32
    %208 = vector.broadcast %cst_85 : f32 to vector<18x128xf32>
    %209 = arith.mulf %208, %207 : vector<18x128xf32>
    %cst_86 = arith.constant 4.471500e-02 : f32
    %210 = vector.broadcast %cst_86 : f32 to vector<18x128xf32>
    %211 = arith.mulf %210, %207 : vector<18x128xf32>
    %212 = arith.mulf %211, %207 : vector<18x128xf32>
    %213 = arith.mulf %212, %207 : vector<18x128xf32>
    %214 = arith.addf %207, %213 : vector<18x128xf32>
    %cst_87 = arith.constant 0.797884583 : f32
    %215 = vector.broadcast %cst_87 : f32 to vector<18x128xf32>
    %216 = arith.mulf %215, %214 : vector<18x128xf32>
    %217 = math.tanh %216 : vector<18x128xf32>
    %cst_88 = arith.constant 1.000000e+00 : f32
    %218 = vector.broadcast %cst_88 : f32 to vector<18x128xf32>
    %219 = arith.addf %218, %217 : vector<18x128xf32>
    %220 = arith.mulf %209, %219 : vector<18x128xf32>
    %c0_89 = arith.constant 0 : index
    %c0_90 = arith.constant 0 : index
    %c0_91 = arith.constant 0 : index
    %221 = vector.load %arg17[%c0_89, %c0_90, %c0_91] : memref<2x128x32xf32, #tpu.memory_space<vmem>>, vector<1x128x32xf32>
    %222 = vector.shape_cast %221 : vector<1x128x32xf32> to vector<128x32xf32>
    %cst_92 = arith.constant dense<0.000000e+00> : vector<18x32xf32>
    %223 = tpu.matmul %220, %222, %cst_92 {dimension_numbers = #tpu.dot_dimension_numbers<[1], [0], [0], [1], [0, 0, 1, 1], [], []>} : vector<18x128xf32>, vector<128x32xf32>, vector<18x32xf32> -> vector<18x32xf32>
    %224 = arith.addf %174, %223 : vector<18x32xf32>
    %c0_93 = arith.constant 0 : index
    %c0_94 = arith.constant 0 : index
    %c0_95 = arith.constant 0 : index
    %225 = vector.load %arg18[%c0_93, %c0_94, %c0_95] : memref<2x1x32xf32, #tpu.memory_space<vmem>>, vector<1x1x32xf32>
    %226 = vector.shape_cast %225 : vector<1x1x32xf32> to vector<1x32xf32>
    %227 = vector.broadcast %226 : vector<1x32xf32> to vector<18x32xf32>
    %228 = arith.addf %224, %227 : vector<18x32xf32>
    %c4_96 = arith.constant 4 : index
    %c0_97 = arith.constant 0 : index
    %229 = vector.load %arg10[%c4_96, %c0_97] : memref<10x32xf32, #tpu.memory_space<vmem>>, vector<1x32xf32>
    %c5_98 = arith.constant 5 : index
    %c0_99 = arith.constant 0 : index
    %230 = vector.load %arg10[%c5_98, %c0_99] : memref<10x32xf32, #tpu.memory_space<vmem>>, vector<1x32xf32>
    %cst_100 = arith.constant dense<0.000000e+00> : vector<18xf32>
    %231 = vector.multi_reduction <add>, %228, %cst_100 [1] : vector<18x32xf32> to vector<18xf32>
    %232 = vector.shape_cast %231 : vector<18xf32> to vector<18x1xf32>
    %cst_101 = arith.constant 3.200000e+01 : f32
    %233 = vector.broadcast %cst_101 : f32 to vector<18x1xf32>
    %234 = arith.divf %232, %233 : vector<18x1xf32>
    %235 = vector.broadcast %234 : vector<18x1xf32> to vector<18x32xf32>
    %236 = arith.subf %228, %235 : vector<18x32xf32>
    %237 = vector.broadcast %234 : vector<18x1xf32> to vector<18x32xf32>
    %238 = arith.subf %228, %237 : vector<18x32xf32>
    %239 = arith.mulf %236, %238 : vector<18x32xf32>
    %cst_102 = arith.constant dense<0.000000e+00> : vector<18xf32>
    %240 = vector.multi_reduction <add>, %239, %cst_102 [1] : vector<18x32xf32> to vector<18xf32>
    %241 = vector.shape_cast %240 : vector<18xf32> to vector<18x1xf32>
    %cst_103 = arith.constant 3.200000e+01 : f32
    %242 = vector.broadcast %cst_103 : f32 to vector<18x1xf32>
    %243 = arith.divf %241, %242 : vector<18x1xf32>
    %244 = vector.broadcast %234 : vector<18x1xf32> to vector<18x32xf32>
    %245 = arith.subf %228, %244 : vector<18x32xf32>
    %cst_104 = arith.constant 9.99999974E-6 : f32
    %246 = vector.broadcast %cst_104 : f32 to vector<18x1xf32>
    %247 = arith.addf %243, %246 : vector<18x1xf32>
    %248 = math.rsqrt %247 : vector<18x1xf32>
    %249 = vector.broadcast %248 : vector<18x1xf32> to vector<18x32xf32>
    %250 = arith.mulf %245, %249 : vector<18x32xf32>
    %251 = vector.broadcast %229 : vector<1x32xf32> to vector<18x32xf32>
    %252 = arith.mulf %250, %251 : vector<18x32xf32>
    %253 = vector.broadcast %230 : vector<1x32xf32> to vector<18x32xf32>
    %254 = arith.addf %252, %253 : vector<18x32xf32>
    %c1_105 = arith.constant 1 : index
    %c0_106 = arith.constant 0 : index
    %c0_107 = arith.constant 0 : index
    %255 = vector.load %arg11[%c1_105, %c0_106, %c0_107] : memref<2x32x96xf32, #tpu.memory_space<vmem>>, vector<1x32x96xf32>
    %256 = vector.shape_cast %255 : vector<1x32x96xf32> to vector<32x96xf32>
    %cst_108 = arith.constant dense<0.000000e+00> : vector<18x96xf32>
    %257 = tpu.matmul %254, %256, %cst_108 {dimension_numbers = #tpu.dot_dimension_numbers<[1], [0], [0], [1], [0, 0, 1, 1], [], []>} : vector<18x32xf32>, vector<32x96xf32>, vector<18x96xf32> -> vector<18x96xf32>
    %c1_109 = arith.constant 1 : index
    %c0_110 = arith.constant 0 : index
    %c0_111 = arith.constant 0 : index
    %258 = vector.load %arg12[%c1_109, %c0_110, %c0_111] : memref<2x1x96xf32, #tpu.memory_space<vmem>>, vector<1x1x96xf32>
    %259 = vector.shape_cast %258 : vector<1x1x96xf32> to vector<1x96xf32>
    %260 = vector.broadcast %259 : vector<1x96xf32> to vector<18x96xf32>
    %261 = arith.addf %257, %260 : vector<18x96xf32>
    %262 = vector.extract_strided_slice %261 {offsets = [0, 0], sizes = [18, 8], strides = [1, 1]} : vector<18x96xf32> to vector<18x8xf32>
    %263 = vector.extract_strided_slice %261 {offsets = [0, 32], sizes = [18, 8], strides = [1, 1]} : vector<18x96xf32> to vector<18x8xf32>
    %264 = vector.extract_strided_slice %261 {offsets = [0, 64], sizes = [18, 8], strides = [1, 1]} : vector<18x96xf32> to vector<18x8xf32>
    %cst_112 = arith.constant dense<0.000000e+00> : vector<18x18xf32>
    %265 = tpu.matmul %262, %263, %cst_112 {dimension_numbers = #tpu.dot_dimension_numbers<[1], [1], [0], [0], [0, 0, 1, 0], [], []>} : vector<18x8xf32>, vector<18x8xf32>, vector<18x18xf32> -> vector<18x18xf32>
    %cst_113 = arith.constant 0.353553385 : f32
    %266 = vector.broadcast %cst_113 : f32 to vector<18x18xf32>
    %267 = arith.mulf %265, %266 : vector<18x18xf32>
    %cst_114 = arith.constant -1.000000e+09 : f32
    %268 = vector.broadcast %cst_114 : f32 to vector<18x18xf32>
    %269 = arith.select %60, %267, %268 : vector<18x18xi1>, vector<18x18xf32>
    %cst_115 = arith.constant dense<0xFF800000> : vector<18xf32>
    %270 = vector.multi_reduction <maximumf>, %269, %cst_115 [1] : vector<18x18xf32> to vector<18xf32>
    %271 = vector.shape_cast %270 : vector<18xf32> to vector<18x1xf32>
    %272 = vector.broadcast %271 : vector<18x1xf32> to vector<18x18xf32>
    %273 = arith.subf %269, %272 : vector<18x18xf32>
    %274 = math.exp %273 : vector<18x18xf32>
    %cst_116 = arith.constant dense<0.000000e+00> : vector<18xf32>
    %275 = vector.multi_reduction <add>, %274, %cst_116 [1] : vector<18x18xf32> to vector<18xf32>
    %276 = vector.shape_cast %275 : vector<18xf32> to vector<18x1xf32>
    %277 = vector.broadcast %276 : vector<18x1xf32> to vector<18x18xf32>
    %278 = arith.divf %274, %277 : vector<18x18xf32>
    %cst_117 = arith.constant dense<0.000000e+00> : vector<18x8xf32>
    %279 = tpu.matmul %278, %264, %cst_117 {dimension_numbers = #tpu.dot_dimension_numbers<[1], [0], [0], [1], [0, 0, 1, 1], [], []>} : vector<18x18xf32>, vector<18x8xf32>, vector<18x8xf32> -> vector<18x8xf32>
    %280 = vector.extract_strided_slice %261 {offsets = [0, 8], sizes = [18, 8], strides = [1, 1]} : vector<18x96xf32> to vector<18x8xf32>
    %281 = vector.extract_strided_slice %261 {offsets = [0, 40], sizes = [18, 8], strides = [1, 1]} : vector<18x96xf32> to vector<18x8xf32>
    %282 = vector.extract_strided_slice %261 {offsets = [0, 72], sizes = [18, 8], strides = [1, 1]} : vector<18x96xf32> to vector<18x8xf32>
    %cst_118 = arith.constant dense<0.000000e+00> : vector<18x18xf32>
    %283 = tpu.matmul %280, %281, %cst_118 {dimension_numbers = #tpu.dot_dimension_numbers<[1], [1], [0], [0], [0, 0, 1, 0], [], []>} : vector<18x8xf32>, vector<18x8xf32>, vector<18x18xf32> -> vector<18x18xf32>
    %cst_119 = arith.constant 0.353553385 : f32
    %284 = vector.broadcast %cst_119 : f32 to vector<18x18xf32>
    %285 = arith.mulf %283, %284 : vector<18x18xf32>
    %cst_120 = arith.constant -1.000000e+09 : f32
    %286 = vector.broadcast %cst_120 : f32 to vector<18x18xf32>
    %287 = arith.select %60, %285, %286 : vector<18x18xi1>, vector<18x18xf32>
    %cst_121 = arith.constant dense<0xFF800000> : vector<18xf32>
    %288 = vector.multi_reduction <maximumf>, %287, %cst_121 [1] : vector<18x18xf32> to vector<18xf32>
    %289 = vector.shape_cast %288 : vector<18xf32> to vector<18x1xf32>
    %290 = vector.broadcast %289 : vector<18x1xf32> to vector<18x18xf32>
    %291 = arith.subf %287, %290 : vector<18x18xf32>
    %292 = math.exp %291 : vector<18x18xf32>
    %cst_122 = arith.constant dense<0.000000e+00> : vector<18xf32>
    %293 = vector.multi_reduction <add>, %292, %cst_122 [1] : vector<18x18xf32> to vector<18xf32>
    %294 = vector.shape_cast %293 : vector<18xf32> to vector<18x1xf32>
    %295 = vector.broadcast %294 : vector<18x1xf32> to vector<18x18xf32>
    %296 = arith.divf %292, %295 : vector<18x18xf32>
    %cst_123 = arith.constant dense<0.000000e+00> : vector<18x8xf32>
    %297 = tpu.matmul %296, %282, %cst_123 {dimension_numbers = #tpu.dot_dimension_numbers<[1], [0], [0], [1], [0, 0, 1, 1], [], []>} : vector<18x18xf32>, vector<18x8xf32>, vector<18x8xf32> -> vector<18x8xf32>
    %298 = vector.extract_strided_slice %261 {offsets = [0, 16], sizes = [18, 8], strides = [1, 1]} : vector<18x96xf32> to vector<18x8xf32>
    %299 = vector.extract_strided_slice %261 {offsets = [0, 48], sizes = [18, 8], strides = [1, 1]} : vector<18x96xf32> to vector<18x8xf32>
    %300 = vector.extract_strided_slice %261 {offsets = [0, 80], sizes = [18, 8], strides = [1, 1]} : vector<18x96xf32> to vector<18x8xf32>
    %cst_124 = arith.constant dense<0.000000e+00> : vector<18x18xf32>
    %301 = tpu.matmul %298, %299, %cst_124 {dimension_numbers = #tpu.dot_dimension_numbers<[1], [1], [0], [0], [0, 0, 1, 0], [], []>} : vector<18x8xf32>, vector<18x8xf32>, vector<18x18xf32> -> vector<18x18xf32>
    %cst_125 = arith.constant 0.353553385 : f32
    %302 = vector.broadcast %cst_125 : f32 to vector<18x18xf32>
    %303 = arith.mulf %301, %302 : vector<18x18xf32>
    %cst_126 = arith.constant -1.000000e+09 : f32
    %304 = vector.broadcast %cst_126 : f32 to vector<18x18xf32>
    %305 = arith.select %60, %303, %304 : vector<18x18xi1>, vector<18x18xf32>
    %cst_127 = arith.constant dense<0xFF800000> : vector<18xf32>
    %306 = vector.multi_reduction <maximumf>, %305, %cst_127 [1] : vector<18x18xf32> to vector<18xf32>
    %307 = vector.shape_cast %306 : vector<18xf32> to vector<18x1xf32>
    %308 = vector.broadcast %307 : vector<18x1xf32> to vector<18x18xf32>
    %309 = arith.subf %305, %308 : vector<18x18xf32>
    %310 = math.exp %309 : vector<18x18xf32>
    %cst_128 = arith.constant dense<0.000000e+00> : vector<18xf32>
    %311 = vector.multi_reduction <add>, %310, %cst_128 [1] : vector<18x18xf32> to vector<18xf32>
    %312 = vector.shape_cast %311 : vector<18xf32> to vector<18x1xf32>
    %313 = vector.broadcast %312 : vector<18x1xf32> to vector<18x18xf32>
    %314 = arith.divf %310, %313 : vector<18x18xf32>
    %cst_129 = arith.constant dense<0.000000e+00> : vector<18x8xf32>
    %315 = tpu.matmul %314, %300, %cst_129 {dimension_numbers = #tpu.dot_dimension_numbers<[1], [0], [0], [1], [0, 0, 1, 1], [], []>} : vector<18x18xf32>, vector<18x8xf32>, vector<18x8xf32> -> vector<18x8xf32>
    %316 = vector.extract_strided_slice %261 {offsets = [0, 24], sizes = [18, 8], strides = [1, 1]} : vector<18x96xf32> to vector<18x8xf32>
    %317 = vector.extract_strided_slice %261 {offsets = [0, 56], sizes = [18, 8], strides = [1, 1]} : vector<18x96xf32> to vector<18x8xf32>
    %318 = vector.extract_strided_slice %261 {offsets = [0, 88], sizes = [18, 8], strides = [1, 1]} : vector<18x96xf32> to vector<18x8xf32>
    %cst_130 = arith.constant dense<0.000000e+00> : vector<18x18xf32>
    %319 = tpu.matmul %316, %317, %cst_130 {dimension_numbers = #tpu.dot_dimension_numbers<[1], [1], [0], [0], [0, 0, 1, 0], [], []>} : vector<18x8xf32>, vector<18x8xf32>, vector<18x18xf32> -> vector<18x18xf32>
    %cst_131 = arith.constant 0.353553385 : f32
    %320 = vector.broadcast %cst_131 : f32 to vector<18x18xf32>
    %321 = arith.mulf %319, %320 : vector<18x18xf32>
    %cst_132 = arith.constant -1.000000e+09 : f32
    %322 = vector.broadcast %cst_132 : f32 to vector<18x18xf32>
    %323 = arith.select %60, %321, %322 : vector<18x18xi1>, vector<18x18xf32>
    %cst_133 = arith.constant dense<0xFF800000> : vector<18xf32>
    %324 = vector.multi_reduction <maximumf>, %323, %cst_133 [1] : vector<18x18xf32> to vector<18xf32>
    %325 = vector.shape_cast %324 : vector<18xf32> to vector<18x1xf32>
    %326 = vector.broadcast %325 : vector<18x1xf32> to vector<18x18xf32>
    %327 = arith.subf %323, %326 : vector<18x18xf32>
    %328 = math.exp %327 : vector<18x18xf32>
    %cst_134 = arith.constant dense<0.000000e+00> : vector<18xf32>
    %329 = vector.multi_reduction <add>, %328, %cst_134 [1] : vector<18x18xf32> to vector<18xf32>
    %330 = vector.shape_cast %329 : vector<18xf32> to vector<18x1xf32>
    %331 = vector.broadcast %330 : vector<18x1xf32> to vector<18x18xf32>
    %332 = arith.divf %328, %331 : vector<18x18xf32>
    %cst_135 = arith.constant dense<0.000000e+00> : vector<18x8xf32>
    %333 = tpu.matmul %332, %318, %cst_135 {dimension_numbers = #tpu.dot_dimension_numbers<[1], [0], [0], [1], [0, 0, 1, 1], [], []>} : vector<18x18xf32>, vector<18x8xf32>, vector<18x8xf32> -> vector<18x8xf32>
    %334 = tpu.concatenate %279, %297, %315, %333 in 1 : vector<18x8xf32>, vector<18x8xf32>, vector<18x8xf32>, vector<18x8xf32> -> vector<18x32xf32>
    %c1_136 = arith.constant 1 : index
    %c0_137 = arith.constant 0 : index
    %c0_138 = arith.constant 0 : index
    %335 = vector.load %arg13[%c1_136, %c0_137, %c0_138] : memref<2x32x32xf32, #tpu.memory_space<vmem>>, vector<1x32x32xf32>
    %336 = vector.shape_cast %335 : vector<1x32x32xf32> to vector<32x32xf32>
    %cst_139 = arith.constant dense<0.000000e+00> : vector<18x32xf32>
    %337 = tpu.matmul %334, %336, %cst_139 {dimension_numbers = #tpu.dot_dimension_numbers<[1], [0], [0], [1], [0, 0, 1, 1], [], []>} : vector<18x32xf32>, vector<32x32xf32>, vector<18x32xf32> -> vector<18x32xf32>
    %338 = arith.addf %228, %337 : vector<18x32xf32>
    %c1_140 = arith.constant 1 : index
    %c0_141 = arith.constant 0 : index
    %c0_142 = arith.constant 0 : index
    %339 = vector.load %arg14[%c1_140, %c0_141, %c0_142] : memref<2x1x32xf32, #tpu.memory_space<vmem>>, vector<1x1x32xf32>
    %340 = vector.shape_cast %339 : vector<1x1x32xf32> to vector<1x32xf32>
    %341 = vector.broadcast %340 : vector<1x32xf32> to vector<18x32xf32>
    %342 = arith.addf %338, %341 : vector<18x32xf32>
    %c6_143 = arith.constant 6 : index
    %c0_144 = arith.constant 0 : index
    %343 = vector.load %arg10[%c6_143, %c0_144] : memref<10x32xf32, #tpu.memory_space<vmem>>, vector<1x32xf32>
    %c7_145 = arith.constant 7 : index
    %c0_146 = arith.constant 0 : index
    %344 = vector.load %arg10[%c7_145, %c0_146] : memref<10x32xf32, #tpu.memory_space<vmem>>, vector<1x32xf32>
    %cst_147 = arith.constant dense<0.000000e+00> : vector<18xf32>
    %345 = vector.multi_reduction <add>, %342, %cst_147 [1] : vector<18x32xf32> to vector<18xf32>
    %346 = vector.shape_cast %345 : vector<18xf32> to vector<18x1xf32>
    %cst_148 = arith.constant 3.200000e+01 : f32
    %347 = vector.broadcast %cst_148 : f32 to vector<18x1xf32>
    %348 = arith.divf %346, %347 : vector<18x1xf32>
    %349 = vector.broadcast %348 : vector<18x1xf32> to vector<18x32xf32>
    %350 = arith.subf %342, %349 : vector<18x32xf32>
    %351 = vector.broadcast %348 : vector<18x1xf32> to vector<18x32xf32>
    %352 = arith.subf %342, %351 : vector<18x32xf32>
    %353 = arith.mulf %350, %352 : vector<18x32xf32>
    %cst_149 = arith.constant dense<0.000000e+00> : vector<18xf32>
    %354 = vector.multi_reduction <add>, %353, %cst_149 [1] : vector<18x32xf32> to vector<18xf32>
    %355 = vector.shape_cast %354 : vector<18xf32> to vector<18x1xf32>
    %cst_150 = arith.constant 3.200000e+01 : f32
    %356 = vector.broadcast %cst_150 : f32 to vector<18x1xf32>
    %357 = arith.divf %355, %356 : vector<18x1xf32>
    %358 = vector.broadcast %348 : vector<18x1xf32> to vector<18x32xf32>
    %359 = arith.subf %342, %358 : vector<18x32xf32>
    %cst_151 = arith.constant 9.99999974E-6 : f32
    %360 = vector.broadcast %cst_151 : f32 to vector<18x1xf32>
    %361 = arith.addf %357, %360 : vector<18x1xf32>
    %362 = math.rsqrt %361 : vector<18x1xf32>
    %363 = vector.broadcast %362 : vector<18x1xf32> to vector<18x32xf32>
    %364 = arith.mulf %359, %363 : vector<18x32xf32>
    %365 = vector.broadcast %343 : vector<1x32xf32> to vector<18x32xf32>
    %366 = arith.mulf %364, %365 : vector<18x32xf32>
    %367 = vector.broadcast %344 : vector<1x32xf32> to vector<18x32xf32>
    %368 = arith.addf %366, %367 : vector<18x32xf32>
    %c1_152 = arith.constant 1 : index
    %c0_153 = arith.constant 0 : index
    %c0_154 = arith.constant 0 : index
    %369 = vector.load %arg15[%c1_152, %c0_153, %c0_154] : memref<2x32x128xf32, #tpu.memory_space<vmem>>, vector<1x32x128xf32>
    %370 = vector.shape_cast %369 : vector<1x32x128xf32> to vector<32x128xf32>
    %cst_155 = arith.constant dense<0.000000e+00> : vector<18x128xf32>
    %371 = tpu.matmul %368, %370, %cst_155 {dimension_numbers = #tpu.dot_dimension_numbers<[1], [0], [0], [1], [0, 0, 1, 1], [], []>} : vector<18x32xf32>, vector<32x128xf32>, vector<18x128xf32> -> vector<18x128xf32>
    %c1_156 = arith.constant 1 : index
    %c0_157 = arith.constant 0 : index
    %c0_158 = arith.constant 0 : index
    %372 = vector.load %arg16[%c1_156, %c0_157, %c0_158] : memref<2x1x128xf32, #tpu.memory_space<vmem>>, vector<1x1x128xf32>
    %373 = vector.shape_cast %372 : vector<1x1x128xf32> to vector<1x128xf32>
    %374 = vector.broadcast %373 : vector<1x128xf32> to vector<18x128xf32>
    %375 = arith.addf %371, %374 : vector<18x128xf32>
    %cst_159 = arith.constant 5.000000e-01 : f32
    %376 = vector.broadcast %cst_159 : f32 to vector<18x128xf32>
    %377 = arith.mulf %376, %375 : vector<18x128xf32>
    %cst_160 = arith.constant 4.471500e-02 : f32
    %378 = vector.broadcast %cst_160 : f32 to vector<18x128xf32>
    %379 = arith.mulf %378, %375 : vector<18x128xf32>
    %380 = arith.mulf %379, %375 : vector<18x128xf32>
    %381 = arith.mulf %380, %375 : vector<18x128xf32>
    %382 = arith.addf %375, %381 : vector<18x128xf32>
    %cst_161 = arith.constant 0.797884583 : f32
    %383 = vector.broadcast %cst_161 : f32 to vector<18x128xf32>
    %384 = arith.mulf %383, %382 : vector<18x128xf32>
    %385 = math.tanh %384 : vector<18x128xf32>
    %cst_162 = arith.constant 1.000000e+00 : f32
    %386 = vector.broadcast %cst_162 : f32 to vector<18x128xf32>
    %387 = arith.addf %386, %385 : vector<18x128xf32>
    %388 = arith.mulf %377, %387 : vector<18x128xf32>
    %c1_163 = arith.constant 1 : index
    %c0_164 = arith.constant 0 : index
    %c0_165 = arith.constant 0 : index
    %389 = vector.load %arg17[%c1_163, %c0_164, %c0_165] : memref<2x128x32xf32, #tpu.memory_space<vmem>>, vector<1x128x32xf32>
    %390 = vector.shape_cast %389 : vector<1x128x32xf32> to vector<128x32xf32>
    %cst_166 = arith.constant dense<0.000000e+00> : vector<18x32xf32>
    %391 = tpu.matmul %388, %390, %cst_166 {dimension_numbers = #tpu.dot_dimension_numbers<[1], [0], [0], [1], [0, 0, 1, 1], [], []>} : vector<18x128xf32>, vector<128x32xf32>, vector<18x32xf32> -> vector<18x32xf32>
    %392 = arith.addf %342, %391 : vector<18x32xf32>
    %c1_167 = arith.constant 1 : index
    %c0_168 = arith.constant 0 : index
    %c0_169 = arith.constant 0 : index
    %393 = vector.load %arg18[%c1_167, %c0_168, %c0_169] : memref<2x1x32xf32, #tpu.memory_space<vmem>>, vector<1x1x32xf32>
    %394 = vector.shape_cast %393 : vector<1x1x32xf32> to vector<1x32xf32>
    %395 = vector.broadcast %394 : vector<1x32xf32> to vector<18x32xf32>
    %396 = arith.addf %392, %395 : vector<18x32xf32>
    %c8 = arith.constant 8 : index
    %c0_170 = arith.constant 0 : index
    %397 = vector.load %arg10[%c8, %c0_170] : memref<10x32xf32, #tpu.memory_space<vmem>>, vector<1x32xf32>
    %c9 = arith.constant 9 : index
    %c0_171 = arith.constant 0 : index
    %398 = vector.load %arg10[%c9, %c0_171] : memref<10x32xf32, #tpu.memory_space<vmem>>, vector<1x32xf32>
    %cst_172 = arith.constant dense<0.000000e+00> : vector<18xf32>
    %399 = vector.multi_reduction <add>, %396, %cst_172 [1] : vector<18x32xf32> to vector<18xf32>
    %400 = vector.shape_cast %399 : vector<18xf32> to vector<18x1xf32>
    %cst_173 = arith.constant 3.200000e+01 : f32
    %401 = vector.broadcast %cst_173 : f32 to vector<18x1xf32>
    %402 = arith.divf %400, %401 : vector<18x1xf32>
    %403 = vector.broadcast %402 : vector<18x1xf32> to vector<18x32xf32>
    %404 = arith.subf %396, %403 : vector<18x32xf32>
    %405 = vector.broadcast %402 : vector<18x1xf32> to vector<18x32xf32>
    %406 = arith.subf %396, %405 : vector<18x32xf32>
    %407 = arith.mulf %404, %406 : vector<18x32xf32>
    %cst_174 = arith.constant dense<0.000000e+00> : vector<18xf32>
    %408 = vector.multi_reduction <add>, %407, %cst_174 [1] : vector<18x32xf32> to vector<18xf32>
    %409 = vector.shape_cast %408 : vector<18xf32> to vector<18x1xf32>
    %cst_175 = arith.constant 3.200000e+01 : f32
    %410 = vector.broadcast %cst_175 : f32 to vector<18x1xf32>
    %411 = arith.divf %409, %410 : vector<18x1xf32>
    %412 = vector.broadcast %402 : vector<18x1xf32> to vector<18x32xf32>
    %413 = arith.subf %396, %412 : vector<18x32xf32>
    %cst_176 = arith.constant 9.99999974E-6 : f32
    %414 = vector.broadcast %cst_176 : f32 to vector<18x1xf32>
    %415 = arith.addf %411, %414 : vector<18x1xf32>
    %416 = math.rsqrt %415 : vector<18x1xf32>
    %417 = vector.broadcast %416 : vector<18x1xf32> to vector<18x32xf32>
    %418 = arith.mulf %413, %417 : vector<18x32xf32>
    %419 = vector.broadcast %397 : vector<1x32xf32> to vector<18x32xf32>
    %420 = arith.mulf %418, %419 : vector<18x32xf32>
    %421 = vector.broadcast %398 : vector<1x32xf32> to vector<18x32xf32>
    %422 = arith.addf %420, %421 : vector<18x32xf32>
    %c0_177 = arith.constant 0 : index
    %c0_178 = arith.constant 0 : index
    %423 = vector.load %arg8[%c0_177, %c0_178] : memref<32x256xf32, #tpu.memory_space<vmem>>, vector<32x256xf32>
    %cst_179 = arith.constant dense<0.000000e+00> : vector<18x256xf32>
    %424 = tpu.matmul %422, %423, %cst_179 {dimension_numbers = #tpu.dot_dimension_numbers<[1], [0], [0], [1], [0, 0, 1, 1], [], []>} : vector<18x32xf32>, vector<32x256xf32>, vector<18x256xf32> -> vector<18x256xf32>
    %c0_180 = arith.constant 0 : index
    %c0_181 = arith.constant 0 : index
    %c0_182 = arith.constant 0 : index
    %425 = vector.load %arg19[%c0_180, %c0_181, %c0_182] : memref<1x18x256xf32, #tpu.memory_space<vmem>>, vector<1x18x256xf32>
    %426 = vector.shape_cast %425 : vector<1x18x256xf32> to vector<18x256xf32>
    %427 = vector.shape_cast %424 : vector<18x256xf32> to vector<1x18x256xf32>
    tpu.vector_store %arg19[%c0_180, %c0_181, %c0_182], %427 {strides = array<i32>} : memref<1x18x256xf32, #tpu.memory_space<vmem>>, vector<1x18x256xf32>,
    return
  }
  func.func @transform_0(%arg0: i32, %arg1: memref<2x8xi32, #tpu.memory_space<smem>>) -> (i32, i32, i32) {
    %c0_i32 = arith.constant 0 : i32
    %c0_i32_0 = arith.constant 0 : i32
    %c0_i32_1 = arith.constant 0 : i32
    return %arg0, %c0_i32, %c0_i32_0 : i32, i32, i32
  }
  func.func @transform_1(%arg0: i32, %arg1: memref<2x8xi32, #tpu.memory_space<smem>>) -> (i32, i32) {
    %c0_i32 = arith.constant 0 : i32
    %c0_i32_0 = arith.constant 0 : i32
    %c0_i32_1 = arith.constant 0 : i32
    return %c0_i32, %c0_i32_0 : i32, i32
  }
  func.func @transform_2(%arg0: i32, %arg1: memref<2x8xi32, #tpu.memory_space<smem>>) -> (i32, i32) {
    %c0_i32 = arith.constant 0 : i32
    %c0_i32_0 = arith.constant 0 : i32
    %c0_i32_1 = arith.constant 0 : i32
    return %c0_i32, %c0_i32_0 : i32, i32
  }
  func.func @transform_3(%arg0: i32, %arg1: memref<2x8xi32, #tpu.memory_space<smem>>) -> (i32, i32) {
    %c0_i32 = arith.constant 0 : i32
    %c0_i32_0 = arith.constant 0 : i32
    %c0_i32_1 = arith.constant 0 : i32
    return %c0_i32, %c0_i32_0 : i32, i32
  }
  func.func @transform_4(%arg0: i32, %arg1: memref<2x8xi32, #tpu.memory_space<smem>>) -> (i32, i32) {
    %c0_i32 = arith.constant 0 : i32
    %c0_i32_0 = arith.constant 0 : i32
    %c0_i32_1 = arith.constant 0 : i32
    return %c0_i32, %c0_i32_0 : i32, i32
  }
  func.func @transform_5(%arg0: i32, %arg1: memref<2x8xi32, #tpu.memory_space<smem>>) -> (i32, i32) {
    %c0_i32 = arith.constant 0 : i32
    %c0_i32_0 = arith.constant 0 : i32
    %c0_i32_1 = arith.constant 0 : i32
    return %c0_i32, %c0_i32_0 : i32, i32
  }
  func.func @transform_6(%arg0: i32, %arg1: memref<2x8xi32, #tpu.memory_space<smem>>) -> (i32, i32) {
    %c0_i32 = arith.constant 0 : i32
    %c0_i32_0 = arith.constant 0 : i32
    %c0_i32_1 = arith.constant 0 : i32
    return %c0_i32, %c0_i32_0 : i32, i32
  }
  func.func @transform_7(%arg0: i32, %arg1: memref<2x8xi32, #tpu.memory_space<smem>>) -> (i32, i32) {
    %c0_i32 = arith.constant 0 : i32
    %c0_i32_0 = arith.constant 0 : i32
    %c0_i32_1 = arith.constant 0 : i32
    return %c0_i32, %c0_i32_0 : i32, i32
  }
  func.func @transform_8(%arg0: i32, %arg1: memref<2x8xi32, #tpu.memory_space<smem>>) -> (i32, i32) {
    %c0_i32 = arith.constant 0 : i32
    %c0_i32_0 = arith.constant 0 : i32
    %c0_i32_1 = arith.constant 0 : i32
    return %c0_i32, %c0_i32_0 : i32, i32
  }
  func.func @transform_9(%arg0: i32, %arg1: memref<2x8xi32, #tpu.memory_space<smem>>) -> (i32, i32, i32) {
    %c0_i32 = arith.constant 0 : i32
    %c0_i32_0 = arith.constant 0 : i32
    %c0_i32_1 = arith.constant 0 : i32
    %c0_i32_2 = arith.constant 0 : i32
    return %c0_i32, %c0_i32_0, %c0_i32_1 : i32, i32, i32
  }
  func.func @transform_10(%arg0: i32, %arg1: memref<2x8xi32, #tpu.memory_space<smem>>) -> (i32, i32, i32) {
    %c0_i32 = arith.constant 0 : i32
    %c0_i32_0 = arith.constant 0 : i32
    %c0_i32_1 = arith.constant 0 : i32
    %c0_i32_2 = arith.constant 0 : i32
    return %c0_i32, %c0_i32_0, %c0_i32_1 : i32, i32, i32
  }
  func.func @transform_11(%arg0: i32, %arg1: memref<2x8xi32, #tpu.memory_space<smem>>) -> (i32, i32, i32) {
    %c0_i32 = arith.constant 0 : i32
    %c0_i32_0 = arith.constant 0 : i32
    %c0_i32_1 = arith.constant 0 : i32
    %c0_i32_2 = arith.constant 0 : i32
    return %c0_i32, %c0_i32_0, %c0_i32_1 : i32, i32, i32
  }
  func.func @transform_12(%arg0: i32, %arg1: memref<2x8xi32, #tpu.memory_space<smem>>) -> (i32, i32, i32) {
    %c0_i32 = arith.constant 0 : i32
    %c0_i32_0 = arith.constant 0 : i32
    %c0_i32_1 = arith.constant 0 : i32
    %c0_i32_2 = arith.constant 0 : i32
    return %c0_i32, %c0_i32_0, %c0_i32_1 : i32, i32, i32
  }
  func.func @transform_13(%arg0: i32, %arg1: memref<2x8xi32, #tpu.memory_space<smem>>) -> (i32, i32, i32) {
    %c0_i32 = arith.constant 0 : i32
    %c0_i32_0 = arith.constant 0 : i32
    %c0_i32_1 = arith.constant 0 : i32
    %c0_i32_2 = arith.constant 0 : i32
    return %c0_i32, %c0_i32_0, %c0_i32_1 : i32, i32, i32
  }
  func.func @transform_14(%arg0: i32, %arg1: memref<2x8xi32, #tpu.memory_space<smem>>) -> (i32, i32, i32) {
    %c0_i32 = arith.constant 0 : i32
    %c0_i32_0 = arith.constant 0 : i32
    %c0_i32_1 = arith.constant 0 : i32
    %c0_i32_2 = arith.constant 0 : i32
    return %c0_i32, %c0_i32_0, %c0_i32_1 : i32, i32, i32
  }
  func.func @transform_15(%arg0: i32, %arg1: memref<2x8xi32, #tpu.memory_space<smem>>) -> (i32, i32, i32) {
    %c0_i32 = arith.constant 0 : i32
    %c0_i32_0 = arith.constant 0 : i32
    %c0_i32_1 = arith.constant 0 : i32
    %c0_i32_2 = arith.constant 0 : i32
    return %c0_i32, %c0_i32_0, %c0_i32_1 : i32, i32, i32
  }
  func.func @transform_16(%arg0: i32, %arg1: memref<2x8xi32, #tpu.memory_space<smem>>) -> (i32, i32, i32) {
    %c0_i32 = arith.constant 0 : i32
    %c0_i32_0 = arith.constant 0 : i32
    %c0_i32_1 = arith.constant 0 : i32
    %c0_i32_2 = arith.constant 0 : i32
    return %c0_i32, %c0_i32_0, %c0_i32_1 : i32, i32, i32
  }
  func.func @transform_17(%arg0: i32, %arg1: memref<2x8xi32, #tpu.memory_space<smem>>) -> (i32, i32, i32) {
    %c0_i32 = arith.constant 0 : i32
    %c0_i32_0 = arith.constant 0 : i32
    %c0_i32_1 = arith.constant 0 : i32
    return %arg0, %c0_i32, %c0_i32_0 : i32, i32, i32
  }
}

</mosaic_0001>

<llo_original>
// kernel: clip_caption_forward.1
$region0: #{clip_caption_forward.1}
  #allocation0 [shape = 'u32[]', space=smem, size = 0x4, offset = 0x4, fixed_abs, tag = 'smem constant byte address 0x4 - core index']
  #allocation1 [shape = 'u32[144,128]{1,0:T(1,128)}', space=vmem, size = 0x12000, scoped, tag = 'internal scratch']
  #allocation2 [shape = 's32[1]{0}', space=sflag, size = 0x4, scoped, tag = 'scoped memory for clip_caption_forward.1']
  #allocation3 [shape = 'u8[1024]{0}', space=smem, size = 0x400, scoped, tag = 'prefetched SMEM operand 0']
  %s0 = inlined_call_operand.hbm [shape: s32[2,8], index: 0, kind: input, shape index: {}]
  %s1 = inlined_call_operand.hbm [shape: f32[2,1,64], index: 1, kind: input, shape index: {}]
  %s2 = inlined_call_operand.hbm [shape: f32[64,160], index: 2, kind: input, shape index: {}]
  %s3 = inlined_call_operand.vmem [shape: f32[1,160], index: 3, kind: input, shape index: {}]
  %s4 = inlined_call_operand.hbm [shape: f32[160,320], index: 4, kind: input, shape index: {}]
  %s5 = inlined_call_operand.vmem [shape: f32[1,320], index: 5, kind: input, shape index: {}]
  %s6 = inlined_call_operand.hbm [shape: f32[256,32], index: 6, kind: input, shape index: {}]
  %s7 = inlined_call_operand.hbm [shape: f32[32,256], index: 7, kind: input, shape index: {}]
  %s8 = inlined_call_operand.hbm [shape: f32[64,32], index: 8, kind: input, shape index: {}]
  %s9 = inlined_call_operand.hbm [shape: f32[10,32], index: 9, kind: input, shape index: {}]
  %s10 = inlined_call_operand.hbm [shape: f32[2,32,96], index: 10, kind: input, shape index: {}]
  %s11 = inlined_call_operand.vmem [shape: f32[2,1,96], index: 11, kind: input, shape index: {}]
  %s12 = inlined_call_operand.hbm [shape: f32[2,32,32], index: 12, kind: input, shape index: {}]
  %s13 = inlined_call_operand.vmem [shape: f32[2,1,32], index: 13, kind: input, shape index: {}, may-alias: {13,17}]
  %s14 = inlined_call_operand.vmem [shape: f32[2,32,128], index: 14, kind: input, shape index: {}]
  %s15 = inlined_call_operand.vmem [shape: f32[2,1,128], index: 15, kind: input, shape index: {}]
  %s16 = inlined_call_operand.hbm [shape: f32[2,128,32], index: 16, kind: input, shape index: {}]
  %s17 = inlined_call_operand.vmem [shape: f32[2,1,32], index: 17, kind: input, shape index: {}, may-alias: {13,17}]
  %s18 = inlined_call_operand.vmem [shape: f32[2,18,256], index: 18, kind: output, shape index: {}]
  %s19 = sld [smem:[#allocation0]]
  $region141: #{clip_caption_forward.1} parent=0
    _
  %s21 = ssub.s32 1, %s19
  %s22 = scalar_select 0, %s21, %s19
  %24 = dma.hbm_to_smem %s0, 32, [#allocation3], [#allocation2]
  %25 = dma.done [#allocation2], 32
  %26 = sfence
  $region1: #{clip_caption_forward.1} parent=0
    #allocation4 [shape = 'u8[1024]{0}', space=vmem, size = 0x400, scoped, tag = 'input window, operand 1']
    #allocation5 [shape = 's32[2]{0}', space=sflag, size = 0x8, scoped, tag = 'scoped memory for clip_caption_forward.1']
    #allocation6 [shape = 'u8[65536]{0}', space=vmem, size = 0x10000, scoped, tag = 'input window, operand 2, single buffered']
    #allocation7 [shape = 's32[1]{0}', space=sflag, size = 0x4, scoped, tag = 'scoped memory for clip_caption_forward.1']
    #allocation8 [shape = 'u8[245760]{0}', space=vmem, size = 0x3c000, scoped, tag = 'input window, operand 4, single buffered']
    #allocation9 [shape = 'u8[131072]{0}', space=vmem, size = 0x20000, scoped, tag = 'input window, operand 6, single buffered']
    #allocation10 [shape = 's32[1]{0}', space=sflag, size = 0x4, scoped, tag = 'scoped memory for clip_caption_forward.1']
    #allocation11 [shape = 'u8[32768]{0}', space=vmem, size = 0x8000, scoped, tag = 'input window, operand 7, single buffered']
    #allocation12 [shape = 'u8[32768]{0}', space=vmem, size = 0x8000, scoped, tag = 'input window, operand 8, single buffered']
    #allocation13 [shape = 's32[1]{0}', space=sflag, size = 0x4, scoped, tag = 'scoped memory for clip_caption_forward.1']
    #allocation14 [shape = 'u8[8192]{0}', space=vmem, size = 0x2000, scoped, tag = 'input window, operand 9, single buffered']
    #allocation15 [shape = 'u8[32768]{0}', space=vmem, size = 0x8000, scoped, tag = 'input window, operand 10, single buffered']
    #allocation16 [shape = 's32[1]{0}', space=sflag, size = 0x4, scoped, tag = 'scoped memory for clip_caption_forward.1']
    #allocation17 [shape = 'u8[32768]{0}', space=vmem, size = 0x8000, scoped, tag = 'input window, operand 12, single buffered']
    #allocation18 [shape = 'u8[131072]{0}', space=vmem, size = 0x20000, scoped, tag = 'input window, operand 16, single buffered']
    #allocation19 [shape = 's32[1]{0}', space=sflag, size = 0x4, scoped, tag = 'scoped memory for clip_caption_forward.1']
    %27 = vsyncpa [#allocation5], 0
    %s28 = scalar_lea.sflag [#allocation5], 1
    %29 = vsyncpa %s28, 0
    %30 = vsyncpa [#allocation7], 0
    %31 = vsyncpa [#allocation10], 0
    %32 = vsyncpa [#allocation13], 0
    %33 = vsyncpa [#allocation16], 0
    %34 = vsyncpa [#allocation19], 0
    loop: start=0, step=1, limit=4
    $region2: #{clip_caption_forward.1} parent=1 // loop_pre_header
      _
    $region3: #{clip_caption_forward.1} parent=1 // loop_header
      %s36 = sphi 0, %s40
      %p37 = scmp.ge.s32.totalorder %s36, 4
      %s46 = sphi 0, %s48
      %s49 = sphi 0, %s46
      %s50 = sphi 0, %s49
      %s66 = sphi 0, %s50
      %s70 = sphi 0, %s70
      %s72 = sphi 0, %s70
      %s73 = sphi 0, %s72
      %s87 = sphi 0, %s73
      %s91 = sphi 0, %s91
      %s93 = sphi 0, %s91
      %s94 = sphi 0, %s93
      %s108 = sphi 0, %s94
      %s112 = sphi 0, %s112
      %s114 = sphi 0, %s112
      %s115 = sphi 0, %s114
      %s129 = sphi 0, %s115
      %s133 = sphi 0, %s133
      %s135 = sphi 0, %s133
      %s136 = sphi 0, %s135
      %s150 = sphi 0, %s136
      %s154 = sphi 0, %s154
      %s156 = sphi 0, %s154
      %s157 = sphi 0, %s156
      %s171 = sphi 0, %s157
      %s175 = sphi 0, %s175
      %s177 = sphi 0, %s175
      %s178 = sphi 0, %s177
      %s192 = sphi 0, %s178
      %s196 = sphi 0, %s196
      %s198 = sphi 0, %s196
      %s199 = sphi 0, %s198
      %s213 = sphi 0, %s199
      %s217 = sphi 0, %s217
      %s219 = sphi 0, %s217
      %s220 = sphi 0, %s219
      %s234 = sphi 0, %s220
      %s238 = sphi 0, %s238
      %s240 = sphi 0, %s238
      %s241 = sphi 0, %s240
      %s255 = sphi 0, %s241
      %s259 = sphi 0, %s259
      %s261 = sphi 0, %s259
      %s262 = sphi 0, %s261
      %s276 = sphi 0, %s262
      %s280 = sphi 0, %s280
      %s282 = sphi 0, %s280
      %s283 = sphi 0, %s282
      %s297 = sphi 0, %s283
      %s301 = sphi 0, %s301
      %s303 = sphi 0, %s301
      %s304 = sphi 0, %s303
      %s318 = sphi 0, %s304
      %s322 = sphi 0, %s322
      %s324 = sphi 0, %s322
      %s325 = sphi 0, %s324
      %s339 = sphi 0, %s325
      %s343 = sphi 0, %s343
      %s345 = sphi 0, %s343
      %s346 = sphi 0, %s345
      %s360 = sphi 0, %s346
      %s364 = sphi 0, %s364
      %s366 = sphi 0, %s364
      %s367 = sphi 0, %s366
      %s381 = sphi 0, %s367
      %s385 = sphi 0, %s385
      %s387 = sphi 0, %s385
      %s388 = sphi 0, %s387
      %s402 = sphi 0, %s388
      %s408 = sphi 0, %s410
      %s411 = sphi 0, %s408
      %s412 = sphi 0, %s411
      %s428 = sphi 0, %s412
    $region4: #{clip_caption_forward.1} parent=1 // loop_header_branch
      %39 = sbr.rel (%p37) target = $region8
    $region5: #{clip_caption_forward.1} parent=1 // loop_body
      %s41 = ssub.s32 %s36, 1
      %s42 = ssub.s32 %s36, 2
      %s43 = sadd.s32 %s36, 1
      %s44 = ssub.s32 %s36, %s43
      %p45 = scmp.eq.s32.totalorder %s44, 0
      %s47 = sadd.s32 %s46, 1
      %s48 = scalar_select %p45, %s46, %s47
      %p51 = pneg %p45
      %p52 = scmp.eq.s32.totalorder %s36, 1
      %p53 = por %p51, %p52
      %p54 = scmp.ne.s32.totalorder %s46, %s49
      %p55 = scmp.eq.s32.totalorder %s36, 0
      %p56 = por %p54, %p55
      %p57 = scmp.ne.s32.totalorder %s46, %s49
      %p58 = scmp.eq.s32.totalorder %s41, 1
      %p59 = por %p57, %p58
      %p60 = scmp.ne.s32.totalorder %s49, %s50
      %p61 = scmp.eq.s32.totalorder %s41, 0
      %p62 = por %p60, %p61
      %p63 = scmp.ne.s32.totalorder %s49, %s50
      %p64 = scmp.eq.s32.totalorder %s42, 1
      %p65 = por %p63, %p64
      %p67 = scmp.ne.s32.totalorder %s50, %s66
      %p68 = scmp.eq.s32.totalorder %s42, 0
      %p69 = por %p67, %p68
      %s71 = sadd.s32 %s70, 1
      %p74 = scmp.eq.s32.totalorder %s36, 1
      %p75 = scmp.ne.s32.totalorder %s70, %s72
      %p76 = scmp.eq.s32.totalorder %s36, 0
      %p77 = por %p75, %p76
      %p78 = scmp.ne.s32.totalorder %s70, %s72
      %p79 = scmp.eq.s32.totalorder %s41, 1
      %p80 = por %p78, %p79
      %p81 = scmp.ne.s32.totalorder %s72, %s73
      %p82 = scmp.eq.s32.totalorder %s41, 0
      %p83 = por %p81, %p82
      %p84 = scmp.ne.s32.totalorder %s72, %s73
      %p85 = scmp.eq.s32.totalorder %s42, 1
      %p86 = por %p84, %p85
      %p88 = scmp.ne.s32.totalorder %s73, %s87
      %p89 = scmp.eq.s32.totalorder %s42, 0
      %p90 = por %p88, %p89
      %s92 = sadd.s32 %s91, 1
      %p95 = scmp.eq.s32.totalorder %s36, 1
      %p96 = scmp.ne.s32.totalorder %s91, %s93
      %p97 = scmp.eq.s32.totalorder %s36, 0
      %p98 = por %p96, %p97
      %p99 = scmp.ne.s32.totalorder %s91, %s93
      %p100 = scmp.eq.s32.totalorder %s41, 1
      %p101 = por %p99, %p100
      %p102 = scmp.ne.s32.totalorder %s93, %s94
      %p103 = scmp.eq.s32.totalorder %s41, 0
      %p104 = por %p102, %p103
      %p105 = scmp.ne.s32.totalorder %s93, %s94
      %p106 = scmp.eq.s32.totalorder %s42, 1
      %p107 = por %p105, %p106
      %p109 = scmp.ne.s32.totalorder %s94, %s108
      %p110 = scmp.eq.s32.totalorder %s42, 0
      %p111 = por %p109, %p110
      %s113 = sadd.s32 %s112, 1
      %p116 = scmp.eq.s32.totalorder %s36, 1
      %p117 = scmp.ne.s32.totalorder %s112, %s114
      %p118 = scmp.eq.s32.totalorder %s36, 0
      %p119 = por %p117, %p118
      %p120 = scmp.ne.s32.totalorder %s112, %s114
      %p121 = scmp.eq.s32.totalorder %s41, 1
      %p122 = por %p120, %p121
      %p123 = scmp.ne.s32.totalorder %s114, %s115
      %p124 = scmp.eq.s32.totalorder %s41, 0
      %p125 = por %p123, %p124
      %p126 = scmp.ne.s32.totalorder %s114, %s115
      %p127 = scmp.eq.s32.totalorder %s42, 1
      %p128 = por %p126, %p127
      %p130 = scmp.ne.s32.totalorder %s115, %s129
      %p131 = scmp.eq.s32.totalorder %s42, 0
      %p132 = por %p130, %p131
      %s134 = sadd.s32 %s133, 1
      %p137 = scmp.eq.s32.totalorder %s36, 1
      %p138 = scmp.ne.s32.totalorder %s133, %s135
      %p139 = scmp.eq.s32.totalorder %s36, 0
      %p140 = por %p138, %p139
      %p141 = scmp.ne.s32.totalorder %s133, %s135
      %p142 = scmp.eq.s32.totalorder %s41, 1
      %p143 = por %p141, %p142
      %p144 = scmp.ne.s32.totalorder %s135, %s136
      %p145 = scmp.eq.s32.totalorder %s41, 0
      %p146 = por %p144, %p145
      %p147 = scmp.ne.s32.totalorder %s135, %s136
      %p148 = scmp.eq.s32.totalorder %s42, 1
      %p149 = por %p147, %p148
      %p151 = scmp.ne.s32.totalorder %s136, %s150
      %p152 = scmp.eq.s32.totalorder %s42, 0
      %p153 = por %p151, %p152
      %s155 = sadd.s32 %s154, 1
      %p158 = scmp.eq.s32.totalorder %s36, 1
      %p159 = scmp.ne.s32.totalorder %s154, %s156
      %p160 = scmp.eq.s32.totalorder %s36, 0
      %p161 = por %p159, %p160
      %p162 = scmp.ne.s32.totalorder %s154, %s156
      %p163 = scmp.eq.s32.totalorder %s41, 1
      %p164 = por %p162, %p163
      %p165 = scmp.ne.s32.totalorder %s156, %s157
      %p166 = scmp.eq.s32.totalorder %s41, 0
      %p167 = por %p165, %p166
      %p168 = scmp.ne.s32.totalorder %s156, %s157
      %p169 = scmp.eq.s32.totalorder %s42, 1
      %p170 = por %p168, %p169
      %p172 = scmp.ne.s32.totalorder %s157, %s171
      %p173 = scmp.eq.s32.totalorder %s42, 0
      %p174 = por %p172, %p173
      %s176 = sadd.s32 %s175, 1
      %p179 = scmp.eq.s32.totalorder %s36, 1
      %p180 = scmp.ne.s32.totalorder %s175, %s177
      %p181 = scmp.eq.s32.totalorder %s36, 0
      %p182 = por %p180, %p181
      %p183 = scmp.ne.s32.totalorder %s175, %s177
      %p184 = scmp.eq.s32.totalorder %s41, 1
      %p185 = por %p183, %p184
      %p186 = scmp.ne.s32.totalorder %s177, %s178
      %p187 = scmp.eq.s32.totalorder %s41, 0
      %p188 = por %p186, %p187
      %p189 = scmp.ne.s32.totalorder %s177, %s178
      %p190 = scmp.eq.s32.totalorder %s42, 1
      %p191 = por %p189, %p190
      %p193 = scmp.ne.s32.totalorder %s178, %s192
      %p194 = scmp.eq.s32.totalorder %s42, 0
      %p195 = por %p193, %p194
      %s197 = sadd.s32 %s196, 1
      %p200 = scmp.eq.s32.totalorder %s36, 1
      %p201 = scmp.ne.s32.totalorder %s196, %s198
      %p202 = scmp.eq.s32.totalorder %s36, 0
      %p203 = por %p201, %p202
      %p204 = scmp.ne.s32.totalorder %s196, %s198
      %p205 = scmp.eq.s32.totalorder %s41, 1
      %p206 = por %p204, %p205
      %p207 = scmp.ne.s32.totalorder %s198, %s199
      %p208 = scmp.eq.s32.totalorder %s41, 0
      %p209 = por %p207, %p208
      %p210 = scmp.ne.s32.totalorder %s198, %s199
      %p211 = scmp.eq.s32.totalorder %s42, 1
      %p212 = por %p210, %p211
      %p214 = scmp.ne.s32.totalorder %s199, %s213
      %p215 = scmp.eq.s32.totalorder %s42, 0
      %p216 = por %p214, %p215
      %s218 = sadd.s32 %s217, 1
      %p221 = scmp.eq.s32.totalorder %s36, 1
      %p222 = scmp.ne.s32.totalorder %s217, %s219
      %p223 = scmp.eq.s32.totalorder %s36, 0
      %p224 = por %p222, %p223
      %p225 = scmp.ne.s32.totalorder %s217, %s219
      %p226 = scmp.eq.s32.totalorder %s41, 1
      %p227 = por %p225, %p226
      %p228 = scmp.ne.s32.totalorder %s219, %s220
      %p229 = scmp.eq.s32.totalorder %s41, 0
      %p230 = por %p228, %p229
      %p231 = scmp.ne.s32.totalorder %s219, %s220
      %p232 = scmp.eq.s32.totalorder %s42, 1
      %p233 = por %p231, %p232
      %p235 = scmp.ne.s32.totalorder %s220, %s234
      %p236 = scmp.eq.s32.totalorder %s42, 0
      %p237 = por %p235, %p236
      %s239 = sadd.s32 %s238, 1
      %p242 = scmp.eq.s32.totalorder %s36, 1
      %p243 = scmp.ne.s32.totalorder %s238, %s240
      %p244 = scmp.eq.s32.totalorder %s36, 0
      %p245 = por %p243, %p244
      %p246 = scmp.ne.s32.totalorder %s238, %s240
      %p247 = scmp.eq.s32.totalorder %s41, 1
      %p248 = por %p246, %p247
      %p249 = scmp.ne.s32.totalorder %s240, %s241
      %p250 = scmp.eq.s32.totalorder %s41, 0
      %p251 = por %p249, %p250
      %p252 = scmp.ne.s32.totalorder %s240, %s241
      %p253 = scmp.eq.s32.totalorder %s42, 1
      %p254 = por %p252, %p253
      %p256 = scmp.ne.s32.totalorder %s241, %s255
      %p257 = scmp.eq.s32.totalorder %s42, 0
      %p258 = por %p256, %p257
      %s260 = sadd.s32 %s259, 1
      %p263 = scmp.eq.s32.totalorder %s36, 1
      %p264 = scmp.ne.s32.totalorder %s259, %s261
      %p265 = scmp.eq.s32.totalorder %s36, 0
      %p266 = por %p264, %p265
      %p267 = scmp.ne.s32.totalorder %s259, %s261
      %p268 = scmp.eq.s32.totalorder %s41, 1
      %p269 = por %p267, %p268
      %p270 = scmp.ne.s32.totalorder %s261, %s262
      %p271 = scmp.eq.s32.totalorder %s41, 0
      %p272 = por %p270, %p271
      %p273 = scmp.ne.s32.totalorder %s261, %s262
      %p274 = scmp.eq.s32.totalorder %s42, 1
      %p275 = por %p273, %p274
      %p277 = scmp.ne.s32.totalorder %s262, %s276
      %p278 = scmp.eq.s32.totalorder %s42, 0
      %p279 = por %p277, %p278
      %s281 = sadd.s32 %s280, 1
      %p284 = scmp.eq.s32.totalorder %s36, 1
      %p285 = scmp.ne.s32.totalorder %s280, %s282
      %p286 = scmp.eq.s32.totalorder %s36, 0
      %p287 = por %p285, %p286
      %p288 = scmp.ne.s32.totalorder %s280, %s282
      %p289 = scmp.eq.s32.totalorder %s41, 1
      %p290 = por %p288, %p289
      %p291 = scmp.ne.s32.totalorder %s282, %s283
      %p292 = scmp.eq.s32.totalorder %s41, 0
      %p293 = por %p291, %p292
      %p294 = scmp.ne.s32.totalorder %s282, %s283
      %p295 = scmp.eq.s32.totalorder %s42, 1
      %p296 = por %p294, %p295
      %p298 = scmp.ne.s32.totalorder %s283, %s297
      %p299 = scmp.eq.s32.totalorder %s42, 0
      %p300 = por %p298, %p299
      %s302 = sadd.s32 %s301, 1
      %p305 = scmp.eq.s32.totalorder %s36, 1
      %p306 = scmp.ne.s32.totalorder %s301, %s303
      %p307 = scmp.eq.s32.totalorder %s36, 0
      %p308 = por %p306, %p307
      %p309 = scmp.ne.s32.totalorder %s301, %s303
      %p310 = scmp.eq.s32.totalorder %s41, 1
      %p311 = por %p309, %p310
      %p312 = scmp.ne.s32.totalorder %s303, %s304
      %p313 = scmp.eq.s32.totalorder %s41, 0
      %p314 = por %p312, %p313
      %p315 = scmp.ne.s32.totalorder %s303, %s304
      %p316 = scmp.eq.s32.totalorder %s42, 1
      %p317 = por %p315, %p316
      %p319 = scmp.ne.s32.totalorder %s304, %s318
      %p320 = scmp.eq.s32.totalorder %s42, 0
      %p321 = por %p319, %p320
      %s323 = sadd.s32 %s322, 1
      %p326 = scmp.eq.s32.totalorder %s36, 1
      %p327 = scmp.ne.s32.totalorder %s322, %s324
      %p328 = scmp.eq.s32.totalorder %s36, 0
      %p329 = por %p327, %p328
      %p330 = scmp.ne.s32.totalorder %s322, %s324
      %p331 = scmp.eq.s32.totalorder %s41, 1
      %p332 = por %p330, %p331
      %p333 = scmp.ne.s32.totalorder %s324, %s325
      %p334 = scmp.eq.s32.totalorder %s41, 0
      %p335 = por %p333, %p334
      %p336 = scmp.ne.s32.totalorder %s324, %s325
      %p337 = scmp.eq.s32.totalorder %s42, 1
      %p338 = por %p336, %p337
      %p340 = scmp.ne.s32.totalorder %s325, %s339
      %p341 = scmp.eq.s32.totalorder %s42, 0
      %p342 = por %p340, %p341
      %s344 = sadd.s32 %s343, 1
      %p347 = scmp.eq.s32.totalorder %s36, 1
      %p348 = scmp.ne.s32.totalorder %s343, %s345
      %p349 = scmp.eq.s32.totalorder %s36, 0
      %p350 = por %p348, %p349
      %p351 = scmp.ne.s32.totalorder %s343, %s345
      %p352 = scmp.eq.s32.totalorder %s41, 1
      %p353 = por %p351, %p352
      %p354 = scmp.ne.s32.totalorder %s345, %s346
      %p355 = scmp.eq.s32.totalorder %s41, 0
      %p356 = por %p354, %p355
      %p357 = scmp.ne.s32.totalorder %s345, %s346
      %p358 = scmp.eq.s32.totalorder %s42, 1
      %p359 = por %p357, %p358
      %p361 = scmp.ne.s32.totalorder %s346, %s360
      %p362 = scmp.eq.s32.totalorder %s42, 0
      %p363 = por %p361, %p362
      %s365 = sadd.s32 %s364, 1
      %p368 = scmp.eq.s32.totalorder %s36, 1
      %p369 = scmp.ne.s32.totalorder %s364, %s366
      %p370 = scmp.eq.s32.totalorder %s36, 0
      %p371 = por %p369, %p370
      %p372 = scmp.ne.s32.totalorder %s364, %s366
      %p373 = scmp.eq.s32.totalorder %s41, 1
      %p374 = por %p372, %p373
      %p375 = scmp.ne.s32.totalorder %s366, %s367
      %p376 = scmp.eq.s32.totalorder %s41, 0
      %p377 = por %p375, %p376
      %p378 = scmp.ne.s32.totalorder %s366, %s367
      %p379 = scmp.eq.s32.totalorder %s42, 1
      %p380 = por %p378, %p379
      %p382 = scmp.ne.s32.totalorder %s367, %s381
      %p383 = scmp.eq.s32.totalorder %s42, 0
      %p384 = por %p382, %p383
      %s386 = sadd.s32 %s385, 1
      %p389 = scmp.eq.s32.totalorder %s36, 1
      %p390 = scmp.ne.s32.totalorder %s385, %s387
      %p391 = scmp.eq.s32.totalorder %s36, 0
      %p392 = por %p390, %p391
      %p393 = scmp.ne.s32.totalorder %s385, %s387
      %p394 = scmp.eq.s32.totalorder %s41, 1
      %p395 = por %p393, %p394
      %p396 = scmp.ne.s32.totalorder %s387, %s388
      %p397 = scmp.eq.s32.totalorder %s41, 0
      %p398 = por %p396, %p397
      %p399 = scmp.ne.s32.totalorder %s387, %s388
      %p400 = scmp.eq.s32.totalorder %s42, 1
      %p401 = por %p399, %p400
      %p403 = scmp.ne.s32.totalorder %s388, %s402
      %p404 = scmp.eq.s32.totalorder %s42, 0
      %p405 = por %p403, %p404
      %s406 = ssub.s32 %s36, %s43
      %p407 = scmp.eq.s32.totalorder %s406, 0
      %s409 = sadd.s32 %s408, 1
      %s410 = scalar_select %p407, %s408, %s409
      %p413 = pneg %p407
      %p414 = scmp.eq.s32.totalorder %s36, 1
      %p415 = por %p413, %p414
      %p416 = scmp.ne.s32.totalorder %s408, %s411
      %p417 = scmp.eq.s32.totalorder %s36, 0
      %p418 = por %p416, %p417
      %p419 = scmp.ne.s32.totalorder %s408, %s411
      %p420 = scmp.eq.s32.totalorder %s41, 1
      %p421 = por %p419, %p420
      %p422 = scmp.ne.s32.totalorder %s411, %s412
      %p423 = scmp.eq.s32.totalorder %s41, 0
      %p424 = por %p422, %p423
      %p425 = scmp.ne.s32.totalorder %s411, %s412
      %p426 = scmp.eq.s32.totalorder %s42, 1
      %p427 = por %p425, %p426
      %p429 = scmp.ne.s32.totalorder %s412, %s428
      %p430 = scmp.eq.s32.totalorder %s42, 0
      %p431 = por %p429, %p430
      %p432 = scmp.le.s32.totalorder 1, %s36
      %p433 = scmp.lt.s32.totalorder %s36, 3
      %p434 = pnand %p432, %p433
      %p435 = pneg %p434
      // Predicated region
      $region9: #{clip_caption_forward.1} parent=5 // pred_check
        _
      $region10: #{clip_caption_forward.1} parent=5 // pred_check_branch
        %437 = sbr.rel (%p434) target = $region12
      $region11: #{clip_caption_forward.1} parent=5 // pred_region
        %s438 = ssub.s32 %s36, 1
        // Predicated region
        $region13: #{clip_caption_forward.1} parent=11 // pred_check
          %p439 = pneg %p83
        $region14: #{clip_caption_forward.1} parent=11 // pred_check_branch
          %441 = sbr.rel (%p439) target = $region16
        $region15: #{clip_caption_forward.1} parent=11 // pred_region
          %s443 = ssub.s32 2048, 2048
          %444 = vsyncadd [#allocation7], %s443
          %s445 = sshll.u32 [#allocation6], 4
          %s446 = int_to_ptr.vmem [resolvable:$true] %s445
          %451 = dma.hbm_to_vmem [thread:$0]  %s2, 2048, %s446, [#allocation7], 256, 256, 16
        $region16: #{clip_caption_forward.1} parent=11 // pred_fallthru
          _
        // Predicated region
        $region17: #{clip_caption_forward.1} parent=11 // pred_check
          %p452 = pneg %p104
        $region18: #{clip_caption_forward.1} parent=11 // pred_check_branch
          %454 = sbr.rel (%p452) target = $region20
        $region19: #{clip_caption_forward.1} parent=11 // pred_region
          _
        $region20: #{clip_caption_forward.1} parent=11 // pred_fallthru
          _
        // Predicated region
        $region21: #{clip_caption_forward.1} parent=11 // pred_check
          %p455 = pneg %p125
        $region22: #{clip_caption_forward.1} parent=11 // pred_check_branch
          %457 = sbr.rel (%p455) target = $region24
        $region23: #{clip_caption_forward.1} parent=11 // pred_region
          %s459 = ssub.s32 7680, 7680
          %460 = vsyncadd [#allocation7], %s459
          %s461 = sshll.u32 [#allocation8], 4
          %s462 = int_to_ptr.vmem [resolvable:$true] %s461
          %467 = dma.hbm_to_vmem [thread:$0]  %s4, 7680, %s462, [#allocation7], 384, 384, 24
        $region24: #{clip_caption_forward.1} parent=11 // pred_fallthru
          _
        // Predicated region
        $region25: #{clip_caption_forward.1} parent=11 // pred_check
          %p468 = pneg %p146
        $region26: #{clip_caption_forward.1} parent=11 // pred_check_branch
          %470 = sbr.rel (%p468) target = $region28
        $region27: #{clip_caption_forward.1} parent=11 // pred_region
          _
        $region28: #{clip_caption_forward.1} parent=11 // pred_fallthru
          _
        // Predicated region
        $region29: #{clip_caption_forward.1} parent=11 // pred_check
          %p471 = pneg %p167
        $region30: #{clip_caption_forward.1} parent=11 // pred_check_branch
          %473 = sbr.rel (%p471) target = $region32
        $region31: #{clip_caption_forward.1} parent=11 // pred_region
          %s475 = ssub.s32 4096, 4096
          %476 = vsyncadd [#allocation10], %s475
          %s477 = sshll.u32 [#allocation9], 4
          %s478 = int_to_ptr.vmem [resolvable:$true] %s477
          %483 = dma.hbm_to_vmem [thread:$0]  %s6, 4096, %s478, [#allocation10], 128, 128, 8
        $region32: #{clip_caption_forward.1} parent=11 // pred_fallthru
          _
        // Predicated region
        $region33: #{clip_caption_forward.1} parent=11 // pred_check
          %p484 = pneg %p188
        $region34: #{clip_caption_forward.1} parent=11 // pred_check_branch
          %486 = sbr.rel (%p484) target = $region36
        $region35: #{clip_caption_forward.1} parent=11 // pred_region
          %s488 = ssub.s32 1024, 1024
          %489 = vsyncadd [#allocation10], %s488
          %s490 = sshll.u32 [#allocation11], 4
          %s491 = int_to_ptr.vmem [resolvable:$true] %s490
          %496 = dma.hbm_to_vmem [thread:$0]  %s7, 1024, %s491, [#allocation10], 256, 256, 16
        $region36: #{clip_caption_forward.1} parent=11 // pred_fallthru
          _
        // Predicated region
        $region37: #{clip_caption_forward.1} parent=11 // pred_check
          %p497 = pneg %p209
        $region38: #{clip_caption_forward.1} parent=11 // pred_check_branch
          %499 = sbr.rel (%p497) target = $region40
        $region39: #{clip_caption_forward.1} parent=11 // pred_region
          %s501 = ssub.s32 1024, 1024
          %502 = vsyncadd [#allocation13], %s501
          %s503 = sshll.u32 [#allocation12], 4
          %s504 = int_to_ptr.vmem [resolvable:$true] %s503
          %509 = dma.hbm_to_vmem [thread:$0]  %s8, 1024, %s504, [#allocation13], 128, 128, 8
        $region40: #{clip_caption_forward.1} parent=11 // pred_fallthru
          _
        // Predicated region
        $region41: #{clip_caption_forward.1} parent=11 // pred_check
          %p510 = pneg %p230
        $region42: #{clip_caption_forward.1} parent=11 // pred_check_branch
          %512 = sbr.rel (%p510) target = $region44
        $region43: #{clip_caption_forward.1} parent=11 // pred_region
          %s514 = ssub.s32 256, 256
          %515 = vsyncadd [#allocation13], %s514
          %s516 = sshll.u32 [#allocation14], 4
          %s517 = int_to_ptr.vmem [resolvable:$true] %s516
          %522 = dma.hbm_to_vmem [thread:$0]  %s9, 256, %s517, [#allocation13], 128, 128, 8
        $region44: #{clip_caption_forward.1} parent=11 // pred_fallthru
          _
        // Predicated region
        $region45: #{clip_caption_forward.1} parent=11 // pred_check
          %p523 = pneg %p251
        $region46: #{clip_caption_forward.1} parent=11 // pred_check_branch
          %525 = sbr.rel (%p523) target = $region48
        $region47: #{clip_caption_forward.1} parent=11 // pred_region
          %s527 = ssub.s32 1024, 1024
          %528 = vsyncadd [#allocation16], %s527
          %s529 = sshll.u32 [#allocation15], 4
          %s530 = int_to_ptr.vmem [resolvable:$true] %s529
          %535 = dma.hbm_to_vmem [thread:$0]  %s10, 1024, %s530, [#allocation16], 128, 128, 8
        $region48: #{clip_caption_forward.1} parent=11 // pred_fallthru
          _
        // Predicated region
        $region49: #{clip_caption_forward.1} parent=11 // pred_check
          %p536 = pneg %p272
        $region50: #{clip_caption_forward.1} parent=11 // pred_check_branch
          %538 = sbr.rel (%p536) target = $region52
        $region51: #{clip_caption_forward.1} parent=11 // pred_region
          _
        $region52: #{clip_caption_forward.1} parent=11 // pred_fallthru
          _
        // Predicated region
        $region53: #{clip_caption_forward.1} parent=11 // pred_check
          %p539 = pneg %p293
        $region54: #{clip_caption_forward.1} parent=11 // pred_check_branch
          %541 = sbr.rel (%p539) target = $region56
        $region55: #{clip_caption_forward.1} parent=11 // pred_region
          %s543 = ssub.s32 1024, 1024
          %544 = vsyncadd [#allocation16], %s543
          %s545 = sshll.u32 [#allocation17], 4
          %s546 = int_to_ptr.vmem [resolvable:$true] %s545
          %551 = dma.hbm_to_vmem [thread:$0]  %s12, 1024, %s546, [#allocation16], 128, 128, 8
        $region56: #{clip_caption_forward.1} parent=11 // pred_fallthru
          _
        // Predicated region
        $region57: #{clip_caption_forward.1} parent=11 // pred_check
          %p552 = pneg %p314
        $region58: #{clip_caption_forward.1} parent=11 // pred_check_branch
          %554 = sbr.rel (%p552) target = $region60
        $region59: #{clip_caption_forward.1} parent=11 // pred_region
          _
        $region60: #{clip_caption_forward.1} parent=11 // pred_fallthru
          _
        // Predicated region
        $region61: #{clip_caption_forward.1} parent=11 // pred_check
          %p555 = pneg %p335
        $region62: #{clip_caption_forward.1} parent=11 // pred_check_branch
          %557 = sbr.rel (%p555) target = $region64
        $region63: #{clip_caption_forward.1} parent=11 // pred_region
          _
        $region64: #{clip_caption_forward.1} parent=11 // pred_fallthru
          _
        // Predicated region
        $region65: #{clip_caption_forward.1} parent=11 // pred_check
          %p558 = pneg %p356
        $region66: #{clip_caption_forward.1} parent=11 // pred_check_branch
          %560 = sbr.rel (%p558) target = $region68
        $region67: #{clip_caption_forward.1} parent=11 // pred_region
          _
        $region68: #{clip_caption_forward.1} parent=11 // pred_fallthru
          _
        // Predicated region
        $region69: #{clip_caption_forward.1} parent=11 // pred_check
          %p561 = pneg %p377
        $region70: #{clip_caption_forward.1} parent=11 // pred_check_branch
          %563 = sbr.rel (%p561) target = $region72
        $region71: #{clip_caption_forward.1} parent=11 // pred_region
          %s565 = ssub.s32 4096, 4096
          %566 = vsyncadd [#allocation19], %s565
          %s567 = sshll.u32 [#allocation18], 4
          %s568 = int_to_ptr.vmem [resolvable:$true] %s567
          %573 = dma.hbm_to_vmem [thread:$0]  %s16, 4096, %s568, [#allocation19], 128, 128, 8
        $region72: #{clip_caption_forward.1} parent=11 // pred_fallthru
          _
        // Predicated region
        $region73: #{clip_caption_forward.1} parent=11 // pred_check
          %p574 = pneg %p398
        $region74: #{clip_caption_forward.1} parent=11 // pred_check_branch
          %576 = sbr.rel (%p574) target = $region76
        $region75: #{clip_caption_forward.1} parent=11 // pred_region
          _
        $region76: #{clip_caption_forward.1} parent=11 // pred_fallthru
          _
      $region12: #{clip_caption_forward.1} parent=5 // pred_fallthru
        _
      %p577 = scmp.lt.s32.totalorder %s36, 2
      // Predicated region
      $region77: #{clip_caption_forward.1} parent=5 // pred_check
        %p578 = pneg %p577
      $region78: #{clip_caption_forward.1} parent=5 // pred_check_branch
        %580 = sbr.rel (%p578) target = $region80
      $region79: #{clip_caption_forward.1} parent=5 // pred_region
        // Predicated region
        $region81: #{clip_caption_forward.1} parent=79 // pred_check
          %p581 = pneg %p56
        $region82: #{clip_caption_forward.1} parent=79 // pred_check_branch
          %583 = sbr.rel (%p581) target = $region84
        $region83: #{clip_caption_forward.1} parent=79 // pred_region
          %s584 = sand.u32 %s46, 1
          %s585 = scalar_lea.sflag [#allocation5], %s584
          %s586 = sand.u32 %s46, 1
          %s587 = scalar_lea.vmem [#allocation4], %s586
          %s589 = ssub.s32 16, 16
          %590 = vsyncadd %s585, %s589
          %s591 = smul.addr %s36, 16
          %s592 = scalar_lea.hbm %s1, %s591
          %s594 = sshll.u32 %s587, 4
          %s595 = int_to_ptr.vmem [resolvable:$true] %s594
          %597 = dma.hbm_to_vmem [thread:$0]  %s592, 16, %s595, %s585
        $region84: #{clip_caption_forward.1} parent=79 // pred_fallthru
          _
      $region80: #{clip_caption_forward.1} parent=5 // pred_fallthru
        _
      %p598 = scmp.le.s32.totalorder 1, %s36
      %p599 = scmp.lt.s32.totalorder %s36, 3
      %p600 = pnand %p598, %p599
      %p601 = pneg %p600
      // Predicated region
      $region85: #{clip_caption_forward.1} parent=5 // pred_check
        _
      $region86: #{clip_caption_forward.1} parent=5 // pred_check_branch
        %603 = sbr.rel (%p600) target = $region88
      $region87: #{clip_caption_forward.1} parent=5 // pred_region
        %s604 = ssub.s32 %s36, 1
        %s605 = sand.u32 %s49, 1
        %s606 = scalar_lea.sflag [#allocation5], %s605
        %s607 = sand.u32 %s49, 1
        %s608 = scalar_lea.vmem [#allocation4], %s607
        // Predicated region
        $region89: #{clip_caption_forward.1} parent=87 // pred_check
          %p609 = pneg %p62
        $region90: #{clip_caption_forward.1} parent=87 // pred_check_branch
          %611 = sbr.rel (%p609) target = $region92
        $region91: #{clip_caption_forward.1} parent=87 // pred_region
          %612 = dma.done %s606, 16
        $region92: #{clip_caption_forward.1} parent=87 // pred_fallthru
          _
        // Predicated region
        $region93: #{clip_caption_forward.1} parent=87 // pred_check
          %p613 = pneg %p83
        $region94: #{clip_caption_forward.1} parent=87 // pred_check_branch
          %615 = sbr.rel (%p613) target = $region96
        $region95: #{clip_caption_forward.1} parent=87 // pred_region
          %616 = dma.done [#allocation7], 2048
        $region96: #{clip_caption_forward.1} parent=87 // pred_fallthru
          _
        // Predicated region
        $region97: #{clip_caption_forward.1} parent=87 // pred_check
          %p617 = pneg %p125
        $region98: #{clip_caption_forward.1} parent=87 // pred_check_branch
          %619 = sbr.rel (%p617) target = $region100
        $region99: #{clip_caption_forward.1} parent=87 // pred_region
          %620 = dma.done [#allocation7], 7680
        $region100: #{clip_caption_forward.1} parent=87 // pred_fallthru
          _
        // Predicated region
        $region101: #{clip_caption_forward.1} parent=87 // pred_check
          %p621 = pneg %p167
        $region102: #{clip_caption_forward.1} parent=87 // pred_check_branch
          %623 = sbr.rel (%p621) target = $region104
        $region103: #{clip_caption_forward.1} parent=87 // pred_region
          %624 = dma.done [#allocation10], 4096
        $region104: #{clip_caption_forward.1} parent=87 // pred_fallthru
          _
        // Predicated region
        $region105: #{clip_caption_forward.1} parent=87 // pred_check
          %p625 = pneg %p188
        $region106: #{clip_caption_forward.1} parent=87 // pred_check_branch
          %627 = sbr.rel (%p625) target = $region108
        $region107: #{clip_caption_forward.1} parent=87 // pred_region
          %628 = dma.done [#allocation10], 1024
        $region108: #{clip_caption_forward.1} parent=87 // pred_fallthru
          _
        // Predicated region
        $region109: #{clip_caption_forward.1} parent=87 // pred_check
          %p629 = pneg %p209
        $region110: #{clip_caption_forward.1} parent=87 // pred_check_branch
          %631 = sbr.rel (%p629) target = $region112
        $region111: #{clip_caption_forward.1} parent=87 // pred_region
          %632 = dma.done [#allocation13], 1024
        $region112: #{clip_caption_forward.1} parent=87 // pred_fallthru
          _
        // Predicated region
        $region113: #{clip_caption_forward.1} parent=87 // pred_check
          %p633 = pneg %p230
        $region114: #{clip_caption_forward.1} parent=87 // pred_check_branch
          %635 = sbr.rel (%p633) target = $region116
        $region115: #{clip_caption_forward.1} parent=87 // pred_region
          %636 = dma.done [#allocation13], 256
        $region116: #{clip_caption_forward.1} parent=87 // pred_fallthru
          _
        // Predicated region
        $region117: #{clip_caption_forward.1} parent=87 // pred_check
          %p637 = pneg %p251
        $region118: #{clip_caption_forward.1} parent=87 // pred_check_branch
          %639 = sbr.rel (%p637) target = $region120
        $region119: #{clip_caption_forward.1} parent=87 // pred_region
          %640 = dma.done [#allocation16], 1024
        $region120: #{clip_caption_forward.1} parent=87 // pred_fallthru
          _
        // Predicated region
        $region121: #{clip_caption_forward.1} parent=87 // pred_check
          %p641 = pneg %p293
        $region122: #{clip_caption_forward.1} parent=87 // pred_check_branch
          %643 = sbr.rel (%p641) target = $region124
        $region123: #{clip_caption_forward.1} parent=87 // pred_region
          %644 = dma.done [#allocation16], 1024
        $region124: #{clip_caption_forward.1} parent=87 // pred_fallthru
          _
        // Predicated region
        $region125: #{clip_caption_forward.1} parent=87 // pred_check
          %p645 = pneg %p377
        $region126: #{clip_caption_forward.1} parent=87 // pred_check_branch
          %647 = sbr.rel (%p645) target = $region128
        $region127: #{clip_caption_forward.1} parent=87 // pred_region
          %648 = dma.done [#allocation19], 4096
        $region128: #{clip_caption_forward.1} parent=87 // pred_fallthru
          _
        %s649 = sand.u32 %s49, 1
        %s650 = scalar_lea.sflag [#allocation5], %s649
        %s651 = sand.u32 %s49, 1
        %s652 = scalar_lea.vmem [#allocation4], %s651
        %p653 = pneg %p62
        %p654 = pneg %p59
        %p655 = pneg %p83
        %p656 = pneg %p80
        %p657 = pneg %p104
        %p658 = pneg %p101
        %p659 = pneg %p125
        %p660 = pneg %p122
        %p661 = pneg %p146
        %p662 = pneg %p143
        %p663 = pneg %p167
        %p664 = pneg %p164
        %p665 = pneg %p188
        %p666 = pneg %p185
        %p667 = pneg %p209
        %p668 = pneg %p206
        %p669 = pneg %p230
        %p670 = pneg %p227
        %p671 = pneg %p251
        %p672 = pneg %p248
        %p673 = pneg %p272
        %p674 = pneg %p269
        %p675 = pneg %p293
        %p676 = pneg %p290
        %p677 = pneg %p314
        %p678 = pneg %p311
        %p679 = pneg %p335
        %p680 = pneg %p332
        %p681 = pneg %p356
        %p682 = pneg %p353
        %p683 = pneg %p377
        %p684 = pneg %p374
        %p685 = pneg %p398
        %p686 = pneg %p395
        %p687 = pneg %p424
        %p688 = pneg %p421
        %p689 = scmp.lt.s32.totalorder %s41, 1
        %s690 = scalar_select %p689, %s41, 1
        %s691 = smul.addr %s690, 6
        %s692 = smul.addr %s691, 8
        %s693 = scalar_lea.vmem %s18, %s692
        %p694 = scmp.lt.s32.totalorder %s41, 1
        %s695 = scalar_select %p694, %s41, 1
        %s696 = smul.addr %s695, 6
        %s697 = smul.addr %s696, 8
        %s698 = scalar_lea.vmem %s18, %s697
        %v699 = vld [vmem:[%s608] sm:$0x1]
        %v700 = vld [vmem:[#allocation6] sm:$0xff]
        %v701 = vld [vmem:[#allocation6 + $0x8] sm:$0xff]
        %v702 = vld [vmem:[#allocation6 + $0x10] sm:$0xff]
        %v703 = vld [vmem:[#allocation6 + $0x18] sm:$0xff]
        %v704 = vld [vmem:[#allocation6 + $0x20] sm:$0xff]
        %v705 = vld [vmem:[#allocation6 + $0x28] sm:$0xff]
        %v706 = vld [vmem:[#allocation6 + $0x30] sm:$0xff]
        %v707 = vld [vmem:[#allocation6 + $0x38] sm:$0xff]
        %v708 = vld [vmem:[#allocation6 + $0x40] sm:$0xff]
        %v709 = vld [vmem:[#allocation6 + $0x48] sm:$0xff]
        %v710 = vld [vmem:[#allocation6 + $0x50] sm:$0xff]
        %v711 = vld [vmem:[#allocation6 + $0x58] sm:$0xff]
        %v712 = vld [vmem:[#allocation6 + $0x60] sm:$0xff]
        %v713 = vld [vmem:[#allocation6 + $0x68] sm:$0xff]
        %v714 = vld [vmem:[#allocation6 + $0x70] sm:$0xff]
        %v715 = vld [vmem:[#allocation6 + $0x78] sm:$0xff]
        %v716 = vld [vmem:[%s3] sm:$0x3]
        %v718 = vlaneseq
        %v719 = vshrl.u32 %v718, 7
        %v720 = vsub.s32 0, %v719
        %v721 = vrot.slane %v716, %v720
        %v722 = vlaneseq
        %v723 = vshrl.u32 %v722, 7
        %v724 = vsub.s32 1, %v723
        %v725 = vrot.slane %v716, %v724
        %vm728 = vcmask 523264
        %v730 = vsel %vm728, %v699, 0
        %732 = vmatprep.subr.mxu0 %v701
        %733 = vmatpush1.msra.mxu0 %v700
        %734 = vmatprep.subr.mxu0 %v703
        %735 = vmatpush1.msra.mxu0 %v702
        %736 = vmatprep.subr.mxu0 %v705
        %737 = vmatpush1.msra.mxu0 %v704
        %738 = vmatprep.subr.mxu0 %v707
        %739 = vmatpush1.msra.mxu0 %v706
        %740 = vmatprep.subr.mxu0 %v709
        %741 = vmatpush1.msra.mxu0 %v708
        %742 = vmatprep.subr.mxu0 %v711
        %743 = vmatpush1.msra.mxu0 %v710
        %744 = vmatprep.subr.mxu0 %v713
        %745 = vmatpush1.msra.mxu0 %v712
        %746 = vmatprep.subr.mxu0 %v715
        %747 = vmatpush1.msra.mxu0 %v714
        %748 = vmatprep.subr.mxu0 0.0
        %749 = vmatpush1.msra.mxu0 0.0
        %750 = vmatprep.subr.mxu0 0.0
        %751 = vmatpush1.msra.mxu0 0.0
        %752 = vmatprep.subr.mxu0 0.0
        %753 = vmatpush1.msra.mxu0 0.0
        %754 = vmatprep.subr.mxu0 0.0
        %755 = vmatpush1.msra.mxu0 0.0
        %756 = vmatprep.subr.mxu0 0.0
        %757 = vmatpush1.msra.mxu0 0.0
        %758 = vmatprep.subr.mxu0 0.0
        %759 = vmatpush1.msra.mxu0 0.0
        %760 = vmatprep.subr.mxu0 0.0
        %761 = vmatpush1.msra.mxu0 0.0
        %762 = vmatprep.subr.mxu0 0.0
        %763 = vmatpush1.msra.mxu0 0.0
        %764 = vmatprep.subr.mxu0 0.0
        %765 = vmatpush1.msra.mxu0 0.0
        %766 = vmatprep.subr.mxu0 0.0
        %767 = vmatpush1.msra.mxu0 0.0
        %768 = vmatprep.subr.mxu0 0.0
        %769 = vmatpush1.msra.mxu0 0.0
        %770 = vmatprep.subr.mxu0 0.0
        %771 = vmatpush1.msra.mxu0 0.0
        %772 = vmatprep.subr.mxu0 0.0
        %773 = vmatpush1.msra.mxu0 0.0
        %774 = vmatprep.subr.mxu0 0.0
        %775 = vmatpush1.msra.mxu0 0.0
        %776 = vmatprep.subr.mxu0 0.0
        %777 = vmatpush1.msra.mxu0 0.0
        %778 = vmatprep.subr.mxu0 0.0
        %779 = vmatpush1.msra.mxu0 0.0
        %780 = vmatprep.subr.mxu0 0.0
        %781 = vmatpush1.msra.mxu0 0.0
        %782 = vmatprep.subr.mxu0 0.0
        %783 = vmatpush1.msra.mxu0 0.0
        %784 = vmatprep.subr.mxu0 0.0
        %785 = vmatpush1.msra.mxu0 0.0
        %786 = vmatprep.subr.mxu0 0.0
        %787 = vmatpush1.msra.mxu0 0.0
        %788 = vmatprep.subr.mxu0 0.0
        %789 = vmatpush1.msra.mxu0 0.0
        %790 = vmatprep.subr.mxu0 0.0
        %791 = vmatpush1.msra.mxu0 0.0
        %792 = vmatprep.subr.mxu0 0.0
        %793 = vmatpush1.msra.mxu0 0.0
        %794 = vmatprep.subr.mxu0 0.0
        %795 = vmatpush1.msra.mxu0 0.0
        %796 = vmatprep.mubr.f32.mxu0 0.0
        %797 = vmatmul.mubr.f32.gmra.mrb[0].mxu0 %v730
        %v798 = vpop.f32.mrb[0].mxu0
        %v799 = vadd.f32 %v721, %v798
        %v800 = vpop.f32.mrb[0].mxu0
        %v801 = vadd.f32 %v725, %v800
        %802 = vdwg.mxu0
        %v803 = vtanh.pop %v799
        %v804 = vtanh.pop %v801
        %v805 = vld [vmem:[#allocation8] sm:$0xff]
        %v806 = vld [vmem:[#allocation8 + $0x8] sm:$0xff]
        %v807 = vld [vmem:[#allocation8 + $0x10] sm:$0xff]
        %v808 = vld [vmem:[#allocation8 + $0x18] sm:$0xff]
        %v809 = vld [vmem:[#allocation8 + $0x20] sm:$0xff]
        %v810 = vld [vmem:[#allocation8 + $0x28] sm:$0xff]
        %v811 = vld [vmem:[#allocation8 + $0x30] sm:$0xff]
        %v812 = vld [vmem:[#allocation8 + $0x38] sm:$0xff]
        %v813 = vld [vmem:[#allocation8 + $0x40] sm:$0xff]
        %v814 = vld [vmem:[#allocation8 + $0x48] sm:$0xff]
        %v815 = vld [vmem:[#allocation8 + $0x50] sm:$0xff]
        %v816 = vld [vmem:[#allocation8 + $0x58] sm:$0xff]
        %v817 = vld [vmem:[#allocation8 + $0x60] sm:$0xff]
        %v818 = vld [vmem:[#allocation8 + $0x68] sm:$0xff]
        %v819 = vld [vmem:[#allocation8 + $0x70] sm:$0xff]
        %v820 = vld [vmem:[#allocation8 + $0x78] sm:$0xff]
        %v821 = vld [vmem:[#allocation8 + $0x80] sm:$0xff]
        %v822 = vld [vmem:[#allocation8 + $0x88] sm:$0xff]
        %v823 = vld [vmem:[#allocation8 + $0x90] sm:$0xff]
        %v824 = vld [vmem:[#allocation8 + $0x98] sm:$0xff]
        %v825 = vld [vmem:[#allocation8 + $0xa0] sm:$0xff]
        %v826 = vld [vmem:[#allocation8 + $0xa8] sm:$0xff]
        %v827 = vld [vmem:[#allocation8 + $0xb0] sm:$0xff]
        %v828 = vld [vmem:[#allocation8 + $0xb8] sm:$0xff]
        %v829 = vld [vmem:[#allocation8 + $0xc0] sm:$0xff]
        %v830 = vld [vmem:[#allocation8 + $0xc8] sm:$0xff]
        %v831 = vld [vmem:[#allocation8 + $0xd0] sm:$0xff]
        %v832 = vld [vmem:[#allocation8 + $0xd8] sm:$0xff]
        %v833 = vld [vmem:[#allocation8 + $0xe0] sm:$0xff]
        %v834 = vld [vmem:[#allocation8 + $0xe8] sm:$0xff]
        %v835 = vld [vmem:[#allocation8 + $0xf0] sm:$0xff]
        %v836 = vld [vmem:[#allocation8 + $0xf8] sm:$0xff]
        %v837 = vld [vmem:[#allocation8 + $0x100] sm:$0xff]
        %v838 = vld [vmem:[#allocation8 + $0x108] sm:$0xff]
        %v839 = vld [vmem:[#allocation8 + $0x110] sm:$0xff]
        %v840 = vld [vmem:[#allocation8 + $0x118] sm:$0xff]
        %v841 = vld [vmem:[#allocation8 + $0x120] sm:$0xff]
        %v842 = vld [vmem:[#allocation8 + $0x128] sm:$0xff]
        %v843 = vld [vmem:[#allocation8 + $0x130] sm:$0xff]
        %v844 = vld [vmem:[#allocation8 + $0x138] sm:$0xff]
        %v845 = vld [vmem:[#allocation8 + $0x140] sm:$0xff]
        %v846 = vld [vmem:[#allocation8 + $0x148] sm:$0xff]
        %v847 = vld [vmem:[#allocation8 + $0x150] sm:$0xff]
        %v848 = vld [vmem:[#allocation8 + $0x158] sm:$0xff]
        %v849 = vld [vmem:[#allocation8 + $0x160] sm:$0xff]
        %v850 = vld [vmem:[#allocation8 + $0x168] sm:$0xff]
        %v851 = vld [vmem:[#allocation8 + $0x170] sm:$0xff]
        %v852 = vld [vmem:[#allocation8 + $0x178] sm:$0xff]
        %v853 = vld [vmem:[#allocation8 + $0x180] sm:$0xff]
        %v854 = vld [vmem:[#allocation8 + $0x188] sm:$0xff]
        %v855 = vld [vmem:[#allocation8 + $0x190] sm:$0xff]
        %v856 = vld [vmem:[#allocation8 + $0x198] sm:$0xff]
        %v857 = vld [vmem:[#allocation8 + $0x1a0] sm:$0xff]
        %v858 = vld [vmem:[#allocation8 + $0x1a8] sm:$0xff]
        %v859 = vld [vmem:[#allocation8 + $0x1b0] sm:$0xff]
        %v860 = vld [vmem:[#allocation8 + $0x1b8] sm:$0xff]
        %v861 = vld [vmem:[#allocation8 + $0x1c0] sm:$0xff]
        %v862 = vld [vmem:[#allocation8 + $0x1c8] sm:$0xff]
        %v863 = vld [vmem:[#allocation8 + $0x1d0] sm:$0xff]
        %v864 = vld [vmem:[#allocation8 + $0x1d8] sm:$0xff]
        %v865 = vld [vmem:[%s5] sm:$0x7]
        %v867 = vlaneseq
        %v868 = vshrl.u32 %v867, 7
        %v869 = vsub.s32 0, %v868
        %v870 = vrot.slane %v865, %v869
        %v871 = vlaneseq
        %v872 = vshrl.u32 %v871, 7
        %v873 = vsub.s32 1, %v872
        %v874 = vrot.slane %v865, %v873
        %v875 = vlaneseq
        %v876 = vshrl.u32 %v875, 7
        %v877 = vsub.s32 2, %v876
        %v878 = vrot.slane %v865, %v877
        %vm882 = vcmask 261120
        %v884 = vsel %vm882, %v804, 0
        %886 = vmatprep.subr.mxu0 %v806
        %887 = vmatpush1.msra.mxu0 %v805
        %888 = vmatprep.subr.mxu0 %v809
        %889 = vmatpush1.msra.mxu0 %v808
        %890 = vmatprep.subr.mxu0 %v812
        %891 = vmatpush1.msra.mxu0 %v811
        %892 = vmatprep.subr.mxu0 %v815
        %893 = vmatpush1.msra.mxu0 %v814
        %894 = vmatprep.subr.mxu0 %v818
        %895 = vmatpush1.msra.mxu0 %v817
        %896 = vmatprep.subr.mxu0 %v821
        %897 = vmatpush1.msra.mxu0 %v820
        %898 = vmatprep.subr.mxu0 %v824
        %899 = vmatpush1.msra.mxu0 %v823
        %900 = vmatprep.subr.mxu0 %v827
        %901 = vmatpush1.msra.mxu0 %v826
        %902 = vmatprep.subr.mxu0 %v830
        %903 = vmatpush1.msra.mxu0 %v829
        %904 = vmatprep.subr.mxu0 %v833
        %905 = vmatpush1.msra.mxu0 %v832
        %906 = vmatprep.subr.mxu0 %v836
        %907 = vmatpush1.msra.mxu0 %v835
        %908 = vmatprep.subr.mxu0 %v839
        %909 = vmatpush1.msra.mxu0 %v838
        %910 = vmatprep.subr.mxu0 %v842
        %911 = vmatpush1.msra.mxu0 %v841
        %912 = vmatprep.subr.mxu0 %v845
        %913 = vmatpush1.msra.mxu0 %v844
        %914 = vmatprep.subr.mxu0 %v848
        %915 = vmatpush1.msra.mxu0 %v847
        %916 = vmatprep.subr.mxu0 %v851
        %917 = vmatpush1.msra.mxu0 %v850
        %918 = vmatprep.subr.mxu0 %v854
        %919 = vmatpush1.msra.mxu0 %v853
        %920 = vmatprep.subr.mxu0 %v857
        %921 = vmatpush1.msra.mxu0 %v856
        %922 = vmatprep.subr.mxu0 %v860
        %923 = vmatpush1.msra.mxu0 %v859
        %924 = vmatprep.subr.mxu0 %v863
        %925 = vmatpush1.msra.mxu0 %v862
        %926 = vmatprep.subr.mxu0 0.0
        %927 = vmatpush1.msra.mxu0 0.0
        %928 = vmatprep.subr.mxu0 0.0
        %929 = vmatpush1.msra.mxu0 0.0
        %930 = vmatprep.subr.mxu0 0.0
        %931 = vmatpush1.msra.mxu0 0.0
        %932 = vmatprep.subr.mxu0 0.0
        %933 = vmatpush1.msra.mxu0 0.0
        %934 = vmatprep.subr.mxu0 0.0
        %935 = vmatpush1.msra.mxu0 0.0
        %936 = vmatprep.subr.mxu0 0.0
        %937 = vmatpush1.msra.mxu0 0.0
        %938 = vmatprep.subr.mxu0 0.0
        %939 = vmatpush1.msra.mxu0 0.0
        %940 = vmatprep.subr.mxu0 0.0
        %941 = vmatpush1.msra.mxu0 0.0
        %942 = vmatprep.subr.mxu0 0.0
        %943 = vmatpush1.msra.mxu0 0.0
        %944 = vmatprep.subr.mxu0 0.0
        %945 = vmatpush1.msra.mxu0 0.0
        %946 = vmatprep.subr.mxu0 0.0
        %947 = vmatpush1.msra.mxu0 0.0
        %948 = vmatprep.subr.mxu0 0.0
        %949 = vmatpush1.msra.mxu0 0.0
        %950 = vmatprep.mubr.f32.mxu0 %v884
        %951 = vmatmul.mubr.f32.gmra.mrb[0].mxu0 %v803
        %v952 = vpop.f32.mrb[0].mxu0
        %v953 = vadd.f32 %v870, %v952
        %v954 = vpop.f32.mrb[0].mxu0
        %v955 = vadd.f32 %v874, %v954
        %956 = vdwg.mxu0
        %957 = vmatprep.subr.mxu0 0.0
        %958 = vmatpush1.msra.mxu0 %v807
        %959 = vmatprep.subr.mxu0 0.0
        %960 = vmatpush1.msra.mxu0 %v810
        %961 = vmatprep.subr.mxu0 0.0
        %962 = vmatpush1.msra.mxu0 %v813
        %963 = vmatprep.subr.mxu0 0.0
        %964 = vmatpush1.msra.mxu0 %v816
        %965 = vmatprep.subr.mxu0 0.0
        %966 = vmatpush1.msra.mxu0 %v819
        %967 = vmatprep.subr.mxu0 0.0
        %968 = vmatpush1.msra.mxu0 %v822
        %969 = vmatprep.subr.mxu0 0.0
        %970 = vmatpush1.msra.mxu0 %v825
        %971 = vmatprep.subr.mxu0 0.0
        %972 = vmatpush1.msra.mxu0 %v828
        %973 = vmatprep.subr.mxu0 0.0
        %974 = vmatpush1.msra.mxu0 %v831
        %975 = vmatprep.subr.mxu0 0.0
        %976 = vmatpush1.msra.mxu0 %v834
        %977 = vmatprep.subr.mxu0 0.0
        %978 = vmatpush1.msra.mxu0 %v837
        %979 = vmatprep.subr.mxu0 0.0
        %980 = vmatpush1.msra.mxu0 %v840
        %981 = vmatprep.subr.mxu0 0.0
        %982 = vmatpush1.msra.mxu0 %v843
        %983 = vmatprep.subr.mxu0 0.0
        %984 = vmatpush1.msra.mxu0 %v846
        %985 = vmatprep.subr.mxu0 0.0
        %986 = vmatpush1.msra.mxu0 %v849
        %987 = vmatprep.subr.mxu0 0.0
        %988 = vmatpush1.msra.mxu0 %v852
        %989 = vmatprep.subr.mxu0 0.0
        %990 = vmatpush1.msra.mxu0 %v855
        %991 = vmatprep.subr.mxu0 0.0
        %992 = vmatpush1.msra.mxu0 %v858
        %993 = vmatprep.subr.mxu0 0.0
        %994 = vmatpush1.msra.mxu0 %v861
        %995 = vmatprep.subr.mxu0 0.0
        %996 = vmatpush1.msra.mxu0 %v864
        %997 = vmatprep.subr.mxu0 0.0
        %998 = vmatpush1.msra.mxu0 0.0
        %999 = vmatprep.subr.mxu0 0.0
        %1000 = vmatpush1.msra.mxu0 0.0
        %1001 = vmatprep.subr.mxu0 0.0
        %1002 = vmatpush1.msra.mxu0 0.0
        %1003 = vmatprep.subr.mxu0 0.0
        %1004 = vmatpush1.msra.mxu0 0.0
        %1005 = vmatprep.subr.mxu0 0.0
        %1006 = vmatpush1.msra.mxu0 0.0
        %1007 = vmatprep.subr.mxu0 0.0
        %1008 = vmatpush1.msra.mxu0 0.0
        %1009 = vmatprep.subr.mxu0 0.0
        %1010 = vmatpush1.msra.mxu0 0.0
        %1011 = vmatprep.subr.mxu0 0.0
        %1012 = vmatpush1.msra.mxu0 0.0
        %1013 = vmatprep.subr.mxu0 0.0
        %1014 = vmatpush1.msra.mxu0 0.0
        %1015 = vmatprep.subr.mxu0 0.0
        %1016 = vmatpush1.msra.mxu0 0.0
        %1017 = vmatprep.subr.mxu0 0.0
        %1018 = vmatpush1.msra.mxu0 0.0
        %1019 = vmatprep.subr.mxu0 0.0
        %1020 = vmatpush1.msra.mxu0 0.0
        %1021 = vmatprep.mubr.f32.mxu0 %v884
        %1022 = vmatmul.mubr.f32.gmra.mrb[0].mxu0 %v803
        %v1023 = vpop.f32.mrb[0].mxu0
        %v1024 = vadd.f32 %v878, %v1023
        %v1025 = vpop.f32.mrb[0].mxu0
        %1026 = vdwg.mxu0
        %s1027 = smul.u32 %s41, 128
        %s1028 = sld [smem:[#allocation3 + %s1027]]
        %s1029 = scalar_lea.vmem [#allocation9], %s1028
        %v1030 = vld [vmem:[%s1029] sm:$0x1]
        %s1031 = sadd.s32 %s1027, 1
        %s1032 = sld [smem:[#allocation3 + %s1031]]
        %s1033 = scalar_lea.vmem [#allocation9], %s1032
        %v1034 = vld [vmem:[%s1033] sm:$0x1]
        %s1035 = sadd.s32 %s1027, 2
        %s1036 = sld [smem:[#allocation3 + %s1035]]
        %s1037 = scalar_lea.vmem [#allocation9], %s1036
        %v1038 = vld [vmem:[%s1037] sm:$0x1]
        %s1039 = sadd.s32 %s1027, 3
        %s1040 = sld [smem:[#allocation3 + %s1039]]
        %s1041 = scalar_lea.vmem [#allocation9], %s1040
        %v1042 = vld [vmem:[%s1041] sm:$0x1]
        %s1043 = sadd.s32 %s1027, 4
        %s1044 = sld [smem:[#allocation3 + %s1043]]
        %s1045 = scalar_lea.vmem [#allocation9], %s1044
        %v1046 = vld [vmem:[%s1045] sm:$0x1]
        %s1047 = sadd.s32 %s1027, 5
        %s1048 = sld [smem:[#allocation3 + %s1047]]
        %s1049 = scalar_lea.vmem [#allocation9], %s1048
        %v1050 = vld [vmem:[%s1049] sm:$0x1]
        %s1051 = sadd.s32 %s1027, 6
        %s1052 = sld [smem:[#allocation3 + %s1051]]
        %s1053 = scalar_lea.vmem [#allocation9], %s1052
        %v1054 = vld [vmem:[%s1053] sm:$0x1]
        %s1055 = sadd.s32 %s1027, 7
        %s1056 = sld [smem:[#allocation3 + %s1055]]
        %s1057 = scalar_lea.vmem [#allocation9], %s1056
        %v1058 = vld [vmem:[%s1057] sm:$0x1]
        %v1060 = vrot.slane %v953, 7
        %1061 = vrot.lane.b32.xlu0 %v1060, 96
        %v1062 = vpop.permute.xlu0 %1061
        %v1064 = vrot.slane %v953, 6
        %1065 = vrot.lane.b32.xlu0 %v1064, 64
        %v1066 = vpop.permute.xlu0 %1065
        %v1068 = vrot.slane %v953, 5
        %1069 = vrot.lane.b32.xlu0 %v1068, 32
        %v1070 = vpop.permute.xlu0 %1069
        %v1073 = vrot.slane %v955, 4
        %v1075 = vrot.slane %v955, 3
        %1076 = vrot.lane.b32.xlu0 %v1075, 96
        %v1077 = vpop.permute.xlu0 %1076
        %v1079 = vrot.slane %v955, 2
        %1080 = vrot.lane.b32.xlu0 %v1079, 64
        %v1081 = vpop.permute.xlu0 %1080
        %v1083 = vrot.slane %v955, 1
        %1084 = vrot.lane.b32.xlu0 %v1083, 32
        %v1085 = vpop.permute.xlu0 %1084
        %v1088 = vrot.slane %v1024, 7
        %1089 = vrot.lane.b32.xlu0 %v1088, 96
        %v1090 = vpop.permute.xlu0 %1089
        %v1093 = vrot.slane %v1030, 6
        %v1096 = vrot.slane %v1034, 5
        %v1099 = vrot.slane %v1038, 4
        %v1102 = vrot.slane %v1042, 3
        %v1105 = vrot.slane %v1046, 2
        %v1108 = vrot.slane %v1050, 1
        %vm1110 = vcmask 1040384
        %v1111 = vsel %vm1110, %v953, %v1062
        %vm1112 = vcmask 1041408
        %v1113 = vsel %vm1112, %v1111, %v1066
        %vm1114 = vcmask 1042432
        %v1115 = vsel %vm1114, %v1113, %v1070
        %vm1116 = vcmask 1043456
        %v1117 = vsel %vm1116, %v1115, %v1073
        %vm1118 = vcmask 1044480
        %v1119 = vsel %vm1118, %v1117, %v1077
        %vm1120 = vcmask 1045504
        %v1121 = vsel %vm1120, %v1119, %v1081
        %vm1122 = vcmask 1046528
        %v1123 = vsel %vm1122, %v1121, %v1085
        %v1124 = vsel %vm1110, %v1024, %v1090
        %v1125 = vsel %vm1112, %v1124, %v1093
        %v1126 = vsel %vm1114, %v1125, %v1096
        %v1127 = vsel %vm1116, %v1126, %v1099
        %v1128 = vsel %vm1118, %v1127, %v1102
        %v1129 = vsel %vm1120, %v1128, %v1105
        %v1130 = vsel %vm1122, %v1129, %v1108
        %v1132 = vrot.slane %v1058, 7
        %v1134 = vsel %vm1110, %v1054, %v1132
        %v1135 = vld [vmem:[#allocation12] sm:$0xff]
        %v1136 = vld [vmem:[#allocation12 + $0x8] sm:$0xff]
        %v1137 = vld [vmem:[#allocation12 + $0x10] sm:$0x3]
        %v1138 = vadd.f32 %v1123, %v1135
        %v1139 = vadd.f32 %v1130, %v1136
        %v1140 = vadd.f32 %v1134, %v1137
        %v1141 = vlaneseq
        %v1142 = vshrl.u32 %v1141, 7
        %v1143 = vadd.s32 %v1142, 8
        %v1144 = vadd.s32 %v1142, 16
        %v1145 = vlaneseq
        %v1146 = vand.u32 %v1145, 127
        %vm1147 = vcmp.le.s32.totalorder %v1146, %v1142
        %vm1148 = vcmp.le.s32.totalorder %v1146, %v1143
        %vm1149 = vcmp.le.s32.totalorder %v1146, %v1144
        %v1150 = vld [vmem:[#allocation14] sm:$0x1]
        %v1151 = vld [vmem:[#allocation14 + $0x1] sm:$0x1]
        %v1152 = vsel %vm882, %v1138, 0.0
        %1153 = vadd.xlane.f32.xlu0 %v1152
        %v1154 = vpop.xlane.xlu0 %1153
        %v1155 = vsel %vm882, %v1139, 0.0
        %1156 = vadd.xlane.f32.xlu0 %v1155
        %v1157 = vpop.xlane.xlu0 %1156
        %vm1158 = vcmask 254976
        %v1159 = vsel %vm1158, %v1140, 0.0
        %1160 = vadd.xlane.f32.xlu0 %v1159
        %v1161 = vpop.xlane.xlu0 %1160
        %v1162 = vrcp.pop 32.0
        %v1163 = vmul.f32 %v1154, %v1162
        %v1164 = vmul.f32 %v1157, %v1162
        %v1165 = vmul.f32 %v1161, %v1162
        %v1166 = vsub.f32 %v1138, %v1163
        %v1167 = vsub.f32 %v1139, %v1164
        %v1168 = vsub.f32 %v1140, %v1165
        %v1169 = vmul.f32 %v1166, %v1166
        %v1170 = vmul.f32 %v1167, %v1167
        %v1171 = vmul.f32 %v1168, %v1168
        %v1172 = vsel %vm882, %v1169, 0.0
        %1173 = vadd.xlane.f32.xlu0 %v1172
        %v1174 = vpop.xlane.xlu0 %1173
        %v1175 = vsel %vm882, %v1170, 0.0
        %1176 = vadd.xlane.f32.xlu0 %v1175
        %v1177 = vpop.xlane.xlu0 %1176
        %v1178 = vsel %vm1158, %v1171, 0.0
        %1179 = vadd.xlane.f32.xlu0 %v1178
        %v1180 = vpop.xlane.xlu0 %1179
        %v1181 = vmul.f32 %v1174, %v1162
        %v1182 = vmul.f32 %v1177, %v1162
        %v1183 = vmul.f32 %v1180, %v1162
        %v1184 = vadd.f32 %v1181, 1e-05
        %v1185 = vadd.f32 %v1182, 1e-05
        %v1186 = vadd.f32 %v1183, 1e-05
        %v1187 = vrsqrt.pop %v1184
        %v1188 = vrsqrt.pop %v1185
        %v1189 = vrsqrt.pop %v1186
        %v1190 = vmul.f32 %v1166, %v1187
        %v1191 = vmul.f32 %v1167, %v1188
        %v1192 = vmul.f32 %v1168, %v1189
        %v1193 = vlaneseq
        %v1194 = vshrl.u32 %v1193, 7
        %v1195 = vsub.s32 0, %v1194
        %v1196 = vrot.slane %v1150, %v1195
        %v1197 = vmul.f32 %v1190, %v1196
        %v1198 = vmul.f32 %v1191, %v1196
        %v1199 = vmul.f32 %v1192, %v1196
        %v1200 = vlaneseq
        %v1201 = vshrl.u32 %v1200, 7
        %v1202 = vsub.s32 0, %v1201
        %v1203 = vrot.slane %v1151, %v1202
        %v1204 = vadd.f32 %v1197, %v1203
        %v1205 = vadd.f32 %v1198, %v1203
        %v1206 = vadd.f32 %v1199, %v1203
        %v1207 = vld [vmem:[#allocation15] sm:$0xff]
        %v1208 = vld [vmem:[#allocation15 + $0x8] sm:$0xff]
        %v1209 = vld [vmem:[#allocation15 + $0x10] sm:$0xff]
        %v1210 = vld [vmem:[#allocation15 + $0x18] sm:$0xff]
        %v1211 = vld [vmem:[%s11] sm:$0x1]
        %v1213 = vlaneseq
        %v1214 = vshrl.u32 %v1213, 7
        %v1215 = vsub.s32 0, %v1214
        %v1216 = vrot.slane %v1211, %v1215
        %v1219 = vsel %vm882, %v1204, 0
        %v1222 = vsel %vm882, %v1205, 0
        %v1225 = vsel %vm882, %v1206, 0
        %1227 = vmatprep.subr.mxu0 0.0
        %1228 = vmatpush1.msra.mxu0 %v1207
        %1229 = vmatprep.subr.mxu0 0.0
        %1230 = vmatpush1.msra.mxu0 %v1208
        %1231 = vmatprep.subr.mxu0 0.0
        %1232 = vmatpush1.msra.mxu0 %v1209
        %1233 = vmatprep.subr.mxu0 0.0
        %1234 = vmatpush1.msra.mxu0 %v1210
        %1235 = vmatprep.subr.mxu0 0.0
        %1236 = vmatpush1.msra.mxu0 0.0
        %1237 = vmatprep.subr.mxu0 0.0
        %1238 = vmatpush1.msra.mxu0 0.0
        %1239 = vmatprep.subr.mxu0 0.0
        %1240 = vmatpush1.msra.mxu0 0.0
        %1241 = vmatprep.subr.mxu0 0.0
        %1242 = vmatpush1.msra.mxu0 0.0
        %1243 = vmatprep.subr.mxu0 0.0
        %1244 = vmatpush1.msra.mxu0 0.0
        %1245 = vmatprep.subr.mxu0 0.0
        %1246 = vmatpush1.msra.mxu0 0.0
        %1247 = vmatprep.subr.mxu0 0.0
        %1248 = vmatpush1.msra.mxu0 0.0
        %1249 = vmatprep.subr.mxu0 0.0
        %1250 = vmatpush1.msra.mxu0 0.0
        %1251 = vmatprep.subr.mxu0 0.0
        %1252 = vmatpush1.msra.mxu0 0.0
        %1253 = vmatprep.subr.mxu0 0.0
        %1254 = vmatpush1.msra.mxu0 0.0
        %1255 = vmatprep.subr.mxu0 0.0
        %1256 = vmatpush1.msra.mxu0 0.0
        %1257 = vmatprep.subr.mxu0 0.0
        %1258 = vmatpush1.msra.mxu0 0.0
        %1259 = vmatprep.subr.mxu0 0.0
        %1260 = vmatpush1.msra.mxu0 0.0
        %1261 = vmatprep.subr.mxu0 0.0
        %1262 = vmatpush1.msra.mxu0 0.0
        %1263 = vmatprep.subr.mxu0 0.0
        %1264 = vmatpush1.msra.mxu0 0.0
        %1265 = vmatprep.subr.mxu0 0.0
        %1266 = vmatpush1.msra.mxu0 0.0
        %1267 = vmatprep.subr.mxu0 0.0
        %1268 = vmatpush1.msra.mxu0 0.0
        %1269 = vmatprep.subr.mxu0 0.0
        %1270 = vmatpush1.msra.mxu0 0.0
        %1271 = vmatprep.subr.mxu0 0.0
        %1272 = vmatpush1.msra.mxu0 0.0
        %1273 = vmatprep.subr.mxu0 0.0
        %1274 = vmatpush1.msra.mxu0 0.0
        %1275 = vmatprep.subr.mxu0 0.0
        %1276 = vmatpush1.msra.mxu0 0.0
        %1277 = vmatprep.subr.mxu0 0.0
        %1278 = vmatpush1.msra.mxu0 0.0
        %1279 = vmatprep.subr.mxu0 0.0
        %1280 = vmatpush1.msra.mxu0 0.0
        %1281 = vmatprep.subr.mxu0 0.0
        %1282 = vmatpush1.msra.mxu0 0.0
        %1283 = vmatprep.subr.mxu0 0.0
        %1284 = vmatpush1.msra.mxu0 0.0
        %1285 = vmatprep.subr.mxu0 0.0
        %1286 = vmatpush1.msra.mxu0 0.0
        %1287 = vmatprep.subr.mxu0 0.0
        %1288 = vmatpush1.msra.mxu0 0.0
        %1289 = vmatprep.subr.mxu0 0.0
        %1290 = vmatpush1.msra.mxu0 0.0
        %1291 = vmatprep.mubr.f32.mxu0 0.0
        %1292 = vmatmul.mubr.f32.gmra.mrb[0].mxu0 %v1219
        %v1293 = vpop.f32.mrb[0].mxu0
        %v1294 = vadd.f32 %v1216, %v1293
        %v1295 = vpop.f32.mrb[0].mxu0
        %1296 = vmatprep.mubr.f32.mxu0 0.0
        %1297 = vmatmul.mubr.f32.gmra.mrb[0].mxu0 %v1222
        %v1298 = vpop.f32.mrb[0].mxu0
        %v1299 = vadd.f32 %v1216, %v1298
        %v1300 = vpop.f32.mrb[0].mxu0
        %1301 = vmatprep.mubr.f32.mxu0 0.0
        %1302 = vmatmul.mubr.f32.gmra.mrb[0].mxu0 %v1225
        %v1303 = vpop.f32.mrb[0].mxu0
        %v1304 = vadd.f32 %v1216, %v1303
        %v1305 = vpop.f32.mrb[0].mxu0
        %1306 = vdwg.mxu0
        %1310 = vrot.lane.b32.xlu0 %v1294, 96
        %v1311 = vpop.permute.xlu0 %1310
        %1312 = vrot.lane.b32.xlu0 %v1299, 96
        %v1313 = vpop.permute.xlu0 %1312
        %1314 = vrot.lane.b32.xlu0 %v1304, 96
        %v1315 = vpop.permute.xlu0 %1314
        %vm1316 = vcmask 64512
        %v1317 = vsel %vm1316, %v1294, 0
        %v1319 = vsel %vm1316, %v1299, 0
        %v1321 = vsel %vm1316, %v1304, 0
        %v1323 = vsel %vm1316, %v1311, 0
        %v1325 = vsel %vm1316, %v1313, 0
        %v1327 = vsel %vm1316, %v1315, 0
        %1329 = vmatprep.subr.mxu0 0.0
        %1330 = vmatpush1.xpose.msra.mxu0 %v1323
        %1331 = vmatprep.subr.mxu0 0.0
        %1332 = vmatpush1.xpose.msra.mxu0 %v1325
        %1333 = vmatprep.subr.mxu0 0.0
        %1334 = vmatpush1.xpose.msra.mxu0 %v1327
        %1335 = vmatprep.subr.mxu0 0.0
        %1336 = vmatpush1.xpose.msra.mxu0 0.0
        %1337 = vmatprep.subr.mxu0 0.0
        %1338 = vmatpush1.xpose.msra.mxu0 0.0
        %1339 = vmatprep.subr.mxu0 0.0
        %1340 = vmatpush1.xpose.msra.mxu0 0.0
        %1341 = vmatprep.subr.mxu0 0.0
        %1342 = vmatpush1.xpose.msra.mxu0 0.0
        %1343 = vmatprep.subr.mxu0 0.0
        %1344 = vmatpush1.xpose.msra.mxu0 0.0
        %1345 = vmatprep.subr.mxu0 0.0
        %1346 = vmatpush1.xpose.msra.mxu0 0.0
        %1347 = vmatprep.subr.mxu0 0.0
        %1348 = vmatpush1.xpose.msra.mxu0 0.0
        %1349 = vmatprep.subr.mxu0 0.0
        %1350 = vmatpush1.xpose.msra.mxu0 0.0
        %1351 = vmatprep.subr.mxu0 0.0
        %1352 = vmatpush1.xpose.msra.mxu0 0.0
        %1353 = vmatprep.subr.mxu0 0.0
        %1354 = vmatpush1.xpose.msra.mxu0 0.0
        %1355 = vmatprep.subr.mxu0 0.0
        %1356 = vmatpush1.xpose.msra.mxu0 0.0
        %1357 = vmatprep.subr.mxu0 0.0
        %1358 = vmatpush1.xpose.msra.mxu0 0.0
        %1359 = vmatprep.subr.mxu0 0.0
        %1360 = vmatpush1.xpose.msra.mxu0 0.0
        %1361 = vmatprep.subr.mxu0 0.0
        %1362 = vmatpush1.xpose.msra.mxu0 0.0
        %1363 = vmatprep.subr.mxu0 0.0
        %1364 = vmatpush1.xpose.msra.mxu0 0.0
        %1365 = vmatprep.subr.mxu0 0.0
        %1366 = vmatpush1.xpose.msra.mxu0 0.0
        %1367 = vmatprep.subr.mxu0 0.0
        %1368 = vmatpush1.xpose.msra.mxu0 0.0
        %1369 = vmatprep.subr.mxu0 0.0
        %1370 = vmatpush1.xpose.msra.mxu0 0.0
        %1371 = vmatprep.subr.mxu0 0.0
        %1372 = vmatpush1.xpose.msra.mxu0 0.0
        %1373 = vmatprep.subr.mxu0 0.0
        %1374 = vmatpush1.xpose.msra.mxu0 0.0
        %1375 = vmatprep.subr.mxu0 0.0
        %1376 = vmatpush1.xpose.msra.mxu0 0.0
        %1377 = vmatprep.subr.mxu0 0.0
        %1378 = vmatpush1.xpose.msra.mxu0 0.0
        %1379 = vmatprep.subr.mxu0 0.0
        %1380 = vmatpush1.xpose.msra.mxu0 0.0
        %1381 = vmatprep.subr.mxu0 0.0
        %1382 = vmatpush1.xpose.msra.mxu0 0.0
        %1383 = vmatprep.subr.mxu0 0.0
        %1384 = vmatpush1.xpose.msra.mxu0 0.0
        %1385 = vmatprep.subr.mxu0 0.0
        %1386 = vmatpush1.xpose.msra.mxu0 0.0
        %1387 = vmatprep.subr.mxu0 0.0
        %1388 = vmatpush1.xpose.msra.mxu0 0.0
        %1389 = vmatprep.subr.mxu0 0.0
        %1390 = vmatpush1.xpose.msra.mxu0 0.0
        %1391 = vmatprep.subr.mxu0 0.0
        %1392 = vmatpush1.xpose.msra.mxu0 0.0
        %1393 = vmatprep.mubr.f32.mxu0 0.0
        %1394 = vmatmul.mubr.f32.gmra.mrb[0].mxu0 %v1317
        %v1395 = vpop.f32.mrb[0].mxu0
        %v1396 = vadd.f32 0.0, %v1395
        %v1397 = vpop.f32.mrb[0].mxu0
        %1398 = vmatprep.mubr.f32.mxu0 0.0
        %1399 = vmatmul.mubr.f32.gmra.mrb[0].mxu0 %v1319
        %v1400 = vpop.f32.mrb[0].mxu0
        %v1401 = vadd.f32 0.0, %v1400
        %v1402 = vpop.f32.mrb[0].mxu0
        %1403 = vmatprep.mubr.f32.mxu0 0.0
        %1404 = vmatmul.mubr.f32.gmra.mrb[0].mxu0 %v1321
        %v1405 = vpop.f32.mrb[0].mxu0
        %v1406 = vadd.f32 0.0, %v1405
        %v1407 = vpop.f32.mrb[0].mxu0
        %1408 = vdwg.mxu0
        %v1409 = vmul.f32 %v1396, 0.35355338
        %v1410 = vmul.f32 %v1401, 0.35355338
        %v1411 = vmul.f32 %v1406, 0.35355338
        %v1412 = vsel %vm1147, %v1409, -1e+09
        %v1413 = vsel %vm1148, %v1410, -1e+09
        %v1414 = vsel %vm1149, %v1411, -1e+09
        %vm1415 = vcmask 146432
        %v1416 = vsel %vm1415, %v1412, -inf
        %1417 = vmax.xlane.f32.xlu0 %v1416
        %v1418 = vpop.xlane.xlu0 %1417
        %v1419 = vsel %vm1415, %v1413, -inf
        %1420 = vmax.xlane.f32.xlu0 %v1419
        %v1421 = vpop.xlane.xlu0 %1420
        %vm1422 = vcmask 140288
        %v1423 = vsel %vm1422, %v1414, -inf
        %1424 = vmax.xlane.f32.xlu0 %v1423
        %v1425 = vpop.xlane.xlu0 %1424
        %v1426 = vsub.f32 %v1412, %v1418
        %v1427 = vsub.f32 %v1413, %v1421
        %v1428 = vsub.f32 %v1414, %v1425
        %v1429 = vmul.f32 %v1426, 1.442695
        %v1430 = vpow.pop %v1429
        %v1431 = vmul.f32 %v1427, 1.442695
        %v1432 = vpow.pop %v1431
        %v1433 = vmul.f32 %v1428, 1.442695
        %v1434 = vpow.pop %v1433
        %v1435 = vsel %vm1415, %v1430, 0.0
        %1436 = vadd.xlane.f32.xlu0 %v1435
        %v1437 = vpop.xlane.xlu0 %1436
        %v1438 = vsel %vm1415, %v1432, 0.0
        %1439 = vadd.xlane.f32.xlu0 %v1438
        %v1440 = vpop.xlane.xlu0 %1439
        %v1441 = vsel %vm1422, %v1434, 0.0
        %1442 = vadd.xlane.f32.xlu0 %v1441
        %v1443 = vpop.xlane.xlu0 %1442
        %v1444 = vrcp.pop %v1437
        %v1445 = vmul.f32 %v1430, %v1444
        %v1446 = vrcp.pop %v1440
        %v1447 = vmul.f32 %v1432, %v1446
        %v1448 = vrcp.pop %v1443
        %v1449 = vmul.f32 %v1434, %v1448
        %1450 = vrot.lane.b32.xlu0 %v1294, 64
        %v1451 = vpop.permute.xlu0 %1450
        %1452 = vrot.lane.b32.xlu0 %v1299, 64
        %v1453 = vpop.permute.xlu0 %1452
        %1454 = vrot.lane.b32.xlu0 %v1304, 64
        %v1455 = vpop.permute.xlu0 %1454
        %v1459 = vsel %vm1415, %v1445, 0
        %v1462 = vsel %vm1415, %v1447, 0
        %v1465 = vsel %vm1415, %v1449, 0
        %v1467 = vsel %vm1112, %v1455, 0
        %1469 = vmatprep.subr.mxu0 0.0
        %1470 = vmatpush1.msra.mxu0 %v1451
        %1471 = vmatprep.subr.mxu0 0.0
        %1472 = vmatpush1.msra.mxu0 %v1453
        %1473 = vmatprep.subr.mxu0 0.0
        %1474 = vmatpush1.msra.mxu0 %v1467
        %1475 = vmatprep.subr.mxu0 0.0
        %1476 = vmatpush1.msra.mxu0 0.0
        %1477 = vmatprep.subr.mxu0 0.0
        %1478 = vmatpush1.msra.mxu0 0.0
        %1479 = vmatprep.subr.mxu0 0.0
        %1480 = vmatpush1.msra.mxu0 0.0
        %1481 = vmatprep.subr.mxu0 0.0
        %1482 = vmatpush1.msra.mxu0 0.0
        %1483 = vmatprep.subr.mxu0 0.0
        %1484 = vmatpush1.msra.mxu0 0.0
        %1485 = vmatprep.subr.mxu0 0.0
        %1486 = vmatpush1.msra.mxu0 0.0
        %1487 = vmatprep.subr.mxu0 0.0
        %1488 = vmatpush1.msra.mxu0 0.0
        %1489 = vmatprep.subr.mxu0 0.0
        %1490 = vmatpush1.msra.mxu0 0.0
        %1491 = vmatprep.subr.mxu0 0.0
        %1492 = vmatpush1.msra.mxu0 0.0
        %1493 = vmatprep.subr.mxu0 0.0
        %1494 = vmatpush1.msra.mxu0 0.0
        %1495 = vmatprep.subr.mxu0 0.0
        %1496 = vmatpush1.msra.mxu0 0.0
        %1497 = vmatprep.subr.mxu0 0.0
        %1498 = vmatpush1.msra.mxu0 0.0
        %1499 = vmatprep.subr.mxu0 0.0
        %1500 = vmatpush1.msra.mxu0 0.0
        %1501 = vmatprep.subr.mxu0 0.0
        %1502 = vmatpush1.msra.mxu0 0.0
        %1503 = vmatprep.subr.mxu0 0.0
        %1504 = vmatpush1.msra.mxu0 0.0
        %1505 = vmatprep.subr.mxu0 0.0
        %1506 = vmatpush1.msra.mxu0 0.0
        %1507 = vmatprep.subr.mxu0 0.0
        %1508 = vmatpush1.msra.mxu0 0.0
        %1509 = vmatprep.subr.mxu0 0.0
        %1510 = vmatpush1.msra.mxu0 0.0
        %1511 = vmatprep.subr.mxu0 0.0
        %1512 = vmatpush1.msra.mxu0 0.0
        %1513 = vmatprep.subr.mxu0 0.0
        %1514 = vmatpush1.msra.mxu0 0.0
        %1515 = vmatprep.subr.mxu0 0.0
        %1516 = vmatpush1.msra.mxu0 0.0
        %1517 = vmatprep.subr.mxu0 0.0
        %1518 = vmatpush1.msra.mxu0 0.0
        %1519 = vmatprep.subr.mxu0 0.0
        %1520 = vmatpush1.msra.mxu0 0.0
        %1521 = vmatprep.subr.mxu0 0.0
        %1522 = vmatpush1.msra.mxu0 0.0
        %1523 = vmatprep.subr.mxu0 0.0
        %1524 = vmatpush1.msra.mxu0 0.0
        %1525 = vmatprep.subr.mxu0 0.0
        %1526 = vmatpush1.msra.mxu0 0.0
        %1527 = vmatprep.subr.mxu0 0.0
        %1528 = vmatpush1.msra.mxu0 0.0
        %1529 = vmatprep.subr.mxu0 0.0
        %1530 = vmatpush1.msra.mxu0 0.0
        %1531 = vmatprep.subr.mxu0 0.0
        %1532 = vmatpush1.msra.mxu0 0.0
        %1533 = vmatprep.mubr.f32.mxu0 0.0
        %1534 = vmatmul.mubr.f32.gmra.mrb[0].mxu0 %v1459
        %v1535 = vpop.f32.mrb[0].mxu0
        %v1536 = vadd.f32 0.0, %v1535
        %v1537 = vpop.f32.mrb[0].mxu0
        %1538 = vmatprep.mubr.f32.mxu0 0.0
        %1539 = vmatmul.mubr.f32.gmra.mrb[0].mxu0 %v1462
        %v1540 = vpop.f32.mrb[0].mxu0
        %v1541 = vadd.f32 0.0, %v1540
        %v1542 = vpop.f32.mrb[0].mxu0
        %1543 = vmatprep.mubr.f32.mxu0 0.0
        %1544 = vmatmul.mubr.f32.gmra.mrb[0].mxu0 %v1465
        %v1545 = vpop.f32.mrb[0].mxu0
        %v1546 = vadd.f32 0.0, %v1545
        %v1547 = vpop.f32.mrb[0].mxu0
        %1548 = vdwg.mxu0
        %1549 = vrot.lane.b32.xlu0 %v1294, 120
        %v1550 = vpop.permute.xlu0 %1549
        %1551 = vrot.lane.b32.xlu0 %v1299, 120
        %v1552 = vpop.permute.xlu0 %1551
        %1553 = vrot.lane.b32.xlu0 %v1304, 120
        %v1554 = vpop.permute.xlu0 %1553
        %1555 = vrot.lane.b32.xlu0 %v1294, 88
        %v1556 = vpop.permute.xlu0 %1555
        %1557 = vrot.lane.b32.xlu0 %v1299, 88
        %v1558 = vpop.permute.xlu0 %1557
        %1559 = vrot.lane.b32.xlu0 %v1304, 88
        %v1560 = vpop.permute.xlu0 %1559
        %v1561 = vsel %vm1316, %v1550, 0
        %v1563 = vsel %vm1316, %v1552, 0
        %v1565 = vsel %vm1316, %v1554, 0
        %v1567 = vsel %vm1316, %v1556, 0
        %v1569 = vsel %vm1316, %v1558, 0
        %v1571 = vsel %vm1316, %v1560, 0
        %1573 = vmatprep.subr.mxu0 0.0
        %1574 = vmatpush1.xpose.msra.mxu0 %v1567
        %1575 = vmatprep.subr.mxu0 0.0
        %1576 = vmatpush1.xpose.msra.mxu0 %v1569
        %1577 = vmatprep.subr.mxu0 0.0
        %1578 = vmatpush1.xpose.msra.mxu0 %v1571
        %1579 = vmatprep.subr.mxu0 0.0
        %1580 = vmatpush1.xpose.msra.mxu0 0.0
        %1581 = vmatprep.subr.mxu0 0.0
        %1582 = vmatpush1.xpose.msra.mxu0 0.0
        %1583 = vmatprep.subr.mxu0 0.0
        %1584 = vmatpush1.xpose.msra.mxu0 0.0
        %1585 = vmatprep.subr.mxu0 0.0
        %1586 = vmatpush1.xpose.msra.mxu0 0.0
        %1587 = vmatprep.subr.mxu0 0.0
        %1588 = vmatpush1.xpose.msra.mxu0 0.0
        %1589 = vmatprep.subr.mxu0 0.0
        %1590 = vmatpush1.xpose.msra.mxu0 0.0
        %1591 = vmatprep.subr.mxu0 0.0
        %1592 = vmatpush1.xpose.msra.mxu0 0.0
        %1593 = vmatprep.subr.mxu0 0.0
        %1594 = vmatpush1.xpose.msra.mxu0 0.0
        %1595 = vmatprep.subr.mxu0 0.0
        %1596 = vmatpush1.xpose.msra.mxu0 0.0
        %1597 = vmatprep.subr.mxu0 0.0
        %1598 = vmatpush1.xpose.msra.mxu0 0.0
        %1599 = vmatprep.subr.mxu0 0.0
        %1600 = vmatpush1.xpose.msra.mxu0 0.0
        %1601 = vmatprep.subr.mxu0 0.0
        %1602 = vmatpush1.xpose.msra.mxu0 0.0
        %1603 = vmatprep.subr.mxu0 0.0
        %1604 = vmatpush1.xpose.msra.mxu0 0.0
        %1605 = vmatprep.subr.mxu0 0.0
        %1606 = vmatpush1.xpose.msra.mxu0 0.0
        %1607 = vmatprep.subr.mxu0 0.0
        %1608 = vmatpush1.xpose.msra.mxu0 0.0
        %1609 = vmatprep.subr.mxu0 0.0
        %1610 = vmatpush1.xpose.msra.mxu0 0.0
        %1611 = vmatprep.subr.mxu0 0.0
        %1612 = vmatpush1.xpose.msra.mxu0 0.0
        %1613 = vmatprep.subr.mxu0 0.0
        %1614 = vmatpush1.xpose.msra.mxu0 0.0
        %1615 = vmatprep.subr.mxu0 0.0
        %1616 = vmatpush1.xpose.msra.mxu0 0.0
        %1617 = vmatprep.subr.mxu0 0.0
        %1618 = vmatpush1.xpose.msra.mxu0 0.0
        %1619 = vmatprep.subr.mxu0 0.0
        %1620 = vmatpush1.xpose.msra.mxu0 0.0
        %1621 = vmatprep.subr.mxu0 0.0
        %1622 = vmatpush1.xpose.msra.mxu0 0.0
        %1623 = vmatprep.subr.mxu0 0.0
        %1624 = vmatpush1.xpose.msra.mxu0 0.0
        %1625 = vmatprep.subr.mxu0 0.0
        %1626 = vmatpush1.xpose.msra.mxu0 0.0
        %1627 = vmatprep.subr.mxu0 0.0
        %1628 = vmatpush1.xpose.msra.mxu0 0.0
        %1629 = vmatprep.subr.mxu0 0.0
        %1630 = vmatpush1.xpose.msra.mxu0 0.0
        %1631 = vmatprep.subr.mxu0 0.0
        %1632 = vmatpush1.xpose.msra.mxu0 0.0
        %1633 = vmatprep.subr.mxu0 0.0
        %1634 = vmatpush1.xpose.msra.mxu0 0.0
        %1635 = vmatprep.subr.mxu0 0.0
        %1636 = vmatpush1.xpose.msra.mxu0 0.0
        %1637 = vmatprep.mubr.f32.mxu0 0.0
        %1638 = vmatmul.mubr.f32.gmra.mrb[0].mxu0 %v1561
        %v1639 = vpop.f32.mrb[0].mxu0
        %v1640 = vadd.f32 0.0, %v1639
        %v1641 = vpop.f32.mrb[0].mxu0
        %1642 = vmatprep.mubr.f32.mxu0 0.0
        %1643 = vmatmul.mubr.f32.gmra.mrb[0].mxu0 %v1563
        %v1644 = vpop.f32.mrb[0].mxu0
        %v1645 = vadd.f32 0.0, %v1644
        %v1646 = vpop.f32.mrb[0].mxu0
        %1647 = vmatprep.mubr.f32.mxu0 0.0
        %1648 = vmatmul.mubr.f32.gmra.mrb[0].mxu0 %v1565
        %v1649 = vpop.f32.mrb[0].mxu0
        %v1650 = vadd.f32 0.0, %v1649
        %v1651 = vpop.f32.mrb[0].mxu0
        %1652 = vdwg.mxu0
        %v1653 = vmul.f32 %v1640, 0.35355338
        %v1654 = vmul.f32 %v1645, 0.35355338
        %v1655 = vmul.f32 %v1650, 0.35355338
        %v1656 = vsel %vm1147, %v1653, -1e+09
        %v1657 = vsel %vm1148, %v1654, -1e+09
        %v1658 = vsel %vm1149, %v1655, -1e+09
        %v1659 = vsel %vm1415, %v1656, -inf
        %1660 = vmax.xlane.f32.xlu0 %v1659
        %v1661 = vpop.xlane.xlu0 %1660
        %v1662 = vsel %vm1415, %v1657, -inf
        %1663 = vmax.xlane.f32.xlu0 %v1662
        %v1664 = vpop.xlane.xlu0 %1663
        %v1665 = vsel %vm1422, %v1658, -inf
        %1666 = vmax.xlane.f32.xlu0 %v1665
        %v1667 = vpop.xlane.xlu0 %1666
        %v1668 = vsub.f32 %v1656, %v1661
        %v1669 = vsub.f32 %v1657, %v1664
        %v1670 = vsub.f32 %v1658, %v1667
        %v1671 = vmul.f32 %v1668, 1.442695
        %v1672 = vpow.pop %v1671
        %v1673 = vmul.f32 %v1669, 1.442695
        %v1674 = vpow.pop %v1673
        %v1675 = vmul.f32 %v1670, 1.442695
        %v1676 = vpow.pop %v1675
        %v1677 = vsel %vm1415, %v1672, 0.0
        %1678 = vadd.xlane.f32.xlu0 %v1677
        %v1679 = vpop.xlane.xlu0 %1678
        %v1680 = vsel %vm1415, %v1674, 0.0
        %1681 = vadd.xlane.f32.xlu0 %v1680
        %v1682 = vpop.xlane.xlu0 %1681
        %v1683 = vsel %vm1422, %v1676, 0.0
        %1684 = vadd.xlane.f32.xlu0 %v1683
        %v1685 = vpop.xlane.xlu0 %1684
        %v1686 = vrcp.pop %v1679
        %v1687 = vmul.f32 %v1672, %v1686
        %v1688 = vrcp.pop %v1682
        %v1689 = vmul.f32 %v1674, %v1688
        %v1690 = vrcp.pop %v1685
        %v1691 = vmul.f32 %v1676, %v1690
        %1692 = vrot.lane.b32.xlu0 %v1294, 56
        %v1693 = vpop.permute.xlu0 %1692
        %1694 = vrot.lane.b32.xlu0 %v1299, 56
        %v1695 = vpop.permute.xlu0 %1694
        %1696 = vrot.lane.b32.xlu0 %v1304, 56
        %v1697 = vpop.permute.xlu0 %1696
        %v1701 = vsel %vm1415, %v1687, 0
        %v1704 = vsel %vm1415, %v1689, 0
        %v1707 = vsel %vm1415, %v1691, 0
        %v1709 = vsel %vm1112, %v1697, 0
        %1711 = vmatprep.subr.mxu0 0.0
        %1712 = vmatpush1.msra.mxu0 %v1693
        %1713 = vmatprep.subr.mxu0 0.0
        %1714 = vmatpush1.msra.mxu0 %v1695
        %1715 = vmatprep.subr.mxu0 0.0
        %1716 = vmatpush1.msra.mxu0 %v1709
        %1717 = vmatprep.subr.mxu0 0.0
        %1718 = vmatpush1.msra.mxu0 0.0
        %1719 = vmatprep.subr.mxu0 0.0
        %1720 = vmatpush1.msra.mxu0 0.0
        %1721 = vmatprep.subr.mxu0 0.0
        %1722 = vmatpush1.msra.mxu0 0.0
        %1723 = vmatprep.subr.mxu0 0.0
        %1724 = vmatpush1.msra.mxu0 0.0
        %1725 = vmatprep.subr.mxu0 0.0
        %1726 = vmatpush1.msra.mxu0 0.0
        %1727 = vmatprep.subr.mxu0 0.0
        %1728 = vmatpush1.msra.mxu0 0.0
        %1729 = vmatprep.subr.mxu0 0.0
        %1730 = vmatpush1.msra.mxu0 0.0
        %1731 = vmatprep.subr.mxu0 0.0
        %1732 = vmatpush1.msra.mxu0 0.0
        %1733 = vmatprep.subr.mxu0 0.0
        %1734 = vmatpush1.msra.mxu0 0.0
        %1735 = vmatprep.subr.mxu0 0.0
        %1736 = vmatpush1.msra.mxu0 0.0
        %1737 = vmatprep.subr.mxu0 0.0
        %1738 = vmatpush1.msra.mxu0 0.0
        %1739 = vmatprep.subr.mxu0 0.0
        %1740 = vmatpush1.msra.mxu0 0.0
        %1741 = vmatprep.subr.mxu0 0.0
        %1742 = vmatpush1.msra.mxu0 0.0
        %1743 = vmatprep.subr.mxu0 0.0
        %1744 = vmatpush1.msra.mxu0 0.0
        %1745 = vmatprep.subr.mxu0 0.0
        %1746 = vmatpush1.msra.mxu0 0.0
        %1747 = vmatprep.subr.mxu0 0.0
        %1748 = vmatpush1.msra.mxu0 0.0
        %1749 = vmatprep.subr.mxu0 0.0
        %1750 = vmatpush1.msra.mxu0 0.0
        %1751 = vmatprep.subr.mxu0 0.0
        %1752 = vmatpush1.msra.mxu0 0.0
        %1753 = vmatprep.subr.mxu0 0.0
        %1754 = vmatpush1.msra.mxu0 0.0
        %1755 = vmatprep.subr.mxu0 0.0
        %1756 = vmatpush1.msra.mxu0 0.0
        %1757 = vmatprep.subr.mxu0 0.0
        %1758 = vmatpush1.msra.mxu0 0.0
        %1759 = vmatprep.subr.mxu0 0.0
        %1760 = vmatpush1.msra.mxu0 0.0
        %1761 = vmatprep.subr.mxu0 0.0
        %1762 = vmatpush1.msra.mxu0 0.0
        %1763 = vmatprep.subr.mxu0 0.0
        %1764 = vmatpush1.msra.mxu0 0.0
        %1765 = vmatprep.subr.mxu0 0.0
        %1766 = vmatpush1.msra.mxu0 0.0
        %1767 = vmatprep.subr.mxu0 0.0
        %1768 = vmatpush1.msra.mxu0 0.0
        %1769 = vmatprep.subr.mxu0 0.0
        %1770 = vmatpush1.msra.mxu0 0.0
        %1771 = vmatprep.subr.mxu0 0.0
        %1772 = vmatpush1.msra.mxu0 0.0
        %1773 = vmatprep.subr.mxu0 0.0
        %1774 = vmatpush1.msra.mxu0 0.0
        %1775 = vmatprep.mubr.f32.mxu0 0.0
        %1776 = vmatmul.mubr.f32.gmra.mrb[0].mxu0 %v1701
        %v1777 = vpop.f32.mrb[0].mxu0
        %v1778 = vadd.f32 0.0, %v1777
        %v1779 = vpop.f32.mrb[0].mxu0
        %1780 = vmatprep.mubr.f32.mxu0 0.0
        %1781 = vmatmul.mubr.f32.gmra.mrb[0].mxu0 %v1704
        %v1782 = vpop.f32.mrb[0].mxu0
        %v1783 = vadd.f32 0.0, %v1782
        %v1784 = vpop.f32.mrb[0].mxu0
        %1785 = vmatprep.mubr.f32.mxu0 0.0
        %1786 = vmatmul.mubr.f32.gmra.mrb[0].mxu0 %v1707
        %v1787 = vpop.f32.mrb[0].mxu0
        %v1788 = vadd.f32 0.0, %v1787
        %v1789 = vpop.f32.mrb[0].mxu0
        %1790 = vdwg.mxu0
        %1791 = vrot.lane.b32.xlu0 %v1294, 112
        %v1792 = vpop.permute.xlu0 %1791
        %1793 = vrot.lane.b32.xlu0 %v1299, 112
        %v1794 = vpop.permute.xlu0 %1793
        %1795 = vrot.lane.b32.xlu0 %v1304, 112
        %v1796 = vpop.permute.xlu0 %1795
        %1797 = vrot.lane.b32.xlu0 %v1294, 80
        %v1798 = vpop.permute.xlu0 %1797
        %1799 = vrot.lane.b32.xlu0 %v1299, 80
        %v1800 = vpop.permute.xlu0 %1799
        %1801 = vrot.lane.b32.xlu0 %v1304, 80
        %v1802 = vpop.permute.xlu0 %1801
        %v1803 = vsel %vm1316, %v1792, 0
        %v1805 = vsel %vm1316, %v1794, 0
        %v1807 = vsel %vm1316, %v1796, 0
        %v1809 = vsel %vm1316, %v1798, 0
        %v1811 = vsel %vm1316, %v1800, 0
        %v1813 = vsel %vm1316, %v1802, 0
        %1815 = vmatprep.subr.mxu0 0.0
        %1816 = vmatpush1.xpose.msra.mxu0 %v1809
        %1817 = vmatprep.subr.mxu0 0.0
        %1818 = vmatpush1.xpose.msra.mxu0 %v1811
        %1819 = vmatprep.subr.mxu0 0.0
        %1820 = vmatpush1.xpose.msra.mxu0 %v1813
        %1821 = vmatprep.subr.mxu0 0.0
        %1822 = vmatpush1.xpose.msra.mxu0 0.0
        %1823 = vmatprep.subr.mxu0 0.0
        %1824 = vmatpush1.xpose.msra.mxu0 0.0
        %1825 = vmatprep.subr.mxu0 0.0
        %1826 = vmatpush1.xpose.msra.mxu0 0.0
        %1827 = vmatprep.subr.mxu0 0.0
        %1828 = vmatpush1.xpose.msra.mxu0 0.0
        %1829 = vmatprep.subr.mxu0 0.0
        %1830 = vmatpush1.xpose.msra.mxu0 0.0
        %1831 = vmatprep.subr.mxu0 0.0
        %1832 = vmatpush1.xpose.msra.mxu0 0.0
        %1833 = vmatprep.subr.mxu0 0.0
        %1834 = vmatpush1.xpose.msra.mxu0 0.0
        %1835 = vmatprep.subr.mxu0 0.0
        %1836 = vmatpush1.xpose.msra.mxu0 0.0
        %1837 = vmatprep.subr.mxu0 0.0
        %1838 = vmatpush1.xpose.msra.mxu0 0.0
        %1839 = vmatprep.subr.mxu0 0.0
        %1840 = vmatpush1.xpose.msra.mxu0 0.0
        %1841 = vmatprep.subr.mxu0 0.0
        %1842 = vmatpush1.xpose.msra.mxu0 0.0
        %1843 = vmatprep.subr.mxu0 0.0
        %1844 = vmatpush1.xpose.msra.mxu0 0.0
        %1845 = vmatprep.subr.mxu0 0.0
        %1846 = vmatpush1.xpose.msra.mxu0 0.0
        %1847 = vmatprep.subr.mxu0 0.0
        %1848 = vmatpush1.xpose.msra.mxu0 0.0
        %1849 = vmatprep.subr.mxu0 0.0
        %1850 = vmatpush1.xpose.msra.mxu0 0.0
        %1851 = vmatprep.subr.mxu0 0.0
        %1852 = vmatpush1.xpose.msra.mxu0 0.0
        %1853 = vmatprep.subr.mxu0 0.0
        %1854 = vmatpush1.xpose.msra.mxu0 0.0
        %1855 = vmatprep.subr.mxu0 0.0
        %1856 = vmatpush1.xpose.msra.mxu0 0.0
        %1857 = vmatprep.subr.mxu0 0.0
        %1858 = vmatpush1.xpose.msra.mxu0 0.0
        %1859 = vmatprep.subr.mxu0 0.0
        %1860 = vmatpush1.xpose.msra.mxu0 0.0
        %1861 = vmatprep.subr.mxu0 0.0
        %1862 = vmatpush1.xpose.msra.mxu0 0.0
        %1863 = vmatprep.subr.mxu0 0.0
        %1864 = vmatpush1.xpose.msra.mxu0 0.0
        %1865 = vmatprep.subr.mxu0 0.0
        %1866 = vmatpush1.xpose.msra.mxu0 0.0
        %1867 = vmatprep.subr.mxu0 0.0
        %1868 = vmatpush1.xpose.msra.mxu0 0.0
        %1869 = vmatprep.subr.mxu0 0.0
        %1870 = vmatpush1.xpose.msra.mxu0 0.0
        %1871 = vmatprep.subr.mxu0 0.0
        %1872 = vmatpush1.xpose.msra.mxu0 0.0
        %1873 = vmatprep.subr.mxu0 0.0
        %1874 = vmatpush1.xpose.msra.mxu0 0.0
        %1875 = vmatprep.subr.mxu0 0.0
        %1876 = vmatpush1.xpose.msra.mxu0 0.0
        %1877 = vmatprep.subr.mxu0 0.0
        %1878 = vmatpush1.xpose.msra.mxu0 0.0
        %1879 = vmatprep.mubr.f32.mxu0 0.0
        %1880 = vmatmul.mubr.f32.gmra.mrb[0].mxu0 %v1803
        %v1881 = vpop.f32.mrb[0].mxu0
        %v1882 = vadd.f32 0.0, %v1881
        %v1883 = vpop.f32.mrb[0].mxu0
        %1884 = vmatprep.mubr.f32.mxu0 0.0
        %1885 = vmatmul.mubr.f32.gmra.mrb[0].mxu0 %v1805
        %v1886 = vpop.f32.mrb[0].mxu0
        %v1887 = vadd.f32 0.0, %v1886
        %v1888 = vpop.f32.mrb[0].mxu0
        %1889 = vmatprep.mubr.f32.mxu0 0.0
        %1890 = vmatmul.mubr.f32.gmra.mrb[0].mxu0 %v1807
        %v1891 = vpop.f32.mrb[0].mxu0
        %v1892 = vadd.f32 0.0, %v1891
        %v1893 = vpop.f32.mrb[0].mxu0
        %1894 = vdwg.mxu0
        %v1895 = vmul.f32 %v1882, 0.35355338
        %v1896 = vmul.f32 %v1887, 0.35355338
        %v1897 = vmul.f32 %v1892, 0.35355338
        %v1898 = vsel %vm1147, %v1895, -1e+09
        %v1899 = vsel %vm1148, %v1896, -1e+09
        %v1900 = vsel %vm1149, %v1897, -1e+09
        %v1901 = vsel %vm1415, %v1898, -inf
        %1902 = vmax.xlane.f32.xlu0 %v1901
        %v1903 = vpop.xlane.xlu0 %1902
        %v1904 = vsel %vm1415, %v1899, -inf
        %1905 = vmax.xlane.f32.xlu0 %v1904
        %v1906 = vpop.xlane.xlu0 %1905
        %v1907 = vsel %vm1422, %v1900, -inf
        %1908 = vmax.xlane.f32.xlu0 %v1907
        %v1909 = vpop.xlane.xlu0 %1908
        %v1910 = vsub.f32 %v1898, %v1903
        %v1911 = vsub.f32 %v1899, %v1906
        %v1912 = vsub.f32 %v1900, %v1909
        %v1913 = vmul.f32 %v1910, 1.442695
        %v1914 = vpow.pop %v1913
        %v1915 = vmul.f32 %v1911, 1.442695
        %v1916 = vpow.pop %v1915
        %v1917 = vmul.f32 %v1912, 1.442695
        %v1918 = vpow.pop %v1917
        %v1919 = vsel %vm1415, %v1914, 0.0
        %1920 = vadd.xlane.f32.xlu0 %v1919
        %v1921 = vpop.xlane.xlu0 %1920
        %v1922 = vsel %vm1415, %v1916, 0.0
        %1923 = vadd.xlane.f32.xlu0 %v1922
        %v1924 = vpop.xlane.xlu0 %1923
        %v1925 = vsel %vm1422, %v1918, 0.0
        %1926 = vadd.xlane.f32.xlu0 %v1925
        %v1927 = vpop.xlane.xlu0 %1926
        %v1928 = vrcp.pop %v1921
        %v1929 = vmul.f32 %v1914, %v1928
        %v1930 = vrcp.pop %v1924
        %v1931 = vmul.f32 %v1916, %v1930
        %v1932 = vrcp.pop %v1927
        %v1933 = vmul.f32 %v1918, %v1932
        %1934 = vrot.lane.b32.xlu0 %v1294, 48
        %v1935 = vpop.permute.xlu0 %1934
        %1936 = vrot.lane.b32.xlu0 %v1299, 48
        %v1937 = vpop.permute.xlu0 %1936
        %1938 = vrot.lane.b32.xlu0 %v1304, 48
        %v1939 = vpop.permute.xlu0 %1938
        %v1943 = vsel %vm1415, %v1929, 0
        %v1946 = vsel %vm1415, %v1931, 0
        %v1949 = vsel %vm1415, %v1933, 0
        %v1951 = vsel %vm1112, %v1939, 0
        %1953 = vmatprep.subr.mxu0 0.0
        %1954 = vmatpush1.msra.mxu0 %v1935
        %1955 = vmatprep.subr.mxu0 0.0
        %1956 = vmatpush1.msra.mxu0 %v1937
        %1957 = vmatprep.subr.mxu0 0.0
        %1958 = vmatpush1.msra.mxu0 %v1951
        %1959 = vmatprep.subr.mxu0 0.0
        %1960 = vmatpush1.msra.mxu0 0.0
        %1961 = vmatprep.subr.mxu0 0.0
        %1962 = vmatpush1.msra.mxu0 0.0
        %1963 = vmatprep.subr.mxu0 0.0
        %1964 = vmatpush1.msra.mxu0 0.0
        %1965 = vmatprep.subr.mxu0 0.0
        %1966 = vmatpush1.msra.mxu0 0.0
        %1967 = vmatprep.subr.mxu0 0.0
        %1968 = vmatpush1.msra.mxu0 0.0
        %1969 = vmatprep.subr.mxu0 0.0
        %1970 = vmatpush1.msra.mxu0 0.0
        %1971 = vmatprep.subr.mxu0 0.0
        %1972 = vmatpush1.msra.mxu0 0.0
        %1973 = vmatprep.subr.mxu0 0.0
        %1974 = vmatpush1.msra.mxu0 0.0
        %1975 = vmatprep.subr.mxu0 0.0
        %1976 = vmatpush1.msra.mxu0 0.0
        %1977 = vmatprep.subr.mxu0 0.0
        %1978 = vmatpush1.msra.mxu0 0.0
        %1979 = vmatprep.subr.mxu0 0.0
        %1980 = vmatpush1.msra.mxu0 0.0
        %1981 = vmatprep.subr.mxu0 0.0
        %1982 = vmatpush1.msra.mxu0 0.0
        %1983 = vmatprep.subr.mxu0 0.0
        %1984 = vmatpush1.msra.mxu0 0.0
        %1985 = vmatprep.subr.mxu0 0.0
        %1986 = vmatpush1.msra.mxu0 0.0
        %1987 = vmatprep.subr.mxu0 0.0
        %1988 = vmatpush1.msra.mxu0 0.0
        %1989 = vmatprep.subr.mxu0 0.0
        %1990 = vmatpush1.msra.mxu0 0.0
        %1991 = vmatprep.subr.mxu0 0.0
        %1992 = vmatpush1.msra.mxu0 0.0
        %1993 = vmatprep.subr.mxu0 0.0
        %1994 = vmatpush1.msra.mxu0 0.0
        %1995 = vmatprep.subr.mxu0 0.0
        %1996 = vmatpush1.msra.mxu0 0.0
        %1997 = vmatprep.subr.mxu0 0.0
        %1998 = vmatpush1.msra.mxu0 0.0
        %1999 = vmatprep.subr.mxu0 0.0
        %2000 = vmatpush1.msra.mxu0 0.0
        %2001 = vmatprep.subr.mxu0 0.0
        %2002 = vmatpush1.msra.mxu0 0.0
        %2003 = vmatprep.subr.mxu0 0.0
        %2004 = vmatpush1.msra.mxu0 0.0
        %2005 = vmatprep.subr.mxu0 0.0
        %2006 = vmatpush1.msra.mxu0 0.0
        %2007 = vmatprep.subr.mxu0 0.0
        %2008 = vmatpush1.msra.mxu0 0.0
        %2009 = vmatprep.subr.mxu0 0.0
        %2010 = vmatpush1.msra.mxu0 0.0
        %2011 = vmatprep.subr.mxu0 0.0
        %2012 = vmatpush1.msra.mxu0 0.0
        %2013 = vmatprep.subr.mxu0 0.0
        %2014 = vmatpush1.msra.mxu0 0.0
        %2015 = vmatprep.subr.mxu0 0.0
        %2016 = vmatpush1.msra.mxu0 0.0
        %2017 = vmatprep.mubr.f32.mxu0 0.0
        %2018 = vmatmul.mubr.f32.gmra.mrb[0].mxu0 %v1943
        %v2019 = vpop.f32.mrb[0].mxu0
        %v2020 = vadd.f32 0.0, %v2019
        %v2021 = vpop.f32.mrb[0].mxu0
        %2022 = vmatprep.mubr.f32.mxu0 0.0
        %2023 = vmatmul.mubr.f32.gmra.mrb[0].mxu0 %v1946
        %v2024 = vpop.f32.mrb[0].mxu0
        %v2025 = vadd.f32 0.0, %v2024
        %v2026 = vpop.f32.mrb[0].mxu0
        %2027 = vmatprep.mubr.f32.mxu0 0.0
        %2028 = vmatmul.mubr.f32.gmra.mrb[0].mxu0 %v1949
        %v2029 = vpop.f32.mrb[0].mxu0
        %v2030 = vadd.f32 0.0, %v2029
        %v2031 = vpop.f32.mrb[0].mxu0
        %2032 = vdwg.mxu0
        %2033 = vrot.lane.b32.xlu0 %v1294, 104
        %v2034 = vpop.permute.xlu0 %2033
        %2035 = vrot.lane.b32.xlu0 %v1299, 104
        %v2036 = vpop.permute.xlu0 %2035
        %2037 = vrot.lane.b32.xlu0 %v1304, 104
        %v2038 = vpop.permute.xlu0 %2037
        %2039 = vrot.lane.b32.xlu0 %v1294, 72
        %v2040 = vpop.permute.xlu0 %2039
        %2041 = vrot.lane.b32.xlu0 %v1299, 72
        %v2042 = vpop.permute.xlu0 %2041
        %2043 = vrot.lane.b32.xlu0 %v1304, 72
        %v2044 = vpop.permute.xlu0 %2043
        %v2045 = vsel %vm1316, %v2034, 0
        %v2047 = vsel %vm1316, %v2036, 0
        %v2049 = vsel %vm1316, %v2038, 0
        %v2051 = vsel %vm1316, %v2040, 0
        %v2053 = vsel %vm1316, %v2042, 0
        %v2055 = vsel %vm1316, %v2044, 0
        %2057 = vmatprep.subr.mxu0 0.0
        %2058 = vmatpush1.xpose.msra.mxu0 %v2051
        %2059 = vmatprep.subr.mxu0 0.0
        %2060 = vmatpush1.xpose.msra.mxu0 %v2053
        %2061 = vmatprep.subr.mxu0 0.0
        %2062 = vmatpush1.xpose.msra.mxu0 %v2055
        %2063 = vmatprep.subr.mxu0 0.0
        %2064 = vmatpush1.xpose.msra.mxu0 0.0
        %2065 = vmatprep.subr.mxu0 0.0
        %2066 = vmatpush1.xpose.msra.mxu0 0.0
        %2067 = vmatprep.subr.mxu0 0.0
        %2068 = vmatpush1.xpose.msra.mxu0 0.0
        %2069 = vmatprep.subr.mxu0 0.0
        %2070 = vmatpush1.xpose.msra.mxu0 0.0
        %2071 = vmatprep.subr.mxu0 0.0
        %2072 = vmatpush1.xpose.msra.mxu0 0.0
        %2073 = vmatprep.subr.mxu0 0.0
        %2074 = vmatpush1.xpose.msra.mxu0 0.0
        %2075 = vmatprep.subr.mxu0 0.0
        %2076 = vmatpush1.xpose.msra.mxu0 0.0
        %2077 = vmatprep.subr.mxu0 0.0
        %2078 = vmatpush1.xpose.msra.mxu0 0.0
        %2079 = vmatprep.subr.mxu0 0.0
        %2080 = vmatpush1.xpose.msra.mxu0 0.0
        %2081 = vmatprep.subr.mxu0 0.0
        %2082 = vmatpush1.xpose.msra.mxu0 0.0
        %2083 = vmatprep.subr.mxu0 0.0
        %2084 = vmatpush1.xpose.msra.mxu0 0.0
        %2085 = vmatprep.subr.mxu0 0.0
        %2086 = vmatpush1.xpose.msra.mxu0 0.0
        %2087 = vmatprep.subr.mxu0 0.0
        %2088 = vmatpush1.xpose.msra.mxu0 0.0
        %2089 = vmatprep.subr.mxu0 0.0
        %2090 = vmatpush1.xpose.msra.mxu0 0.0
        %2091 = vmatprep.subr.mxu0 0.0
        %2092 = vmatpush1.xpose.msra.mxu0 0.0
        %2093 = vmatprep.subr.mxu0 0.0
        %2094 = vmatpush1.xpose.msra.mxu0 0.0
        %2095 = vmatprep.subr.mxu0 0.0
        %2096 = vmatpush1.xpose.msra.mxu0 0.0
        %2097 = vmatprep.subr.mxu0 0.0
        %2098 = vmatpush1.xpose.msra.mxu0 0.0
        %2099 = vmatprep.subr.mxu0 0.0
        %2100 = vmatpush1.xpose.msra.mxu0 0.0
        %2101 = vmatprep.subr.mxu0 0.0
        %2102 = vmatpush1.xpose.msra.mxu0 0.0
        %2103 = vmatprep.subr.mxu0 0.0
        %2104 = vmatpush1.xpose.msra.mxu0 0.0
        %2105 = vmatprep.subr.mxu0 0.0
        %2106 = vmatpush1.xpose.msra.mxu0 0.0
        %2107 = vmatprep.subr.mxu0 0.0
        %2108 = vmatpush1.xpose.msra.mxu0 0.0
        %2109 = vmatprep.subr.mxu0 0.0
        %2110 = vmatpush1.xpose.msra.mxu0 0.0
        %2111 = vmatprep.subr.mxu0 0.0
        %2112 = vmatpush1.xpose.msra.mxu0 0.0
        %2113 = vmatprep.subr.mxu0 0.0
        %2114 = vmatpush1.xpose.msra.mxu0 0.0
        %2115 = vmatprep.subr.mxu0 0.0
        %2116 = vmatpush1.xpose.msra.mxu0 0.0
        %2117 = vmatprep.subr.mxu0 0.0
        %2118 = vmatpush1.xpose.msra.mxu0 0.0
        %2119 = vmatprep.subr.mxu0 0.0
        %2120 = vmatpush1.xpose.msra.mxu0 0.0
        %2121 = vmatprep.mubr.f32.mxu0 0.0
        %2122 = vmatmul.mubr.f32.gmra.mrb[0].mxu0 %v2045
        %v2123 = vpop.f32.mrb[0].mxu0
        %v2124 = vadd.f32 0.0, %v2123
        %v2125 = vpop.f32.mrb[0].mxu0
        %2126 = vmatprep.mubr.f32.mxu0 0.0
        %2127 = vmatmul.mubr.f32.gmra.mrb[0].mxu0 %v2047
        %v2128 = vpop.f32.mrb[0].mxu0
        %v2129 = vadd.f32 0.0, %v2128
        %v2130 = vpop.f32.mrb[0].mxu0
        %2131 = vmatprep.mubr.f32.mxu0 0.0
        %2132 = vmatmul.mubr.f32.gmra.mrb[0].mxu0 %v2049
        %v2133 = vpop.f32.mrb[0].mxu0
        %v2134 = vadd.f32 0.0, %v2133
        %v2135 = vpop.f32.mrb[0].mxu0
        %2136 = vdwg.mxu0
        %v2137 = vmul.f32 %v2124, 0.35355338
        %v2138 = vmul.f32 %v2129, 0.35355338
        %v2139 = vmul.f32 %v2134, 0.35355338
        %v2140 = vsel %vm1147, %v2137, -1e+09
        %v2141 = vsel %vm1148, %v2138, -1e+09
        %v2142 = vsel %vm1149, %v2139, -1e+09
        %v2143 = vsel %vm1415, %v2140, -inf
        %2144 = vmax.xlane.f32.xlu0 %v2143
        %v2145 = vpop.xlane.xlu0 %2144
        %v2146 = vsel %vm1415, %v2141, -inf
        %2147 = vmax.xlane.f32.xlu0 %v2146
        %v2148 = vpop.xlane.xlu0 %2147
        %v2149 = vsel %vm1422, %v2142, -inf
        %2150 = vmax.xlane.f32.xlu0 %v2149
        %v2151 = vpop.xlane.xlu0 %2150
        %v2152 = vsub.f32 %v2140, %v2145
        %v2153 = vsub.f32 %v2141, %v2148
        %v2154 = vsub.f32 %v2142, %v2151
        %v2155 = vmul.f32 %v2152, 1.442695
        %v2156 = vpow.pop %v2155
        %v2157 = vmul.f32 %v2153, 1.442695
        %v2158 = vpow.pop %v2157
        %v2159 = vmul.f32 %v2154, 1.442695
        %v2160 = vpow.pop %v2159
        %v2161 = vsel %vm1415, %v2156, 0.0
        %2162 = vadd.xlane.f32.xlu0 %v2161
        %v2163 = vpop.xlane.xlu0 %2162
        %v2164 = vsel %vm1415, %v2158, 0.0
        %2165 = vadd.xlane.f32.xlu0 %v2164
        %v2166 = vpop.xlane.xlu0 %2165
        %v2167 = vsel %vm1422, %v2160, 0.0
        %2168 = vadd.xlane.f32.xlu0 %v2167
        %v2169 = vpop.xlane.xlu0 %2168
        %v2170 = vrcp.pop %v2163
        %v2171 = vmul.f32 %v2156, %v2170
        %v2172 = vrcp.pop %v2166
        %v2173 = vmul.f32 %v2158, %v2172
        %v2174 = vrcp.pop %v2169
        %v2175 = vmul.f32 %v2160, %v2174
        %2176 = vrot.lane.b32.xlu0 %v1294, 40
        %v2177 = vpop.permute.xlu0 %2176
        %2178 = vrot.lane.b32.xlu0 %v1299, 40
        %v2179 = vpop.permute.xlu0 %2178
        %2180 = vrot.lane.b32.xlu0 %v1304, 40
        %v2181 = vpop.permute.xlu0 %2180
        %v2185 = vsel %vm1415, %v2171, 0
        %v2188 = vsel %vm1415, %v2173, 0
        %v2191 = vsel %vm1415, %v2175, 0
        %v2193 = vsel %vm1112, %v2181, 0
        %2195 = vmatprep.subr.mxu0 0.0
        %2196 = vmatpush1.msra.mxu0 %v2177
        %2197 = vmatprep.subr.mxu0 0.0
        %2198 = vmatpush1.msra.mxu0 %v2179
        %2199 = vmatprep.subr.mxu0 0.0
        %2200 = vmatpush1.msra.mxu0 %v2193
        %2201 = vmatprep.subr.mxu0 0.0
        %2202 = vmatpush1.msra.mxu0 0.0
        %2203 = vmatprep.subr.mxu0 0.0
        %2204 = vmatpush1.msra.mxu0 0.0
        %2205 = vmatprep.subr.mxu0 0.0
        %2206 = vmatpush1.msra.mxu0 0.0
        %2207 = vmatprep.subr.mxu0 0.0
        %2208 = vmatpush1.msra.mxu0 0.0
        %2209 = vmatprep.subr.mxu0 0.0
        %2210 = vmatpush1.msra.mxu0 0.0
        %2211 = vmatprep.subr.mxu0 0.0
        %2212 = vmatpush1.msra.mxu0 0.0
        %2213 = vmatprep.subr.mxu0 0.0
        %2214 = vmatpush1.msra.mxu0 0.0
        %2215 = vmatprep.subr.mxu0 0.0
        %2216 = vmatpush1.msra.mxu0 0.0
        %2217 = vmatprep.subr.mxu0 0.0
        %2218 = vmatpush1.msra.mxu0 0.0
        %2219 = vmatprep.subr.mxu0 0.0
        %2220 = vmatpush1.msra.mxu0 0.0
        %2221 = vmatprep.subr.mxu0 0.0
        %2222 = vmatpush1.msra.mxu0 0.0
        %2223 = vmatprep.subr.mxu0 0.0
        %2224 = vmatpush1.msra.mxu0 0.0
        %2225 = vmatprep.subr.mxu0 0.0
        %2226 = vmatpush1.msra.mxu0 0.0
        %2227 = vmatprep.subr.mxu0 0.0
        %2228 = vmatpush1.msra.mxu0 0.0
        %2229 = vmatprep.subr.mxu0 0.0
        %2230 = vmatpush1.msra.mxu0 0.0
        %2231 = vmatprep.subr.mxu0 0.0
        %2232 = vmatpush1.msra.mxu0 0.0
        %2233 = vmatprep.subr.mxu0 0.0
        %2234 = vmatpush1.msra.mxu0 0.0
        %2235 = vmatprep.subr.mxu0 0.0
        %2236 = vmatpush1.msra.mxu0 0.0
        %2237 = vmatprep.subr.mxu0 0.0
        %2238 = vmatpush1.msra.mxu0 0.0
        %2239 = vmatprep.subr.mxu0 0.0
        %2240 = vmatpush1.msra.mxu0 0.0
        %2241 = vmatprep.subr.mxu0 0.0
        %2242 = vmatpush1.msra.mxu0 0.0
        %2243 = vmatprep.subr.mxu0 0.0
        %2244 = vmatpush1.msra.mxu0 0.0
        %2245 = vmatprep.subr.mxu0 0.0
        %2246 = vmatpush1.msra.mxu0 0.0
        %2247 = vmatprep.subr.mxu0 0.0
        %2248 = vmatpush1.msra.mxu0 0.0
        %2249 = vmatprep.subr.mxu0 0.0
        %2250 = vmatpush1.msra.mxu0 0.0
        %2251 = vmatprep.subr.mxu0 0.0
        %2252 = vmatpush1.msra.mxu0 0.0
        %2253 = vmatprep.subr.mxu0 0.0
        %2254 = vmatpush1.msra.mxu0 0.0
        %2255 = vmatprep.subr.mxu0 0.0
        %2256 = vmatpush1.msra.mxu0 0.0
        %2257 = vmatprep.subr.mxu0 0.0
        %2258 = vmatpush1.msra.mxu0 0.0
        %2259 = vmatprep.mubr.f32.mxu0 0.0
        %2260 = vmatmul.mubr.f32.gmra.mrb[0].mxu0 %v2185
        %v2261 = vpop.f32.mrb[0].mxu0
        %v2262 = vadd.f32 0.0, %v2261
        %v2263 = vpop.f32.mrb[0].mxu0
        %2264 = vmatprep.mubr.f32.mxu0 0.0
        %2265 = vmatmul.mubr.f32.gmra.mrb[0].mxu0 %v2188
        %v2266 = vpop.f32.mrb[0].mxu0
        %v2267 = vadd.f32 0.0, %v2266
        %v2268 = vpop.f32.mrb[0].mxu0
        %2269 = vmatprep.mubr.f32.mxu0 0.0
        %2270 = vmatmul.mubr.f32.gmra.mrb[0].mxu0 %v2191
        %v2271 = vpop.f32.mrb[0].mxu0
        %v2272 = vadd.f32 0.0, %v2271
        %v2273 = vpop.f32.mrb[0].mxu0
        %2274 = vdwg.mxu0
        %2278 = vrot.lane.b32.xlu0 %v1778, 8
        %v2279 = vpop.permute.xlu0 %2278
        %2280 = vrot.lane.b32.xlu0 %v1783, 8
        %v2281 = vpop.permute.xlu0 %2280
        %2282 = vrot.lane.b32.xlu0 %v1788, 8
        %v2283 = vpop.permute.xlu0 %2282
        %2290 = vrot.lane.b32.xlu0 %v2020, 16
        %v2291 = vpop.permute.xlu0 %2290
        %2292 = vrot.lane.b32.xlu0 %v2025, 16
        %v2293 = vpop.permute.xlu0 %2292
        %2294 = vrot.lane.b32.xlu0 %v2030, 16
        %v2295 = vpop.permute.xlu0 %2294
        %2302 = vrot.lane.b32.xlu0 %v2262, 24
        %v2303 = vpop.permute.xlu0 %2302
        %2304 = vrot.lane.b32.xlu0 %v2267, 24
        %v2305 = vpop.permute.xlu0 %2304
        %2306 = vrot.lane.b32.xlu0 %v2272, 24
        %v2307 = vpop.permute.xlu0 %2306
        %v2311 = vsel %vm1316, %v1536, %v2279
        %v2312 = vsel %vm1316, %v1541, %v2281
        %v2313 = vsel %vm1316, %v1546, %v2283
        %vm2314 = vcmask 130048
        %v2315 = vsel %vm2314, %v2311, %v2291
        %v2316 = vsel %vm2314, %v2312, %v2293
        %v2317 = vsel %vm2314, %v2313, %v2295
        %vm2318 = vcmask 195584
        %v2319 = vsel %vm2318, %v2315, %v2303
        %v2320 = vsel %vm2318, %v2316, %v2305
        %v2321 = vsel %vm2318, %v2317, %v2307
        %v2322 = vld [vmem:[#allocation17] sm:$0xff]
        %v2323 = vld [vmem:[#allocation17 + $0x8] sm:$0xff]
        %v2324 = vld [vmem:[#allocation17 + $0x10] sm:$0xff]
        %v2325 = vld [vmem:[#allocation17 + $0x18] sm:$0xff]
        %v2327 = vsel %vm882, %v2319, 0
        %v2330 = vsel %vm882, %v2320, 0
        %v2333 = vsel %vm882, %v2321, 0
        %2335 = vmatprep.subr.mxu0 0.0
        %2336 = vmatpush1.msra.mxu0 %v2322
        %2337 = vmatprep.subr.mxu0 0.0
        %2338 = vmatpush1.msra.mxu0 %v2323
        %2339 = vmatprep.subr.mxu0 0.0
        %2340 = vmatpush1.msra.mxu0 %v2324
        %2341 = vmatprep.subr.mxu0 0.0
        %2342 = vmatpush1.msra.mxu0 %v2325
        %2343 = vmatprep.subr.mxu0 0.0
        %2344 = vmatpush1.msra.mxu0 0.0
        %2345 = vmatprep.subr.mxu0 0.0
        %2346 = vmatpush1.msra.mxu0 0.0
        %2347 = vmatprep.subr.mxu0 0.0
        %2348 = vmatpush1.msra.mxu0 0.0
        %2349 = vmatprep.subr.mxu0 0.0
        %2350 = vmatpush1.msra.mxu0 0.0
        %2351 = vmatprep.subr.mxu0 0.0
        %2352 = vmatpush1.msra.mxu0 0.0
        %2353 = vmatprep.subr.mxu0 0.0
        %2354 = vmatpush1.msra.mxu0 0.0
        %2355 = vmatprep.subr.mxu0 0.0
        %2356 = vmatpush1.msra.mxu0 0.0
        %2357 = vmatprep.subr.mxu0 0.0
        %2358 = vmatpush1.msra.mxu0 0.0
        %2359 = vmatprep.subr.mxu0 0.0
        %2360 = vmatpush1.msra.mxu0 0.0
        %2361 = vmatprep.subr.mxu0 0.0
        %2362 = vmatpush1.msra.mxu0 0.0
        %2363 = vmatprep.subr.mxu0 0.0
        %2364 = vmatpush1.msra.mxu0 0.0
        %2365 = vmatprep.subr.mxu0 0.0
        %2366 = vmatpush1.msra.mxu0 0.0
        %2367 = vmatprep.subr.mxu0 0.0
        %2368 = vmatpush1.msra.mxu0 0.0
        %2369 = vmatprep.subr.mxu0 0.0
        %2370 = vmatpush1.msra.mxu0 0.0
        %2371 = vmatprep.subr.mxu0 0.0
        %2372 = vmatpush1.msra.mxu0 0.0
        %2373 = vmatprep.subr.mxu0 0.0
        %2374 = vmatpush1.msra.mxu0 0.0
        %2375 = vmatprep.subr.mxu0 0.0
        %2376 = vmatpush1.msra.mxu0 0.0
        %2377 = vmatprep.subr.mxu0 0.0
        %2378 = vmatpush1.msra.mxu0 0.0
        %2379 = vmatprep.subr.mxu0 0.0
        %2380 = vmatpush1.msra.mxu0 0.0
        %2381 = vmatprep.subr.mxu0 0.0
        %2382 = vmatpush1.msra.mxu0 0.0
        %2383 = vmatprep.subr.mxu0 0.0
        %2384 = vmatpush1.msra.mxu0 0.0
        %2385 = vmatprep.subr.mxu0 0.0
        %2386 = vmatpush1.msra.mxu0 0.0
        %2387 = vmatprep.subr.mxu0 0.0
        %2388 = vmatpush1.msra.mxu0 0.0
        %2389 = vmatprep.subr.mxu0 0.0
        %2390 = vmatpush1.msra.mxu0 0.0
        %2391 = vmatprep.subr.mxu0 0.0
        %2392 = vmatpush1.msra.mxu0 0.0
        %2393 = vmatprep.subr.mxu0 0.0
        %2394 = vmatpush1.msra.mxu0 0.0
        %2395 = vmatprep.subr.mxu0 0.0
        %2396 = vmatpush1.msra.mxu0 0.0
        %2397 = vmatprep.subr.mxu0 0.0
        %2398 = vmatpush1.msra.mxu0 0.0
        %2399 = vmatprep.mubr.f32.mxu0 0.0
        %2400 = vmatmul.mubr.f32.gmra.mrb[0].mxu0 %v2327
        %v2401 = vpop.f32.mrb[0].mxu0
        %v2402 = vadd.f32 0.0, %v2401
        %v2403 = vpop.f32.mrb[0].mxu0
        %2404 = vmatprep.mubr.f32.mxu0 0.0
        %2405 = vmatmul.mubr.f32.gmra.mrb[0].mxu0 %v2330
        %v2406 = vpop.f32.mrb[0].mxu0
        %v2407 = vadd.f32 0.0, %v2406
        %v2408 = vpop.f32.mrb[0].mxu0
        %2409 = vmatprep.mubr.f32.mxu0 0.0
        %2410 = vmatmul.mubr.f32.gmra.mrb[0].mxu0 %v2333
        %v2411 = vpop.f32.mrb[0].mxu0
        %v2412 = vadd.f32 0.0, %v2411
        %v2413 = vpop.f32.mrb[0].mxu0
        %2414 = vdwg.mxu0
        %v2415 = vadd.f32 %v1138, %v2402
        %v2416 = vadd.f32 %v1139, %v2407
        %v2417 = vadd.f32 %v1140, %v2412
        %v2418 = vld [vmem:[%s13] sm:$0x1]
        %v2420 = vlaneseq
        %v2421 = vshrl.u32 %v2420, 7
        %v2422 = vsub.s32 0, %v2421
        %v2423 = vrot.slane %v2418, %v2422
        %v2425 = vadd.f32 %v2415, %v2423
        %v2426 = vadd.f32 %v2416, %v2423
        %v2427 = vadd.f32 %v2417, %v2423
        %v2428 = vld [vmem:[#allocation14 + $0x2] sm:$0x1]
        %v2429 = vld [vmem:[#allocation14 + $0x3] sm:$0x1]
        %v2430 = vsel %vm882, %v2425, 0.0
        %2431 = vadd.xlane.f32.xlu0 %v2430
        %v2432 = vpop.xlane.xlu0 %2431
        %v2433 = vsel %vm882, %v2426, 0.0
        %2434 = vadd.xlane.f32.xlu0 %v2433
        %v2435 = vpop.xlane.xlu0 %2434
        %v2436 = vsel %vm1158, %v2427, 0.0
        %2437 = vadd.xlane.f32.xlu0 %v2436
        %v2438 = vpop.xlane.xlu0 %2437
        %v2439 = vmul.f32 %v2432, %v1162
        %v2440 = vmul.f32 %v2435, %v1162
        %v2441 = vmul.f32 %v2438, %v1162
        %v2442 = vsub.f32 %v2425, %v2439
        %v2443 = vsub.f32 %v2426, %v2440
        %v2444 = vsub.f32 %v2427, %v2441
        %v2445 = vmul.f32 %v2442, %v2442
        %v2446 = vmul.f32 %v2443, %v2443
        %v2447 = vmul.f32 %v2444, %v2444
        %v2448 = vsel %vm882, %v2445, 0.0
        %2449 = vadd.xlane.f32.xlu0 %v2448
        %v2450 = vpop.xlane.xlu0 %2449
        %v2451 = vsel %vm882, %v2446, 0.0
        %2452 = vadd.xlane.f32.xlu0 %v2451
        %v2453 = vpop.xlane.xlu0 %2452
        %v2454 = vsel %vm1158, %v2447, 0.0
        %2455 = vadd.xlane.f32.xlu0 %v2454
        %v2456 = vpop.xlane.xlu0 %2455
        %v2457 = vmul.f32 %v2450, %v1162
        %v2458 = vmul.f32 %v2453, %v1162
        %v2459 = vmul.f32 %v2456, %v1162
        %v2460 = vadd.f32 %v2457, 1e-05
        %v2461 = vadd.f32 %v2458, 1e-05
        %v2462 = vadd.f32 %v2459, 1e-05
        %v2463 = vrsqrt.pop %v2460
        %v2464 = vrsqrt.pop %v2461
        %v2465 = vrsqrt.pop %v2462
        %v2466 = vmul.f32 %v2442, %v2463
        %v2467 = vmul.f32 %v2443, %v2464
        %v2468 = vmul.f32 %v2444, %v2465
        %v2469 = vlaneseq
        %v2470 = vshrl.u32 %v2469, 7
        %v2471 = vsub.s32 0, %v2470
        %v2472 = vrot.slane %v2428, %v2471
        %v2473 = vmul.f32 %v2466, %v2472
        %v2474 = vmul.f32 %v2467, %v2472
        %v2475 = vmul.f32 %v2468, %v2472
        %v2476 = vlaneseq
        %v2477 = vshrl.u32 %v2476, 7
        %v2478 = vsub.s32 0, %v2477
        %v2479 = vrot.slane %v2429, %v2478
        %v2480 = vadd.f32 %v2473, %v2479
        %v2481 = vadd.f32 %v2474, %v2479
        %v2482 = vadd.f32 %v2475, %v2479
        %v2483 = vld [vmem:[%s14] sm:$0xff]
        %v2484 = vld [vmem:[%s14 + $0x8] sm:$0xff]
        %v2485 = vld [vmem:[%s14 + $0x10] sm:$0xff]
        %v2486 = vld [vmem:[%s14 + $0x18] sm:$0xff]
        %v2487 = vld [vmem:[%s15] sm:$0x1]
        %v2489 = vlaneseq
        %v2490 = vshrl.u32 %v2489, 7
        %v2491 = vsub.s32 0, %v2490
        %v2492 = vrot.slane %v2487, %v2491
        %v2495 = vsel %vm882, %v2480, 0
        %v2498 = vsel %vm882, %v2481, 0
        %v2501 = vsel %vm882, %v2482, 0
        %2503 = vmatprep.subr.mxu0 0.0
        %2504 = vmatpush1.msra.mxu0 %v2483
        %2505 = vmatprep.subr.mxu0 0.0
        %2506 = vmatpush1.msra.mxu0 %v2484
        %2507 = vmatprep.subr.mxu0 0.0
        %2508 = vmatpush1.msra.mxu0 %v2485
        %2509 = vmatprep.subr.mxu0 0.0
        %2510 = vmatpush1.msra.mxu0 %v2486
        %2511 = vmatprep.subr.mxu0 0.0
        %2512 = vmatpush1.msra.mxu0 0.0
        %2513 = vmatprep.subr.mxu0 0.0
        %2514 = vmatpush1.msra.mxu0 0.0
        %2515 = vmatprep.subr.mxu0 0.0
        %2516 = vmatpush1.msra.mxu0 0.0
        %2517 = vmatprep.subr.mxu0 0.0
        %2518 = vmatpush1.msra.mxu0 0.0
        %2519 = vmatprep.subr.mxu0 0.0
        %2520 = vmatpush1.msra.mxu0 0.0
        %2521 = vmatprep.subr.mxu0 0.0
        %2522 = vmatpush1.msra.mxu0 0.0
        %2523 = vmatprep.subr.mxu0 0.0
        %2524 = vmatpush1.msra.mxu0 0.0
        %2525 = vmatprep.subr.mxu0 0.0
        %2526 = vmatpush1.msra.mxu0 0.0
        %2527 = vmatprep.subr.mxu0 0.0
        %2528 = vmatpush1.msra.mxu0 0.0
        %2529 = vmatprep.subr.mxu0 0.0
        %2530 = vmatpush1.msra.mxu0 0.0
        %2531 = vmatprep.subr.mxu0 0.0
        %2532 = vmatpush1.msra.mxu0 0.0
        %2533 = vmatprep.subr.mxu0 0.0
        %2534 = vmatpush1.msra.mxu0 0.0
        %2535 = vmatprep.subr.mxu0 0.0
        %2536 = vmatpush1.msra.mxu0 0.0
        %2537 = vmatprep.subr.mxu0 0.0
        %2538 = vmatpush1.msra.mxu0 0.0
        %2539 = vmatprep.subr.mxu0 0.0
        %2540 = vmatpush1.msra.mxu0 0.0
        %2541 = vmatprep.subr.mxu0 0.0
        %2542 = vmatpush1.msra.mxu0 0.0
        %2543 = vmatprep.subr.mxu0 0.0
        %2544 = vmatpush1.msra.mxu0 0.0
        %2545 = vmatprep.subr.mxu0 0.0
        %2546 = vmatpush1.msra.mxu0 0.0
        %2547 = vmatprep.subr.mxu0 0.0
        %2548 = vmatpush1.msra.mxu0 0.0
        %2549 = vmatprep.subr.mxu0 0.0
        %2550 = vmatpush1.msra.mxu0 0.0
        %2551 = vmatprep.subr.mxu0 0.0
        %2552 = vmatpush1.msra.mxu0 0.0
        %2553 = vmatprep.subr.mxu0 0.0
        %2554 = vmatpush1.msra.mxu0 0.0
        %2555 = vmatprep.subr.mxu0 0.0
        %2556 = vmatpush1.msra.mxu0 0.0
        %2557 = vmatprep.subr.mxu0 0.0
        %2558 = vmatpush1.msra.mxu0 0.0
        %2559 = vmatprep.subr.mxu0 0.0
        %2560 = vmatpush1.msra.mxu0 0.0
        %2561 = vmatprep.subr.mxu0 0.0
        %2562 = vmatpush1.msra.mxu0 0.0
        %2563 = vmatprep.subr.mxu0 0.0
        %2564 = vmatpush1.msra.mxu0 0.0
        %2565 = vmatprep.subr.mxu0 0.0
        %2566 = vmatpush1.msra.mxu0 0.0
        %2567 = vmatprep.mubr.f32.mxu0 0.0
        %2568 = vmatmul.mubr.f32.gmra.mrb[0].mxu0 %v2495
        %v2569 = vpop.f32.mrb[0].mxu0
        %v2570 = vadd.f32 %v2492, %v2569
        %v2571 = vpop.f32.mrb[0].mxu0
        %2572 = vmatprep.mubr.f32.mxu0 0.0
        %2573 = vmatmul.mubr.f32.gmra.mrb[0].mxu0 %v2498
        %v2574 = vpop.f32.mrb[0].mxu0
        %v2575 = vadd.f32 %v2492, %v2574
        %v2576 = vpop.f32.mrb[0].mxu0
        %2577 = vmatprep.mubr.f32.mxu0 0.0
        %2578 = vmatmul.mubr.f32.gmra.mrb[0].mxu0 %v2501
        %v2579 = vpop.f32.mrb[0].mxu0
        %v2580 = vadd.f32 %v2492, %v2579
        %v2581 = vpop.f32.mrb[0].mxu0
        %2582 = vdwg.mxu0
        %v2583 = vmul.f32 %v2570, 0.5
        %v2584 = vmul.f32 %v2575, 0.5
        %v2585 = vmul.f32 %v2580, 0.5
        %v2586 = vmul.f32 %v2570, 0.044715
        %v2587 = vmul.f32 %v2575, 0.044715
        %v2588 = vmul.f32 %v2580, 0.044715
        %v2589 = vmul.f32 %v2586, %v2570
        %v2590 = vmul.f32 %v2587, %v2575
        %v2591 = vmul.f32 %v2588, %v2580
        %v2592 = vmul.f32 %v2589, %v2570
        %v2593 = vmul.f32 %v2590, %v2575
        %v2594 = vmul.f32 %v2591, %v2580
        %v2595 = vadd.f32 %v2570, %v2592
        %v2596 = vadd.f32 %v2575, %v2593
        %v2597 = vadd.f32 %v2580, %v2594
        %v2598 = vmul.f32 %v2595, 0.7978846
        %v2599 = vmul.f32 %v2596, 0.7978846
        %v2600 = vmul.f32 %v2597, 0.7978846
        %v2601 = vtanh.pop %v2598
        %v2602 = vtanh.pop %v2599
        %v2603 = vtanh.pop %v2600
        %v2604 = vadd.f32 %v2601, 1.0
        %v2605 = vadd.f32 %v2602, 1.0
        %v2606 = vadd.f32 %v2603, 1.0
        %v2607 = vmul.f32 %v2583, %v2604
        %v2608 = vmul.f32 %v2584, %v2605
        %v2609 = vmul.f32 %v2585, %v2606
        %v2610 = vld [vmem:[#allocation18] sm:$0xff]
        %v2611 = vld [vmem:[#allocation18 + $0x8] sm:$0xff]
        %v2612 = vld [vmem:[#allocation18 + $0x10] sm:$0xff]
        %v2613 = vld [vmem:[#allocation18 + $0x18] sm:$0xff]
        %v2614 = vld [vmem:[#allocation18 + $0x20] sm:$0xff]
        %v2615 = vld [vmem:[#allocation18 + $0x28] sm:$0xff]
        %v2616 = vld [vmem:[#allocation18 + $0x30] sm:$0xff]
        %v2617 = vld [vmem:[#allocation18 + $0x38] sm:$0xff]
        %v2618 = vld [vmem:[#allocation18 + $0x40] sm:$0xff]
        %v2619 = vld [vmem:[#allocation18 + $0x48] sm:$0xff]
        %v2620 = vld [vmem:[#allocation18 + $0x50] sm:$0xff]
        %v2621 = vld [vmem:[#allocation18 + $0x58] sm:$0xff]
        %v2622 = vld [vmem:[#allocation18 + $0x60] sm:$0xff]
        %v2623 = vld [vmem:[#allocation18 + $0x68] sm:$0xff]
        %v2624 = vld [vmem:[#allocation18 + $0x70] sm:$0xff]
        %v2625 = vld [vmem:[#allocation18 + $0x78] sm:$0xff]
        %2626 = vmatprep.subr.mxu0 0.0
        %2627 = vmatpush1.msra.mxu0 %v2610
        %2628 = vmatprep.subr.mxu0 0.0
        %2629 = vmatpush1.msra.mxu0 %v2611
        %2630 = vmatprep.subr.mxu0 0.0
        %2631 = vmatpush1.msra.mxu0 %v2612
        %2632 = vmatprep.subr.mxu0 0.0
        %2633 = vmatpush1.msra.mxu0 %v2613
        %2634 = vmatprep.subr.mxu0 0.0
        %2635 = vmatpush1.msra.mxu0 %v2614
        %2636 = vmatprep.subr.mxu0 0.0
        %2637 = vmatpush1.msra.mxu0 %v2615
        %2638 = vmatprep.subr.mxu0 0.0
        %2639 = vmatpush1.msra.mxu0 %v2616
        %2640 = vmatprep.subr.mxu0 0.0
        %2641 = vmatpush1.msra.mxu0 %v2617
        %2642 = vmatprep.subr.mxu0 0.0
        %2643 = vmatpush1.msra.mxu0 %v2618
        %2644 = vmatprep.subr.mxu0 0.0
        %2645 = vmatpush1.msra.mxu0 %v2619
        %2646 = vmatprep.subr.mxu0 0.0
        %2647 = vmatpush1.msra.mxu0 %v2620
        %2648 = vmatprep.subr.mxu0 0.0
        %2649 = vmatpush1.msra.mxu0 %v2621
        %2650 = vmatprep.subr.mxu0 0.0
        %2651 = vmatpush1.msra.mxu0 %v2622
        %2652 = vmatprep.subr.mxu0 0.0
        %2653 = vmatpush1.msra.mxu0 %v2623
        %2654 = vmatprep.subr.mxu0 0.0
        %2655 = vmatpush1.msra.mxu0 %v2624
        %2656 = vmatprep.subr.mxu0 0.0
        %2657 = vmatpush1.msra.mxu0 %v2625
        %2658 = vmatprep.subr.mxu0 0.0
        %2659 = vmatpush1.msra.mxu0 0.0
        %2660 = vmatprep.subr.mxu0 0.0
        %2661 = vmatpush1.msra.mxu0 0.0
        %2662 = vmatprep.subr.mxu0 0.0
        %2663 = vmatpush1.msra.mxu0 0.0
        %2664 = vmatprep.subr.mxu0 0.0
        %2665 = vmatpush1.msra.mxu0 0.0
        %2666 = vmatprep.subr.mxu0 0.0
        %2667 = vmatpush1.msra.mxu0 0.0
        %2668 = vmatprep.subr.mxu0 0.0
        %2669 = vmatpush1.msra.mxu0 0.0
        %2670 = vmatprep.subr.mxu0 0.0
        %2671 = vmatpush1.msra.mxu0 0.0
        %2672 = vmatprep.subr.mxu0 0.0
        %2673 = vmatpush1.msra.mxu0 0.0
        %2674 = vmatprep.subr.mxu0 0.0
        %2675 = vmatpush1.msra.mxu0 0.0
        %2676 = vmatprep.subr.mxu0 0.0
        %2677 = vmatpush1.msra.mxu0 0.0
        %2678 = vmatprep.subr.mxu0 0.0
        %2679 = vmatpush1.msra.mxu0 0.0
        %2680 = vmatprep.subr.mxu0 0.0
        %2681 = vmatpush1.msra.mxu0 0.0
        %2682 = vmatprep.subr.mxu0 0.0
        %2683 = vmatpush1.msra.mxu0 0.0
        %2684 = vmatprep.subr.mxu0 0.0
        %2685 = vmatpush1.msra.mxu0 0.0
        %2686 = vmatprep.subr.mxu0 0.0
        %2687 = vmatpush1.msra.mxu0 0.0
        %2688 = vmatprep.subr.mxu0 0.0
        %2689 = vmatpush1.msra.mxu0 0.0
        %2690 = vmatprep.mubr.f32.mxu0 0.0
        %2691 = vmatmul.mubr.f32.gmra.mrb[0].mxu0 %v2607
        %v2692 = vpop.f32.mrb[0].mxu0
        %v2693 = vadd.f32 0.0, %v2692
        %v2694 = vpop.f32.mrb[0].mxu0
        %2695 = vmatprep.mubr.f32.mxu0 0.0
        %2696 = vmatmul.mubr.f32.gmra.mrb[0].mxu0 %v2608
        %v2697 = vpop.f32.mrb[0].mxu0
        %v2698 = vadd.f32 0.0, %v2697
        %v2699 = vpop.f32.mrb[0].mxu0
        %2700 = vmatprep.mubr.f32.mxu0 0.0
        %2701 = vmatmul.mubr.f32.gmra.mrb[0].mxu0 %v2609
        %v2702 = vpop.f32.mrb[0].mxu0
        %v2703 = vadd.f32 0.0, %v2702
        %v2704 = vpop.f32.mrb[0].mxu0
        %2705 = vdwg.mxu0
        %v2706 = vadd.f32 %v2425, %v2693
        %v2707 = vadd.f32 %v2426, %v2698
        %v2708 = vadd.f32 %v2427, %v2703
        %v2709 = vld [vmem:[%s17] sm:$0x1]
        %v2711 = vlaneseq
        %v2712 = vshrl.u32 %v2711, 7
        %v2713 = vsub.s32 0, %v2712
        %v2714 = vrot.slane %v2709, %v2713
        %v2716 = vadd.f32 %v2706, %v2714
        %v2717 = vadd.f32 %v2707, %v2714
        %v2718 = vadd.f32 %v2708, %v2714
        %v2719 = vld [vmem:[#allocation14 + $0x4] sm:$0x1]
        %v2720 = vld [vmem:[#allocation14 + $0x5] sm:$0x1]
        %v2721 = vsel %vm882, %v2716, 0.0
        %2722 = vadd.xlane.f32.xlu0 %v2721
        %v2723 = vpop.xlane.xlu0 %2722
        %v2724 = vsel %vm882, %v2717, 0.0
        %2725 = vadd.xlane.f32.xlu0 %v2724
        %v2726 = vpop.xlane.xlu0 %2725
        %v2727 = vsel %vm1158, %v2718, 0.0
        %2728 = vadd.xlane.f32.xlu0 %v2727
        %v2729 = vpop.xlane.xlu0 %2728
        %v2730 = vmul.f32 %v2723, %v1162
        %v2731 = vmul.f32 %v2726, %v1162
        %v2732 = vmul.f32 %v2729, %v1162
        %v2733 = vsub.f32 %v2716, %v2730
        %v2734 = vsub.f32 %v2717, %v2731
        %v2735 = vsub.f32 %v2718, %v2732
        %v2736 = vmul.f32 %v2733, %v2733
        %v2737 = vmul.f32 %v2734, %v2734
        %v2738 = vmul.f32 %v2735, %v2735
        %v2739 = vsel %vm882, %v2736, 0.0
        %2740 = vadd.xlane.f32.xlu0 %v2739
        %v2741 = vpop.xlane.xlu0 %2740
        %v2742 = vsel %vm882, %v2737, 0.0
        %2743 = vadd.xlane.f32.xlu0 %v2742
        %v2744 = vpop.xlane.xlu0 %2743
        %v2745 = vsel %vm1158, %v2738, 0.0
        %2746 = vadd.xlane.f32.xlu0 %v2745
        %v2747 = vpop.xlane.xlu0 %2746
        %v2748 = vmul.f32 %v2741, %v1162
        %v2749 = vmul.f32 %v2744, %v1162
        %v2750 = vmul.f32 %v2747, %v1162
        %v2751 = vadd.f32 %v2748, 1e-05
        %v2752 = vadd.f32 %v2749, 1e-05
        %v2753 = vadd.f32 %v2750, 1e-05
        %v2754 = vrsqrt.pop %v2751
        %v2755 = vrsqrt.pop %v2752
        %v2756 = vrsqrt.pop %v2753
        %v2757 = vmul.f32 %v2733, %v2754
        %v2758 = vmul.f32 %v2734, %v2755
        %v2759 = vmul.f32 %v2735, %v2756
        %v2760 = vlaneseq
        %v2761 = vshrl.u32 %v2760, 7
        %v2762 = vsub.s32 0, %v2761
        %v2763 = vrot.slane %v2719, %v2762
        %v2764 = vmul.f32 %v2757, %v2763
        %v2765 = vmul.f32 %v2758, %v2763
        %v2766 = vmul.f32 %v2759, %v2763
        %v2767 = vlaneseq
        %v2768 = vshrl.u32 %v2767, 7
        %v2769 = vsub.s32 0, %v2768
        %v2770 = vrot.slane %v2720, %v2769
        %v2771 = vadd.f32 %v2764, %v2770
        %v2772 = vadd.f32 %v2765, %v2770
        %v2773 = vadd.f32 %v2766, %v2770
        %s2774 = scalar_lea.vmem [#allocation15], 32
        %v2775 = vld [vmem:[%s2774] sm:$0xff]
        %v2776 = vld [vmem:[%s2774 + $0x8] sm:$0xff]
        %v2777 = vld [vmem:[%s2774 + $0x10] sm:$0xff]
        %v2778 = vld [vmem:[%s2774 + $0x18] sm:$0xff]
        %s2779 = scalar_lea.vmem %s11, 1
        %v2780 = vld [vmem:[%s2779] sm:$0x1]
        %v2782 = vlaneseq
        %v2783 = vshrl.u32 %v2782, 7
        %v2784 = vsub.s32 0, %v2783
        %v2785 = vrot.slane %v2780, %v2784
        %v2788 = vsel %vm882, %v2771, 0
        %v2791 = vsel %vm882, %v2772, 0
        %v2794 = vsel %vm882, %v2773, 0
        %2796 = vmatprep.subr.mxu0 0.0
        %2797 = vmatpush1.msra.mxu0 %v2775
        %2798 = vmatprep.subr.mxu0 0.0
        %2799 = vmatpush1.msra.mxu0 %v2776
        %2800 = vmatprep.subr.mxu0 0.0
        %2801 = vmatpush1.msra.mxu0 %v2777
        %2802 = vmatprep.subr.mxu0 0.0
        %2803 = vmatpush1.msra.mxu0 %v2778
        %2804 = vmatprep.subr.mxu0 0.0
        %2805 = vmatpush1.msra.mxu0 0.0
        %2806 = vmatprep.subr.mxu0 0.0
        %2807 = vmatpush1.msra.mxu0 0.0
        %2808 = vmatprep.subr.mxu0 0.0
        %2809 = vmatpush1.msra.mxu0 0.0
        %2810 = vmatprep.subr.mxu0 0.0
        %2811 = vmatpush1.msra.mxu0 0.0
        %2812 = vmatprep.subr.mxu0 0.0
        %2813 = vmatpush1.msra.mxu0 0.0
        %2814 = vmatprep.subr.mxu0 0.0
        %2815 = vmatpush1.msra.mxu0 0.0
        %2816 = vmatprep.subr.mxu0 0.0
        %2817 = vmatpush1.msra.mxu0 0.0
        %2818 = vmatprep.subr.mxu0 0.0
        %2819 = vmatpush1.msra.mxu0 0.0
        %2820 = vmatprep.subr.mxu0 0.0
        %2821 = vmatpush1.msra.mxu0 0.0
        %2822 = vmatprep.subr.mxu0 0.0
        %2823 = vmatpush1.msra.mxu0 0.0
        %2824 = vmatprep.subr.mxu0 0.0
        %2825 = vmatpush1.msra.mxu0 0.0
        %2826 = vmatprep.subr.mxu0 0.0
        %2827 = vmatpush1.msra.mxu0 0.0
        %2828 = vmatprep.subr.mxu0 0.0
        %2829 = vmatpush1.msra.mxu0 0.0
        %2830 = vmatprep.subr.mxu0 0.0
        %2831 = vmatpush1.msra.mxu0 0.0
        %2832 = vmatprep.subr.mxu0 0.0
        %2833 = vmatpush1.msra.mxu0 0.0
        %2834 = vmatprep.subr.mxu0 0.0
        %2835 = vmatpush1.msra.mxu0 0.0
        %2836 = vmatprep.subr.mxu0 0.0
        %2837 = vmatpush1.msra.mxu0 0.0
        %2838 = vmatprep.subr.mxu0 0.0
        %2839 = vmatpush1.msra.mxu0 0.0
        %2840 = vmatprep.subr.mxu0 0.0
        %2841 = vmatpush1.msra.mxu0 0.0
        %2842 = vmatprep.subr.mxu0 0.0
        %2843 = vmatpush1.msra.mxu0 0.0
        %2844 = vmatprep.subr.mxu0 0.0
        %2845 = vmatpush1.msra.mxu0 0.0
        %2846 = vmatprep.subr.mxu0 0.0
        %2847 = vmatpush1.msra.mxu0 0.0
        %2848 = vmatprep.subr.mxu0 0.0
        %2849 = vmatpush1.msra.mxu0 0.0
        %2850 = vmatprep.subr.mxu0 0.0
        %2851 = vmatpush1.msra.mxu0 0.0
        %2852 = vmatprep.subr.mxu0 0.0
        %2853 = vmatpush1.msra.mxu0 0.0
        %2854 = vmatprep.subr.mxu0 0.0
        %2855 = vmatpush1.msra.mxu0 0.0
        %2856 = vmatprep.subr.mxu0 0.0
        %2857 = vmatpush1.msra.mxu0 0.0
        %2858 = vmatprep.subr.mxu0 0.0
        %2859 = vmatpush1.msra.mxu0 0.0
        %2860 = vmatprep.mubr.f32.mxu0 0.0
        %2861 = vmatmul.mubr.f32.gmra.mrb[0].mxu0 %v2788
        %v2862 = vpop.f32.mrb[0].mxu0
        %v2863 = vadd.f32 %v2785, %v2862
        %v2864 = vpop.f32.mrb[0].mxu0
        %2865 = vmatprep.mubr.f32.mxu0 0.0
        %2866 = vmatmul.mubr.f32.gmra.mrb[0].mxu0 %v2791
        %v2867 = vpop.f32.mrb[0].mxu0
        %v2868 = vadd.f32 %v2785, %v2867
        %v2869 = vpop.f32.mrb[0].mxu0
        %2870 = vmatprep.mubr.f32.mxu0 0.0
        %2871 = vmatmul.mubr.f32.gmra.mrb[0].mxu0 %v2794
        %v2872 = vpop.f32.mrb[0].mxu0
        %v2873 = vadd.f32 %v2785, %v2872
        %v2874 = vpop.f32.mrb[0].mxu0
        %2875 = vdwg.mxu0
        %2879 = vrot.lane.b32.xlu0 %v2863, 96
        %v2880 = vpop.permute.xlu0 %2879
        %2881 = vrot.lane.b32.xlu0 %v2868, 96
        %v2882 = vpop.permute.xlu0 %2881
        %2883 = vrot.lane.b32.xlu0 %v2873, 96
        %v2884 = vpop.permute.xlu0 %2883
        %v2885 = vsel %vm1316, %v2863, 0
        %v2887 = vsel %vm1316, %v2868, 0
        %v2889 = vsel %vm1316, %v2873, 0
        %v2891 = vsel %vm1316, %v2880, 0
        %v2893 = vsel %vm1316, %v2882, 0
        %v2895 = vsel %vm1316, %v2884, 0
        %2897 = vmatprep.subr.mxu0 0.0
        %2898 = vmatpush1.xpose.msra.mxu0 %v2891
        %2899 = vmatprep.subr.mxu0 0.0
        %2900 = vmatpush1.xpose.msra.mxu0 %v2893
        %2901 = vmatprep.subr.mxu0 0.0
        %2902 = vmatpush1.xpose.msra.mxu0 %v2895
        %2903 = vmatprep.subr.mxu0 0.0
        %2904 = vmatpush1.xpose.msra.mxu0 0.0
        %2905 = vmatprep.subr.mxu0 0.0
        %2906 = vmatpush1.xpose.msra.mxu0 0.0
        %2907 = vmatprep.subr.mxu0 0.0
        %2908 = vmatpush1.xpose.msra.mxu0 0.0
        %2909 = vmatprep.subr.mxu0 0.0
        %2910 = vmatpush1.xpose.msra.mxu0 0.0
        %2911 = vmatprep.subr.mxu0 0.0
        %2912 = vmatpush1.xpose.msra.mxu0 0.0
        %2913 = vmatprep.subr.mxu0 0.0
        %2914 = vmatpush1.xpose.msra.mxu0 0.0
        %2915 = vmatprep.subr.mxu0 0.0
        %2916 = vmatpush1.xpose.msra.mxu0 0.0
        %2917 = vmatprep.subr.mxu0 0.0
        %2918 = vmatpush1.xpose.msra.mxu0 0.0
        %2919 = vmatprep.subr.mxu0 0.0
        %2920 = vmatpush1.xpose.msra.mxu0 0.0
        %2921 = vmatprep.subr.mxu0 0.0
        %2922 = vmatpush1.xpose.msra.mxu0 0.0
        %2923 = vmatprep.subr.mxu0 0.0
        %2924 = vmatpush1.xpose.msra.mxu0 0.0
        %2925 = vmatprep.subr.mxu0 0.0
        %2926 = vmatpush1.xpose.msra.mxu0 0.0
        %2927 = vmatprep.subr.mxu0 0.0
        %2928 = vmatpush1.xpose.msra.mxu0 0.0
        %2929 = vmatprep.subr.mxu0 0.0
        %2930 = vmatpush1.xpose.msra.mxu0 0.0
        %2931 = vmatprep.subr.mxu0 0.0
        %2932 = vmatpush1.xpose.msra.mxu0 0.0
        %2933 = vmatprep.subr.mxu0 0.0
        %2934 = vmatpush1.xpose.msra.mxu0 0.0
        %2935 = vmatprep.subr.mxu0 0.0
        %2936 = vmatpush1.xpose.msra.mxu0 0.0
        %2937 = vmatprep.subr.mxu0 0.0
        %2938 = vmatpush1.xpose.msra.mxu0 0.0
        %2939 = vmatprep.subr.mxu0 0.0
        %2940 = vmatpush1.xpose.msra.mxu0 0.0
        %2941 = vmatprep.subr.mxu0 0.0
        %2942 = vmatpush1.xpose.msra.mxu0 0.0
        %2943 = vmatprep.subr.mxu0 0.0
        %2944 = vmatpush1.xpose.msra.mxu0 0.0
        %2945 = vmatprep.subr.mxu0 0.0
        %2946 = vmatpush1.xpose.msra.mxu0 0.0
        %2947 = vmatprep.subr.mxu0 0.0
        %2948 = vmatpush1.xpose.msra.mxu0 0.0
        %2949 = vmatprep.subr.mxu0 0.0
        %2950 = vmatpush1.xpose.msra.mxu0 0.0
        %2951 = vmatprep.subr.mxu0 0.0
        %2952 = vmatpush1.xpose.msra.mxu0 0.0
        %2953 = vmatprep.subr.mxu0 0.0
        %2954 = vmatpush1.xpose.msra.mxu0 0.0
        %2955 = vmatprep.subr.mxu0 0.0
        %2956 = vmatpush1.xpose.msra.mxu0 0.0
        %2957 = vmatprep.subr.mxu0 0.0
        %2958 = vmatpush1.xpose.msra.mxu0 0.0
        %2959 = vmatprep.subr.mxu0 0.0
        %2960 = vmatpush1.xpose.msra.mxu0 0.0
        %2961 = vmatprep.mubr.f32.mxu0 0.0
        %2962 = vmatmul.mubr.f32.gmra.mrb[0].mxu0 %v2885
        %v2963 = vpop.f32.mrb[0].mxu0
        %v2964 = vadd.f32 0.0, %v2963
        %v2965 = vpop.f32.mrb[0].mxu0
        %2966 = vmatprep.mubr.f32.mxu0 0.0
        %2967 = vmatmul.mubr.f32.gmra.mrb[0].mxu0 %v2887
        %v2968 = vpop.f32.mrb[0].mxu0
        %v2969 = vadd.f32 0.0, %v2968
        %v2970 = vpop.f32.mrb[0].mxu0
        %2971 = vmatprep.mubr.f32.mxu0 0.0
        %2972 = vmatmul.mubr.f32.gmra.mrb[0].mxu0 %v2889
        %v2973 = vpop.f32.mrb[0].mxu0
        %v2974 = vadd.f32 0.0, %v2973
        %v2975 = vpop.f32.mrb[0].mxu0
        %2976 = vdwg.mxu0
        %v2977 = vmul.f32 %v2964, 0.35355338
        %v2978 = vmul.f32 %v2969, 0.35355338
        %v2979 = vmul.f32 %v2974, 0.35355338
        %v2980 = vsel %vm1147, %v2977, -1e+09
        %v2981 = vsel %vm1148, %v2978, -1e+09
        %v2982 = vsel %vm1149, %v2979, -1e+09
        %v2983 = vsel %vm1415, %v2980, -inf
        %2984 = vmax.xlane.f32.xlu0 %v2983
        %v2985 = vpop.xlane.xlu0 %2984
        %v2986 = vsel %vm1415, %v2981, -inf
        %2987 = vmax.xlane.f32.xlu0 %v2986
        %v2988 = vpop.xlane.xlu0 %2987
        %v2989 = vsel %vm1422, %v2982, -inf
        %2990 = vmax.xlane.f32.xlu0 %v2989
        %v2991 = vpop.xlane.xlu0 %2990
        %v2992 = vsub.f32 %v2980, %v2985
        %v2993 = vsub.f32 %v2981, %v2988
        %v2994 = vsub.f32 %v2982, %v2991
        %v2995 = vmul.f32 %v2992, 1.442695
        %v2996 = vpow.pop %v2995
        %v2997 = vmul.f32 %v2993, 1.442695
        %v2998 = vpow.pop %v2997
        %v2999 = vmul.f32 %v2994, 1.442695
        %v3000 = vpow.pop %v2999
        %v3001 = vsel %vm1415, %v2996, 0.0
        %3002 = vadd.xlane.f32.xlu0 %v3001
        %v3003 = vpop.xlane.xlu0 %3002
        %v3004 = vsel %vm1415, %v2998, 0.0
        %3005 = vadd.xlane.f32.xlu0 %v3004
        %v3006 = vpop.xlane.xlu0 %3005
        %v3007 = vsel %vm1422, %v3000, 0.0
        %3008 = vadd.xlane.f32.xlu0 %v3007
        %v3009 = vpop.xlane.xlu0 %3008
        %v3010 = vrcp.pop %v3003
        %v3011 = vmul.f32 %v2996, %v3010
        %v3012 = vrcp.pop %v3006
        %v3013 = vmul.f32 %v2998, %v3012
        %v3014 = vrcp.pop %v3009
        %v3015 = vmul.f32 %v3000, %v3014
        %3016 = vrot.lane.b32.xlu0 %v2863, 64
        %v3017 = vpop.permute.xlu0 %3016
        %3018 = vrot.lane.b32.xlu0 %v2868, 64
        %v3019 = vpop.permute.xlu0 %3018
        %3020 = vrot.lane.b32.xlu0 %v2873, 64
        %v3021 = vpop.permute.xlu0 %3020
        %v3025 = vsel %vm1415, %v3011, 0
        %v3028 = vsel %vm1415, %v3013, 0
        %v3031 = vsel %vm1415, %v3015, 0
        %v3033 = vsel %vm1112, %v3021, 0
        %3035 = vmatprep.subr.mxu0 0.0
        %3036 = vmatpush1.msra.mxu0 %v3017
        %3037 = vmatprep.subr.mxu0 0.0
        %3038 = vmatpush1.msra.mxu0 %v3019
        %3039 = vmatprep.subr.mxu0 0.0
        %3040 = vmatpush1.msra.mxu0 %v3033
        %3041 = vmatprep.subr.mxu0 0.0
        %3042 = vmatpush1.msra.mxu0 0.0
        %3043 = vmatprep.subr.mxu0 0.0
        %3044 = vmatpush1.msra.mxu0 0.0
        %3045 = vmatprep.subr.mxu0 0.0
        %3046 = vmatpush1.msra.mxu0 0.0
        %3047 = vmatprep.subr.mxu0 0.0
        %3048 = vmatpush1.msra.mxu0 0.0
        %3049 = vmatprep.subr.mxu0 0.0
        %3050 = vmatpush1.msra.mxu0 0.0
        %3051 = vmatprep.subr.mxu0 0.0
        %3052 = vmatpush1.msra.mxu0 0.0
        %3053 = vmatprep.subr.mxu0 0.0
        %3054 = vmatpush1.msra.mxu0 0.0
        %3055 = vmatprep.subr.mxu0 0.0
        %3056 = vmatpush1.msra.mxu0 0.0
        %3057 = vmatprep.subr.mxu0 0.0
        %3058 = vmatpush1.msra.mxu0 0.0
        %3059 = vmatprep.subr.mxu0 0.0
        %3060 = vmatpush1.msra.mxu0 0.0
        %3061 = vmatprep.subr.mxu0 0.0
        %3062 = vmatpush1.msra.mxu0 0.0
        %3063 = vmatprep.subr.mxu0 0.0
        %3064 = vmatpush1.msra.mxu0 0.0
        %3065 = vmatprep.subr.mxu0 0.0
        %3066 = vmatpush1.msra.mxu0 0.0
        %3067 = vmatprep.subr.mxu0 0.0
        %3068 = vmatpush1.msra.mxu0 0.0
        %3069 = vmatprep.subr.mxu0 0.0
        %3070 = vmatpush1.msra.mxu0 0.0
        %3071 = vmatprep.subr.mxu0 0.0
        %3072 = vmatpush1.msra.mxu0 0.0
        %3073 = vmatprep.subr.mxu0 0.0
        %3074 = vmatpush1.msra.mxu0 0.0
        %3075 = vmatprep.subr.mxu0 0.0
        %3076 = vmatpush1.msra.mxu0 0.0
        %3077 = vmatprep.subr.mxu0 0.0
        %3078 = vmatpush1.msra.mxu0 0.0
        %3079 = vmatprep.subr.mxu0 0.0
        %3080 = vmatpush1.msra.mxu0 0.0
        %3081 = vmatprep.subr.mxu0 0.0
        %3082 = vmatpush1.msra.mxu0 0.0
        %3083 = vmatprep.subr.mxu0 0.0
        %3084 = vmatpush1.msra.mxu0 0.0
        %3085 = vmatprep.subr.mxu0 0.0
        %3086 = vmatpush1.msra.mxu0 0.0
        %3087 = vmatprep.subr.mxu0 0.0
        %3088 = vmatpush1.msra.mxu0 0.0
        %3089 = vmatprep.subr.mxu0 0.0
        %3090 = vmatpush1.msra.mxu0 0.0
        %3091 = vmatprep.subr.mxu0 0.0
        %3092 = vmatpush1.msra.mxu0 0.0
        %3093 = vmatprep.subr.mxu0 0.0
        %3094 = vmatpush1.msra.mxu0 0.0
        %3095 = vmatprep.subr.mxu0 0.0
        %3096 = vmatpush1.msra.mxu0 0.0
        %3097 = vmatprep.subr.mxu0 0.0
        %3098 = vmatpush1.msra.mxu0 0.0
        %3099 = vmatprep.mubr.f32.mxu0 0.0
        %3100 = vmatmul.mubr.f32.gmra.mrb[0].mxu0 %v3025
        %v3101 = vpop.f32.mrb[0].mxu0
        %v3102 = vadd.f32 0.0, %v3101
        %v3103 = vpop.f32.mrb[0].mxu0
        %3104 = vmatprep.mubr.f32.mxu0 0.0
        %3105 = vmatmul.mubr.f32.gmra.mrb[0].mxu0 %v3028
        %v3106 = vpop.f32.mrb[0].mxu0
        %v3107 = vadd.f32 0.0, %v3106
        %v3108 = vpop.f32.mrb[0].mxu0
        %3109 = vmatprep.mubr.f32.mxu0 0.0
        %3110 = vmatmul.mubr.f32.gmra.mrb[0].mxu0 %v3031
        %v3111 = vpop.f32.mrb[0].mxu0
        %v3112 = vadd.f32 0.0, %v3111
        %v3113 = vpop.f32.mrb[0].mxu0
        %3114 = vdwg.mxu0
        %3115 = vrot.lane.b32.xlu0 %v2863, 120
        %v3116 = vpop.permute.xlu0 %3115
        %3117 = vrot.lane.b32.xlu0 %v2868, 120
        %v3118 = vpop.permute.xlu0 %3117
        %3119 = vrot.lane.b32.xlu0 %v2873, 120
        %v3120 = vpop.permute.xlu0 %3119
        %3121 = vrot.lane.b32.xlu0 %v2863, 88
        %v3122 = vpop.permute.xlu0 %3121
        %3123 = vrot.lane.b32.xlu0 %v2868, 88
        %v3124 = vpop.permute.xlu0 %3123
        %3125 = vrot.lane.b32.xlu0 %v2873, 88
        %v3126 = vpop.permute.xlu0 %3125
        %v3127 = vsel %vm1316, %v3116, 0
        %v3129 = vsel %vm1316, %v3118, 0
        %v3131 = vsel %vm1316, %v3120, 0
        %v3133 = vsel %vm1316, %v3122, 0
        %v3135 = vsel %vm1316, %v3124, 0
        %v3137 = vsel %vm1316, %v3126, 0
        %3139 = vmatprep.subr.mxu0 0.0
        %3140 = vmatpush1.xpose.msra.mxu0 %v3133
        %3141 = vmatprep.subr.mxu0 0.0
        %3142 = vmatpush1.xpose.msra.mxu0 %v3135
        %3143 = vmatprep.subr.mxu0 0.0
        %3144 = vmatpush1.xpose.msra.mxu0 %v3137
        %3145 = vmatprep.subr.mxu0 0.0
        %3146 = vmatpush1.xpose.msra.mxu0 0.0
        %3147 = vmatprep.subr.mxu0 0.0
        %3148 = vmatpush1.xpose.msra.mxu0 0.0
        %3149 = vmatprep.subr.mxu0 0.0
        %3150 = vmatpush1.xpose.msra.mxu0 0.0
        %3151 = vmatprep.subr.mxu0 0.0
        %3152 = vmatpush1.xpose.msra.mxu0 0.0
        %3153 = vmatprep.subr.mxu0 0.0
        %3154 = vmatpush1.xpose.msra.mxu0 0.0
        %3155 = vmatprep.subr.mxu0 0.0
        %3156 = vmatpush1.xpose.msra.mxu0 0.0
        %3157 = vmatprep.subr.mxu0 0.0
        %3158 = vmatpush1.xpose.msra.mxu0 0.0
        %3159 = vmatprep.subr.mxu0 0.0
        %3160 = vmatpush1.xpose.msra.mxu0 0.0
        %3161 = vmatprep.subr.mxu0 0.0
        %3162 = vmatpush1.xpose.msra.mxu0 0.0
        %3163 = vmatprep.subr.mxu0 0.0
        %3164 = vmatpush1.xpose.msra.mxu0 0.0
        %3165 = vmatprep.subr.mxu0 0.0
        %3166 = vmatpush1.xpose.msra.mxu0 0.0
        %3167 = vmatprep.subr.mxu0 0.0
        %3168 = vmatpush1.xpose.msra.mxu0 0.0
        %3169 = vmatprep.subr.mxu0 0.0
        %3170 = vmatpush1.xpose.msra.mxu0 0.0
        %3171 = vmatprep.subr.mxu0 0.0
        %3172 = vmatpush1.xpose.msra.mxu0 0.0
        %3173 = vmatprep.subr.mxu0 0.0
        %3174 = vmatpush1.xpose.msra.mxu0 0.0
        %3175 = vmatprep.subr.mxu0 0.0
        %3176 = vmatpush1.xpose.msra.mxu0 0.0
        %3177 = vmatprep.subr.mxu0 0.0
        %3178 = vmatpush1.xpose.msra.mxu0 0.0
        %3179 = vmatprep.subr.mxu0 0.0
        %3180 = vmatpush1.xpose.msra.mxu0 0.0
        %3181 = vmatprep.subr.mxu0 0.0
        %3182 = vmatpush1.xpose.msra.mxu0 0.0
        %3183 = vmatprep.subr.mxu0 0.0
        %3184 = vmatpush1.xpose.msra.mxu0 0.0
        %3185 = vmatprep.subr.mxu0 0.0
        %3186 = vmatpush1.xpose.msra.mxu0 0.0
        %3187 = vmatprep.subr.mxu0 0.0
        %3188 = vmatpush1.xpose.msra.mxu0 0.0
        %3189 = vmatprep.subr.mxu0 0.0
        %3190 = vmatpush1.xpose.msra.mxu0 0.0
        %3191 = vmatprep.subr.mxu0 0.0
        %3192 = vmatpush1.xpose.msra.mxu0 0.0
        %3193 = vmatprep.subr.mxu0 0.0
        %3194 = vmatpush1.xpose.msra.mxu0 0.0
        %3195 = vmatprep.subr.mxu0 0.0
        %3196 = vmatpush1.xpose.msra.mxu0 0.0
        %3197 = vmatprep.subr.mxu0 0.0
        %3198 = vmatpush1.xpose.msra.mxu0 0.0
        %3199 = vmatprep.subr.mxu0 0.0
        %3200 = vmatpush1.xpose.msra.mxu0 0.0
        %3201 = vmatprep.subr.mxu0 0.0
        %3202 = vmatpush1.xpose.msra.mxu0 0.0
        %3203 = vmatprep.mubr.f32.mxu0 0.0
        %3204 = vmatmul.mubr.f32.gmra.mrb[0].mxu0 %v3127
        %v3205 = vpop.f32.mrb[0].mxu0
        %v3206 = vadd.f32 0.0, %v3205
        %v3207 = vpop.f32.mrb[0].mxu0
        %3208 = vmatprep.mubr.f32.mxu0 0.0
        %3209 = vmatmul.mubr.f32.gmra.mrb[0].mxu0 %v3129
        %v3210 = vpop.f32.mrb[0].mxu0
        %v3211 = vadd.f32 0.0, %v3210
        %v3212 = vpop.f32.mrb[0].mxu0
        %3213 = vmatprep.mubr.f32.mxu0 0.0
        %3214 = vmatmul.mubr.f32.gmra.mrb[0].mxu0 %v3131
        %v3215 = vpop.f32.mrb[0].mxu0
        %v3216 = vadd.f32 0.0, %v3215
        %v3217 = vpop.f32.mrb[0].mxu0
        %3218 = vdwg.mxu0
        %v3219 = vmul.f32 %v3206, 0.35355338
        %v3220 = vmul.f32 %v3211, 0.35355338
        %v3221 = vmul.f32 %v3216, 0.35355338
        %v3222 = vsel %vm1147, %v3219, -1e+09
        %v3223 = vsel %vm1148, %v3220, -1e+09
        %v3224 = vsel %vm1149, %v3221, -1e+09
        %v3225 = vsel %vm1415, %v3222, -inf
        %3226 = vmax.xlane.f32.xlu0 %v3225
        %v3227 = vpop.xlane.xlu0 %3226
        %v3228 = vsel %vm1415, %v3223, -inf
        %3229 = vmax.xlane.f32.xlu0 %v3228
        %v3230 = vpop.xlane.xlu0 %3229
        %v3231 = vsel %vm1422, %v3224, -inf
        %3232 = vmax.xlane.f32.xlu0 %v3231
        %v3233 = vpop.xlane.xlu0 %3232
        %v3234 = vsub.f32 %v3222, %v3227
        %v3235 = vsub.f32 %v3223, %v3230
        %v3236 = vsub.f32 %v3224, %v3233
        %v3237 = vmul.f32 %v3234, 1.442695
        %v3238 = vpow.pop %v3237
        %v3239 = vmul.f32 %v3235, 1.442695
        %v3240 = vpow.pop %v3239
        %v3241 = vmul.f32 %v3236, 1.442695
        %v3242 = vpow.pop %v3241
        %v3243 = vsel %vm1415, %v3238, 0.0
        %3244 = vadd.xlane.f32.xlu0 %v3243
        %v3245 = vpop.xlane.xlu0 %3244
        %v3246 = vsel %vm1415, %v3240, 0.0
        %3247 = vadd.xlane.f32.xlu0 %v3246
        %v3248 = vpop.xlane.xlu0 %3247
        %v3249 = vsel %vm1422, %v3242, 0.0
        %3250 = vadd.xlane.f32.xlu0 %v3249
        %v3251 = vpop.xlane.xlu0 %3250
        %v3252 = vrcp.pop %v3245
        %v3253 = vmul.f32 %v3238, %v3252
        %v3254 = vrcp.pop %v3248
        %v3255 = vmul.f32 %v3240, %v3254
        %v3256 = vrcp.pop %v3251
        %v3257 = vmul.f32 %v3242, %v3256
        %3258 = vrot.lane.b32.xlu0 %v2863, 56
        %v3259 = vpop.permute.xlu0 %3258
        %3260 = vrot.lane.b32.xlu0 %v2868, 56
        %v3261 = vpop.permute.xlu0 %3260
        %3262 = vrot.lane.b32.xlu0 %v2873, 56
        %v3263 = vpop.permute.xlu0 %3262
        %v3267 = vsel %vm1415, %v3253, 0
        %v3270 = vsel %vm1415, %v3255, 0
        %v3273 = vsel %vm1415, %v3257, 0
        %v3275 = vsel %vm1112, %v3263, 0
        %3277 = vmatprep.subr.mxu0 0.0
        %3278 = vmatpush1.msra.mxu0 %v3259
        %3279 = vmatprep.subr.mxu0 0.0
        %3280 = vmatpush1.msra.mxu0 %v3261
        %3281 = vmatprep.subr.mxu0 0.0
        %3282 = vmatpush1.msra.mxu0 %v3275
        %3283 = vmatprep.subr.mxu0 0.0
        %3284 = vmatpush1.msra.mxu0 0.0
        %3285 = vmatprep.subr.mxu0 0.0
        %3286 = vmatpush1.msra.mxu0 0.0
        %3287 = vmatprep.subr.mxu0 0.0
        %3288 = vmatpush1.msra.mxu0 0.0
        %3289 = vmatprep.subr.mxu0 0.0
        %3290 = vmatpush1.msra.mxu0 0.0
        %3291 = vmatprep.subr.mxu0 0.0
        %3292 = vmatpush1.msra.mxu0 0.0
        %3293 = vmatprep.subr.mxu0 0.0
        %3294 = vmatpush1.msra.mxu0 0.0
        %3295 = vmatprep.subr.mxu0 0.0
        %3296 = vmatpush1.msra.mxu0 0.0
        %3297 = vmatprep.subr.mxu0 0.0
        %3298 = vmatpush1.msra.mxu0 0.0
        %3299 = vmatprep.subr.mxu0 0.0
        %3300 = vmatpush1.msra.mxu0 0.0
        %3301 = vmatprep.subr.mxu0 0.0
        %3302 = vmatpush1.msra.mxu0 0.0
        %3303 = vmatprep.subr.mxu0 0.0
        %3304 = vmatpush1.msra.mxu0 0.0
        %3305 = vmatprep.subr.mxu0 0.0
        %3306 = vmatpush1.msra.mxu0 0.0
        %3307 = vmatprep.subr.mxu0 0.0
        %3308 = vmatpush1.msra.mxu0 0.0
        %3309 = vmatprep.subr.mxu0 0.0
        %3310 = vmatpush1.msra.mxu0 0.0
        %3311 = vmatprep.subr.mxu0 0.0
        %3312 = vmatpush1.msra.mxu0 0.0
        %3313 = vmatprep.subr.mxu0 0.0
        %3314 = vmatpush1.msra.mxu0 0.0
        %3315 = vmatprep.subr.mxu0 0.0
        %3316 = vmatpush1.msra.mxu0 0.0
        %3317 = vmatprep.subr.mxu0 0.0
        %3318 = vmatpush1.msra.mxu0 0.0
        %3319 = vmatprep.subr.mxu0 0.0
        %3320 = vmatpush1.msra.mxu0 0.0
        %3321 = vmatprep.subr.mxu0 0.0
        %3322 = vmatpush1.msra.mxu0 0.0
        %3323 = vmatprep.subr.mxu0 0.0
        %3324 = vmatpush1.msra.mxu0 0.0
        %3325 = vmatprep.subr.mxu0 0.0
        %3326 = vmatpush1.msra.mxu0 0.0
        %3327 = vmatprep.subr.mxu0 0.0
        %3328 = vmatpush1.msra.mxu0 0.0
        %3329 = vmatprep.subr.mxu0 0.0
        %3330 = vmatpush1.msra.mxu0 0.0
        %3331 = vmatprep.subr.mxu0 0.0
        %3332 = vmatpush1.msra.mxu0 0.0
        %3333 = vmatprep.subr.mxu0 0.0
        %3334 = vmatpush1.msra.mxu0 0.0
        %3335 = vmatprep.subr.mxu0 0.0
        %3336 = vmatpush1.msra.mxu0 0.0
        %3337 = vmatprep.subr.mxu0 0.0
        %3338 = vmatpush1.msra.mxu0 0.0
        %3339 = vmatprep.subr.mxu0 0.0
        %3340 = vmatpush1.msra.mxu0 0.0
        %3341 = vmatprep.mubr.f32.mxu0 0.0
        %3342 = vmatmul.mubr.f32.gmra.mrb[0].mxu0 %v3267
        %v3343 = vpop.f32.mrb[0].mxu0
        %v3344 = vadd.f32 0.0, %v3343
        %v3345 = vpop.f32.mrb[0].mxu0
        %3346 = vmatprep.mubr.f32.mxu0 0.0
        %3347 = vmatmul.mubr.f32.gmra.mrb[0].mxu0 %v3270
        %v3348 = vpop.f32.mrb[0].mxu0
        %v3349 = vadd.f32 0.0, %v3348
        %v3350 = vpop.f32.mrb[0].mxu0
        %3351 = vmatprep.mubr.f32.mxu0 0.0
        %3352 = vmatmul.mubr.f32.gmra.mrb[0].mxu0 %v3273
        %v3353 = vpop.f32.mrb[0].mxu0
        %v3354 = vadd.f32 0.0, %v3353
        %v3355 = vpop.f32.mrb[0].mxu0
        %3356 = vdwg.mxu0
        %3357 = vrot.lane.b32.xlu0 %v2863, 112
        %v3358 = vpop.permute.xlu0 %3357
        %3359 = vrot.lane.b32.xlu0 %v2868, 112
        %v3360 = vpop.permute.xlu0 %3359
        %3361 = vrot.lane.b32.xlu0 %v2873, 112
        %v3362 = vpop.permute.xlu0 %3361
        %3363 = vrot.lane.b32.xlu0 %v2863, 80
        %v3364 = vpop.permute.xlu0 %3363
        %3365 = vrot.lane.b32.xlu0 %v2868, 80
        %v3366 = vpop.permute.xlu0 %3365
        %3367 = vrot.lane.b32.xlu0 %v2873, 80
        %v3368 = vpop.permute.xlu0 %3367
        %v3369 = vsel %vm1316, %v3358, 0
        %v3371 = vsel %vm1316, %v3360, 0
        %v3373 = vsel %vm1316, %v3362, 0
        %v3375 = vsel %vm1316, %v3364, 0
        %v3377 = vsel %vm1316, %v3366, 0
        %v3379 = vsel %vm1316, %v3368, 0
        %3381 = vmatprep.subr.mxu0 0.0
        %3382 = vmatpush1.xpose.msra.mxu0 %v3375
        %3383 = vmatprep.subr.mxu0 0.0
        %3384 = vmatpush1.xpose.msra.mxu0 %v3377
        %3385 = vmatprep.subr.mxu0 0.0
        %3386 = vmatpush1.xpose.msra.mxu0 %v3379
        %3387 = vmatprep.subr.mxu0 0.0
        %3388 = vmatpush1.xpose.msra.mxu0 0.0
        %3389 = vmatprep.subr.mxu0 0.0
        %3390 = vmatpush1.xpose.msra.mxu0 0.0
        %3391 = vmatprep.subr.mxu0 0.0
        %3392 = vmatpush1.xpose.msra.mxu0 0.0
        %3393 = vmatprep.subr.mxu0 0.0
        %3394 = vmatpush1.xpose.msra.mxu0 0.0
        %3395 = vmatprep.subr.mxu0 0.0
        %3396 = vmatpush1.xpose.msra.mxu0 0.0
        %3397 = vmatprep.subr.mxu0 0.0
        %3398 = vmatpush1.xpose.msra.mxu0 0.0
        %3399 = vmatprep.subr.mxu0 0.0
        %3400 = vmatpush1.xpose.msra.mxu0 0.0
        %3401 = vmatprep.subr.mxu0 0.0
        %3402 = vmatpush1.xpose.msra.mxu0 0.0
        %3403 = vmatprep.subr.mxu0 0.0
        %3404 = vmatpush1.xpose.msra.mxu0 0.0
        %3405 = vmatprep.subr.mxu0 0.0
        %3406 = vmatpush1.xpose.msra.mxu0 0.0
        %3407 = vmatprep.subr.mxu0 0.0
        %3408 = vmatpush1.xpose.msra.mxu0 0.0
        %3409 = vmatprep.subr.mxu0 0.0
        %3410 = vmatpush1.xpose.msra.mxu0 0.0
        %3411 = vmatprep.subr.mxu0 0.0
        %3412 = vmatpush1.xpose.msra.mxu0 0.0
        %3413 = vmatprep.subr.mxu0 0.0
        %3414 = vmatpush1.xpose.msra.mxu0 0.0
        %3415 = vmatprep.subr.mxu0 0.0
        %3416 = vmatpush1.xpose.msra.mxu0 0.0
        %3417 = vmatprep.subr.mxu0 0.0
        %3418 = vmatpush1.xpose.msra.mxu0 0.0
        %3419 = vmatprep.subr.mxu0 0.0
        %3420 = vmatpush1.xpose.msra.mxu0 0.0
        %3421 = vmatprep.subr.mxu0 0.0
        %3422 = vmatpush1.xpose.msra.mxu0 0.0
        %3423 = vmatprep.subr.mxu0 0.0
        %3424 = vmatpush1.xpose.msra.mxu0 0.0
        %3425 = vmatprep.subr.mxu0 0.0
        %3426 = vmatpush1.xpose.msra.mxu0 0.0
        %3427 = vmatprep.subr.mxu0 0.0
        %3428 = vmatpush1.xpose.msra.mxu0 0.0
        %3429 = vmatprep.subr.mxu0 0.0
        %3430 = vmatpush1.xpose.msra.mxu0 0.0
        %3431 = vmatprep.subr.mxu0 0.0
        %3432 = vmatpush1.xpose.msra.mxu0 0.0
        %3433 = vmatprep.subr.mxu0 0.0
        %3434 = vmatpush1.xpose.msra.mxu0 0.0
        %3435 = vmatprep.subr.mxu0 0.0
        %3436 = vmatpush1.xpose.msra.mxu0 0.0
        %3437 = vmatprep.subr.mxu0 0.0
        %3438 = vmatpush1.xpose.msra.mxu0 0.0
        %3439 = vmatprep.subr.mxu0 0.0
        %3440 = vmatpush1.xpose.msra.mxu0 0.0
        %3441 = vmatprep.subr.mxu0 0.0
        %3442 = vmatpush1.xpose.msra.mxu0 0.0
        %3443 = vmatprep.subr.mxu0 0.0
        %3444 = vmatpush1.xpose.msra.mxu0 0.0
        %3445 = vmatprep.mubr.f32.mxu0 0.0
        %3446 = vmatmul.mubr.f32.gmra.mrb[0].mxu0 %v3369
        %v3447 = vpop.f32.mrb[0].mxu0
        %v3448 = vadd.f32 0.0, %v3447
        %v3449 = vpop.f32.mrb[0].mxu0
        %3450 = vmatprep.mubr.f32.mxu0 0.0
        %3451 = vmatmul.mubr.f32.gmra.mrb[0].mxu0 %v3371
        %v3452 = vpop.f32.mrb[0].mxu0
        %v3453 = vadd.f32 0.0, %v3452
        %v3454 = vpop.f32.mrb[0].mxu0
        %3455 = vmatprep.mubr.f32.mxu0 0.0
        %3456 = vmatmul.mubr.f32.gmra.mrb[0].mxu0 %v3373
        %v3457 = vpop.f32.mrb[0].mxu0
        %v3458 = vadd.f32 0.0, %v3457
        %v3459 = vpop.f32.mrb[0].mxu0
        %3460 = vdwg.mxu0
        %v3461 = vmul.f32 %v3448, 0.35355338
        %v3462 = vmul.f32 %v3453, 0.35355338
        %v3463 = vmul.f32 %v3458, 0.35355338
        %v3464 = vsel %vm1147, %v3461, -1e+09
        %v3465 = vsel %vm1148, %v3462, -1e+09
        %v3466 = vsel %vm1149, %v3463, -1e+09
        %v3467 = vsel %vm1415, %v3464, -inf
        %3468 = vmax.xlane.f32.xlu0 %v3467
        %v3469 = vpop.xlane.xlu0 %3468
        %v3470 = vsel %vm1415, %v3465, -inf
        %3471 = vmax.xlane.f32.xlu0 %v3470
        %v3472 = vpop.xlane.xlu0 %3471
        %v3473 = vsel %vm1422, %v3466, -inf
        %3474 = vmax.xlane.f32.xlu0 %v3473
        %v3475 = vpop.xlane.xlu0 %3474
        %v3476 = vsub.f32 %v3464, %v3469
        %v3477 = vsub.f32 %v3465, %v3472
        %v3478 = vsub.f32 %v3466, %v3475
        %v3479 = vmul.f32 %v3476, 1.442695
        %v3480 = vpow.pop %v3479
        %v3481 = vmul.f32 %v3477, 1.442695
        %v3482 = vpow.pop %v3481
        %v3483 = vmul.f32 %v3478, 1.442695
        %v3484 = vpow.pop %v3483
        %v3485 = vsel %vm1415, %v3480, 0.0
        %3486 = vadd.xlane.f32.xlu0 %v3485
        %v3487 = vpop.xlane.xlu0 %3486
        %v3488 = vsel %vm1415, %v3482, 0.0
        %3489 = vadd.xlane.f32.xlu0 %v3488
        %v3490 = vpop.xlane.xlu0 %3489
        %v3491 = vsel %vm1422, %v3484, 0.0
        %3492 = vadd.xlane.f32.xlu0 %v3491
        %v3493 = vpop.xlane.xlu0 %3492
        %v3494 = vrcp.pop %v3487
        %v3495 = vmul.f32 %v3480, %v3494
        %v3496 = vrcp.pop %v3490
        %v3497 = vmul.f32 %v3482, %v3496
        %v3498 = vrcp.pop %v3493
        %v3499 = vmul.f32 %v3484, %v3498
        %3500 = vrot.lane.b32.xlu0 %v2863, 48
        %v3501 = vpop.permute.xlu0 %3500
        %3502 = vrot.lane.b32.xlu0 %v2868, 48
        %v3503 = vpop.permute.xlu0 %3502
        %3504 = vrot.lane.b32.xlu0 %v2873, 48
        %v3505 = vpop.permute.xlu0 %3504
        %v3509 = vsel %vm1415, %v3495, 0
        %v3512 = vsel %vm1415, %v3497, 0
        %v3515 = vsel %vm1415, %v3499, 0
        %v3517 = vsel %vm1112, %v3505, 0
        %3519 = vmatprep.subr.mxu0 0.0
        %3520 = vmatpush1.msra.mxu0 %v3501
        %3521 = vmatprep.subr.mxu0 0.0
        %3522 = vmatpush1.msra.mxu0 %v3503
        %3523 = vmatprep.subr.mxu0 0.0
        %3524 = vmatpush1.msra.mxu0 %v3517
        %3525 = vmatprep.subr.mxu0 0.0
        %3526 = vmatpush1.msra.mxu0 0.0
        %3527 = vmatprep.subr.mxu0 0.0
        %3528 = vmatpush1.msra.mxu0 0.0
        %3529 = vmatprep.subr.mxu0 0.0
        %3530 = vmatpush1.msra.mxu0 0.0
        %3531 = vmatprep.subr.mxu0 0.0
        %3532 = vmatpush1.msra.mxu0 0.0
        %3533 = vmatprep.subr.mxu0 0.0
        %3534 = vmatpush1.msra.mxu0 0.0
        %3535 = vmatprep.subr.mxu0 0.0
        %3536 = vmatpush1.msra.mxu0 0.0
        %3537 = vmatprep.subr.mxu0 0.0
        %3538 = vmatpush1.msra.mxu0 0.0
        %3539 = vmatprep.subr.mxu0 0.0
        %3540 = vmatpush1.msra.mxu0 0.0
        %3541 = vmatprep.subr.mxu0 0.0
        %3542 = vmatpush1.msra.mxu0 0.0
        %3543 = vmatprep.subr.mxu0 0.0
        %3544 = vmatpush1.msra.mxu0 0.0
        %3545 = vmatprep.subr.mxu0 0.0
        %3546 = vmatpush1.msra.mxu0 0.0
        %3547 = vmatprep.subr.mxu0 0.0
        %3548 = vmatpush1.msra.mxu0 0.0
        %3549 = vmatprep.subr.mxu0 0.0
        %3550 = vmatpush1.msra.mxu0 0.0
        %3551 = vmatprep.subr.mxu0 0.0
        %3552 = vmatpush1.msra.mxu0 0.0
        %3553 = vmatprep.subr.mxu0 0.0
        %3554 = vmatpush1.msra.mxu0 0.0
        %3555 = vmatprep.subr.mxu0 0.0
        %3556 = vmatpush1.msra.mxu0 0.0
        %3557 = vmatprep.subr.mxu0 0.0
        %3558 = vmatpush1.msra.mxu0 0.0
        %3559 = vmatprep.subr.mxu0 0.0
        %3560 = vmatpush1.msra.mxu0 0.0
        %3561 = vmatprep.subr.mxu0 0.0
        %3562 = vmatpush1.msra.mxu0 0.0
        %3563 = vmatprep.subr.mxu0 0.0
        %3564 = vmatpush1.msra.mxu0 0.0
        %3565 = vmatprep.subr.mxu0 0.0
        %3566 = vmatpush1.msra.mxu0 0.0
        %3567 = vmatprep.subr.mxu0 0.0
        %3568 = vmatpush1.msra.mxu0 0.0
        %3569 = vmatprep.subr.mxu0 0.0
        %3570 = vmatpush1.msra.mxu0 0.0
        %3571 = vmatprep.subr.mxu0 0.0
        %3572 = vmatpush1.msra.mxu0 0.0
        %3573 = vmatprep.subr.mxu0 0.0
        %3574 = vmatpush1.msra.mxu0 0.0
        %3575 = vmatprep.subr.mxu0 0.0
        %3576 = vmatpush1.msra.mxu0 0.0
        %3577 = vmatprep.subr.mxu0 0.0
        %3578 = vmatpush1.msra.mxu0 0.0
        %3579 = vmatprep.subr.mxu0 0.0
        %3580 = vmatpush1.msra.mxu0 0.0
        %3581 = vmatprep.subr.mxu0 0.0
        %3582 = vmatpush1.msra.mxu0 0.0
        %3583 = vmatprep.mubr.f32.mxu0 0.0
        %3584 = vmatmul.mubr.f32.gmra.mrb[0].mxu0 %v3509
        %v3585 = vpop.f32.mrb[0].mxu0
        %v3586 = vadd.f32 0.0, %v3585
        %v3587 = vpop.f32.mrb[0].mxu0
        %3588 = vmatprep.mubr.f32.mxu0 0.0
        %3589 = vmatmul.mubr.f32.gmra.mrb[0].mxu0 %v3512
        %v3590 = vpop.f32.mrb[0].mxu0
        %v3591 = vadd.f32 0.0, %v3590
        %v3592 = vpop.f32.mrb[0].mxu0
        %3593 = vmatprep.mubr.f32.mxu0 0.0
        %3594 = vmatmul.mubr.f32.gmra.mrb[0].mxu0 %v3515
        %v3595 = vpop.f32.mrb[0].mxu0
        %v3596 = vadd.f32 0.0, %v3595
        %v3597 = vpop.f32.mrb[0].mxu0
        %3598 = vdwg.mxu0
        %3599 = vrot.lane.b32.xlu0 %v2863, 104
        %v3600 = vpop.permute.xlu0 %3599
        %3601 = vrot.lane.b32.xlu0 %v2868, 104
        %v3602 = vpop.permute.xlu0 %3601
        %3603 = vrot.lane.b32.xlu0 %v2873, 104
        %v3604 = vpop.permute.xlu0 %3603
        %3605 = vrot.lane.b32.xlu0 %v2863, 72
        %v3606 = vpop.permute.xlu0 %3605
        %3607 = vrot.lane.b32.xlu0 %v2868, 72
        %v3608 = vpop.permute.xlu0 %3607
        %3609 = vrot.lane.b32.xlu0 %v2873, 72
        %v3610 = vpop.permute.xlu0 %3609
        %v3611 = vsel %vm1316, %v3600, 0
        %v3613 = vsel %vm1316, %v3602, 0
        %v3615 = vsel %vm1316, %v3604, 0
        %v3617 = vsel %vm1316, %v3606, 0
        %v3619 = vsel %vm1316, %v3608, 0
        %v3621 = vsel %vm1316, %v3610, 0
        %3623 = vmatprep.subr.mxu0 0.0
        %3624 = vmatpush1.xpose.msra.mxu0 %v3617
        %3625 = vmatprep.subr.mxu0 0.0
        %3626 = vmatpush1.xpose.msra.mxu0 %v3619
        %3627 = vmatprep.subr.mxu0 0.0
        %3628 = vmatpush1.xpose.msra.mxu0 %v3621
        %3629 = vmatprep.subr.mxu0 0.0
        %3630 = vmatpush1.xpose.msra.mxu0 0.0
        %3631 = vmatprep.subr.mxu0 0.0
        %3632 = vmatpush1.xpose.msra.mxu0 0.0
        %3633 = vmatprep.subr.mxu0 0.0
        %3634 = vmatpush1.xpose.msra.mxu0 0.0
        %3635 = vmatprep.subr.mxu0 0.0
        %3636 = vmatpush1.xpose.msra.mxu0 0.0
        %3637 = vmatprep.subr.mxu0 0.0
        %3638 = vmatpush1.xpose.msra.mxu0 0.0
        %3639 = vmatprep.subr.mxu0 0.0
        %3640 = vmatpush1.xpose.msra.mxu0 0.0
        %3641 = vmatprep.subr.mxu0 0.0
        %3642 = vmatpush1.xpose.msra.mxu0 0.0
        %3643 = vmatprep.subr.mxu0 0.0
        %3644 = vmatpush1.xpose.msra.mxu0 0.0
        %3645 = vmatprep.subr.mxu0 0.0
        %3646 = vmatpush1.xpose.msra.mxu0 0.0
        %3647 = vmatprep.subr.mxu0 0.0
        %3648 = vmatpush1.xpose.msra.mxu0 0.0
        %3649 = vmatprep.subr.mxu0 0.0
        %3650 = vmatpush1.xpose.msra.mxu0 0.0
        %3651 = vmatprep.subr.mxu0 0.0
        %3652 = vmatpush1.xpose.msra.mxu0 0.0
        %3653 = vmatprep.subr.mxu0 0.0
        %3654 = vmatpush1.xpose.msra.mxu0 0.0
        %3655 = vmatprep.subr.mxu0 0.0
        %3656 = vmatpush1.xpose.msra.mxu0 0.0
        %3657 = vmatprep.subr.mxu0 0.0
        %3658 = vmatpush1.xpose.msra.mxu0 0.0
        %3659 = vmatprep.subr.mxu0 0.0
        %3660 = vmatpush1.xpose.msra.mxu0 0.0
        %3661 = vmatprep.subr.mxu0 0.0
        %3662 = vmatpush1.xpose.msra.mxu0 0.0
        %3663 = vmatprep.subr.mxu0 0.0
        %3664 = vmatpush1.xpose.msra.mxu0 0.0
        %3665 = vmatprep.subr.mxu0 0.0
        %3666 = vmatpush1.xpose.msra.mxu0 0.0
        %3667 = vmatprep.subr.mxu0 0.0
        %3668 = vmatpush1.xpose.msra.mxu0 0.0
        %3669 = vmatprep.subr.mxu0 0.0
        %3670 = vmatpush1.xpose.msra.mxu0 0.0
        %3671 = vmatprep.subr.mxu0 0.0
        %3672 = vmatpush1.xpose.msra.mxu0 0.0
        %3673 = vmatprep.subr.mxu0 0.0
        %3674 = vmatpush1.xpose.msra.mxu0 0.0
        %3675 = vmatprep.subr.mxu0 0.0
        %3676 = vmatpush1.xpose.msra.mxu0 0.0
        %3677 = vmatprep.subr.mxu0 0.0
        %3678 = vmatpush1.xpose.msra.mxu0 0.0
        %3679 = vmatprep.subr.mxu0 0.0
        %3680 = vmatpush1.xpose.msra.mxu0 0.0
        %3681 = vmatprep.subr.mxu0 0.0
        %3682 = vmatpush1.xpose.msra.mxu0 0.0
        %3683 = vmatprep.subr.mxu0 0.0
        %3684 = vmatpush1.xpose.msra.mxu0 0.0
        %3685 = vmatprep.subr.mxu0 0.0
        %3686 = vmatpush1.xpose.msra.mxu0 0.0
        %3687 = vmatprep.mubr.f32.mxu0 0.0
        %3688 = vmatmul.mubr.f32.gmra.mrb[0].mxu0 %v3611
        %v3689 = vpop.f32.mrb[0].mxu0
        %v3690 = vadd.f32 0.0, %v3689
        %v3691 = vpop.f32.mrb[0].mxu0
        %3692 = vmatprep.mubr.f32.mxu0 0.0
        %3693 = vmatmul.mubr.f32.gmra.mrb[0].mxu0 %v3613
        %v3694 = vpop.f32.mrb[0].mxu0
        %v3695 = vadd.f32 0.0, %v3694
        %v3696 = vpop.f32.mrb[0].mxu0
        %3697 = vmatprep.mubr.f32.mxu0 0.0
        %3698 = vmatmul.mubr.f32.gmra.mrb[0].mxu0 %v3615
        %v3699 = vpop.f32.mrb[0].mxu0
        %v3700 = vadd.f32 0.0, %v3699
        %v3701 = vpop.f32.mrb[0].mxu0
        %3702 = vdwg.mxu0
        %v3703 = vmul.f32 %v3690, 0.35355338
        %v3704 = vmul.f32 %v3695, 0.35355338
        %v3705 = vmul.f32 %v3700, 0.35355338
        %v3706 = vsel %vm1147, %v3703, -1e+09
        %v3707 = vsel %vm1148, %v3704, -1e+09
        %v3708 = vsel %vm1149, %v3705, -1e+09
        %v3709 = vsel %vm1415, %v3706, -inf
        %3710 = vmax.xlane.f32.xlu0 %v3709
        %v3711 = vpop.xlane.xlu0 %3710
        %v3712 = vsel %vm1415, %v3707, -inf
        %3713 = vmax.xlane.f32.xlu0 %v3712
        %v3714 = vpop.xlane.xlu0 %3713
        %v3715 = vsel %vm1422, %v3708, -inf
        %3716 = vmax.xlane.f32.xlu0 %v3715
        %v3717 = vpop.xlane.xlu0 %3716
        %v3718 = vsub.f32 %v3706, %v3711
        %v3719 = vsub.f32 %v3707, %v3714
        %v3720 = vsub.f32 %v3708, %v3717
        %v3721 = vmul.f32 %v3718, 1.442695
        %v3722 = vpow.pop %v3721
        %v3723 = vmul.f32 %v3719, 1.442695
        %v3724 = vpow.pop %v3723
        %v3725 = vmul.f32 %v3720, 1.442695
        %v3726 = vpow.pop %v3725
        %v3727 = vsel %vm1415, %v3722, 0.0
        %3728 = vadd.xlane.f32.xlu0 %v3727
        %v3729 = vpop.xlane.xlu0 %3728
        %v3730 = vsel %vm1415, %v3724, 0.0
        %3731 = vadd.xlane.f32.xlu0 %v3730
        %v3732 = vpop.xlane.xlu0 %3731
        %v3733 = vsel %vm1422, %v3726, 0.0
        %3734 = vadd.xlane.f32.xlu0 %v3733
        %v3735 = vpop.xlane.xlu0 %3734
        %v3736 = vrcp.pop %v3729
        %v3737 = vmul.f32 %v3722, %v3736
        %v3738 = vrcp.pop %v3732
        %v3739 = vmul.f32 %v3724, %v3738
        %v3740 = vrcp.pop %v3735
        %v3741 = vmul.f32 %v3726, %v3740
        %3742 = vrot.lane.b32.xlu0 %v2863, 40
        %v3743 = vpop.permute.xlu0 %3742
        %3744 = vrot.lane.b32.xlu0 %v2868, 40
        %v3745 = vpop.permute.xlu0 %3744
        %3746 = vrot.lane.b32.xlu0 %v2873, 40
        %v3747 = vpop.permute.xlu0 %3746
        %v3751 = vsel %vm1415, %v3737, 0
        %v3754 = vsel %vm1415, %v3739, 0
        %v3757 = vsel %vm1415, %v3741, 0
        %v3759 = vsel %vm1112, %v3747, 0
        %3761 = vmatprep.subr.mxu0 0.0
        %3762 = vmatpush1.msra.mxu0 %v3743
        %3763 = vmatprep.subr.mxu0 0.0
        %3764 = vmatpush1.msra.mxu0 %v3745
        %3765 = vmatprep.subr.mxu0 0.0
        %3766 = vmatpush1.msra.mxu0 %v3759
        %3767 = vmatprep.subr.mxu0 0.0
        %3768 = vmatpush1.msra.mxu0 0.0
        %3769 = vmatprep.subr.mxu0 0.0
        %3770 = vmatpush1.msra.mxu0 0.0
        %3771 = vmatprep.subr.mxu0 0.0
        %3772 = vmatpush1.msra.mxu0 0.0
        %3773 = vmatprep.subr.mxu0 0.0
        %3774 = vmatpush1.msra.mxu0 0.0
        %3775 = vmatprep.subr.mxu0 0.0
        %3776 = vmatpush1.msra.mxu0 0.0
        %3777 = vmatprep.subr.mxu0 0.0
        %3778 = vmatpush1.msra.mxu0 0.0
        %3779 = vmatprep.subr.mxu0 0.0
        %3780 = vmatpush1.msra.mxu0 0.0
        %3781 = vmatprep.subr.mxu0 0.0
        %3782 = vmatpush1.msra.mxu0 0.0
        %3783 = vmatprep.subr.mxu0 0.0
        %3784 = vmatpush1.msra.mxu0 0.0
        %3785 = vmatprep.subr.mxu0 0.0
        %3786 = vmatpush1.msra.mxu0 0.0
        %3787 = vmatprep.subr.mxu0 0.0
        %3788 = vmatpush1.msra.mxu0 0.0
        %3789 = vmatprep.subr.mxu0 0.0
        %3790 = vmatpush1.msra.mxu0 0.0
        %3791 = vmatprep.subr.mxu0 0.0
        %3792 = vmatpush1.msra.mxu0 0.0
        %3793 = vmatprep.subr.mxu0 0.0
        %3794 = vmatpush1.msra.mxu0 0.0
        %3795 = vmatprep.subr.mxu0 0.0
        %3796 = vmatpush1.msra.mxu0 0.0
        %3797 = vmatprep.subr.mxu0 0.0
        %3798 = vmatpush1.msra.mxu0 0.0
        %3799 = vmatprep.subr.mxu0 0.0
        %3800 = vmatpush1.msra.mxu0 0.0
        %3801 = vmatprep.subr.mxu0 0.0
        %3802 = vmatpush1.msra.mxu0 0.0
        %3803 = vmatprep.subr.mxu0 0.0
        %3804 = vmatpush1.msra.mxu0 0.0
        %3805 = vmatprep.subr.mxu0 0.0
        %3806 = vmatpush1.msra.mxu0 0.0
        %3807 = vmatprep.subr.mxu0 0.0
        %3808 = vmatpush1.msra.mxu0 0.0
        %3809 = vmatprep.subr.mxu0 0.0
        %3810 = vmatpush1.msra.mxu0 0.0
        %3811 = vmatprep.subr.mxu0 0.0
        %3812 = vmatpush1.msra.mxu0 0.0
        %3813 = vmatprep.subr.mxu0 0.0
        %3814 = vmatpush1.msra.mxu0 0.0
        %3815 = vmatprep.subr.mxu0 0.0
        %3816 = vmatpush1.msra.mxu0 0.0
        %3817 = vmatprep.subr.mxu0 0.0
        %3818 = vmatpush1.msra.mxu0 0.0
        %3819 = vmatprep.subr.mxu0 0.0
        %3820 = vmatpush1.msra.mxu0 0.0
        %3821 = vmatprep.subr.mxu0 0.0
        %3822 = vmatpush1.msra.mxu0 0.0
        %3823 = vmatprep.subr.mxu0 0.0
        %3824 = vmatpush1.msra.mxu0 0.0
        %3825 = vmatprep.mubr.f32.mxu0 0.0
        %3826 = vmatmul.mubr.f32.gmra.mrb[0].mxu0 %v3751
        %v3827 = vpop.f32.mrb[0].mxu0
        %v3828 = vadd.f32 0.0, %v3827
        %v3829 = vpop.f32.mrb[0].mxu0
        %3830 = vmatprep.mubr.f32.mxu0 0.0
        %3831 = vmatmul.mubr.f32.gmra.mrb[0].mxu0 %v3754
        %v3832 = vpop.f32.mrb[0].mxu0
        %v3833 = vadd.f32 0.0, %v3832
        %v3834 = vpop.f32.mrb[0].mxu0
        %3835 = vmatprep.mubr.f32.mxu0 0.0
        %3836 = vmatmul.mubr.f32.gmra.mrb[0].mxu0 %v3757
        %v3837 = vpop.f32.mrb[0].mxu0
        %v3838 = vadd.f32 0.0, %v3837
        %v3839 = vpop.f32.mrb[0].mxu0
        %3840 = vdwg.mxu0
        %3844 = vrot.lane.b32.xlu0 %v3344, 8
        %v3845 = vpop.permute.xlu0 %3844
        %3846 = vrot.lane.b32.xlu0 %v3349, 8
        %v3847 = vpop.permute.xlu0 %3846
        %3848 = vrot.lane.b32.xlu0 %v3354, 8
        %v3849 = vpop.permute.xlu0 %3848
        %3856 = vrot.lane.b32.xlu0 %v3586, 16
        %v3857 = vpop.permute.xlu0 %3856
        %3858 = vrot.lane.b32.xlu0 %v3591, 16
        %v3859 = vpop.permute.xlu0 %3858
        %3860 = vrot.lane.b32.xlu0 %v3596, 16
        %v3861 = vpop.permute.xlu0 %3860
        %3868 = vrot.lane.b32.xlu0 %v3828, 24
        %v3869 = vpop.permute.xlu0 %3868
        %3870 = vrot.lane.b32.xlu0 %v3833, 24
        %v3871 = vpop.permute.xlu0 %3870
        %3872 = vrot.lane.b32.xlu0 %v3838, 24
        %v3873 = vpop.permute.xlu0 %3872
        %v3877 = vsel %vm1316, %v3102, %v3845
        %v3878 = vsel %vm1316, %v3107, %v3847
        %v3879 = vsel %vm1316, %v3112, %v3849
        %v3880 = vsel %vm2314, %v3877, %v3857
        %v3881 = vsel %vm2314, %v3878, %v3859
        %v3882 = vsel %vm2314, %v3879, %v3861
        %v3883 = vsel %vm2318, %v3880, %v3869
        %v3884 = vsel %vm2318, %v3881, %v3871
        %v3885 = vsel %vm2318, %v3882, %v3873
        %s3886 = scalar_lea.vmem [#allocation17], 32
        %v3887 = vld [vmem:[%s3886] sm:$0xff]
        %v3888 = vld [vmem:[%s3886 + $0x8] sm:$0xff]
        %v3889 = vld [vmem:[%s3886 + $0x10] sm:$0xff]
        %v3890 = vld [vmem:[%s3886 + $0x18] sm:$0xff]
        %v3892 = vsel %vm882, %v3883, 0
        %v3895 = vsel %vm882, %v3884, 0
        %v3898 = vsel %vm882, %v3885, 0
        %3900 = vmatprep.subr.mxu0 0.0
        %3901 = vmatpush1.msra.mxu0 %v3887
        %3902 = vmatprep.subr.mxu0 0.0
        %3903 = vmatpush1.msra.mxu0 %v3888
        %3904 = vmatprep.subr.mxu0 0.0
        %3905 = vmatpush1.msra.mxu0 %v3889
        %3906 = vmatprep.subr.mxu0 0.0
        %3907 = vmatpush1.msra.mxu0 %v3890
        %3908 = vmatprep.subr.mxu0 0.0
        %3909 = vmatpush1.msra.mxu0 0.0
        %3910 = vmatprep.subr.mxu0 0.0
        %3911 = vmatpush1.msra.mxu0 0.0
        %3912 = vmatprep.subr.mxu0 0.0
        %3913 = vmatpush1.msra.mxu0 0.0
        %3914 = vmatprep.subr.mxu0 0.0
        %3915 = vmatpush1.msra.mxu0 0.0
        %3916 = vmatprep.subr.mxu0 0.0
        %3917 = vmatpush1.msra.mxu0 0.0
        %3918 = vmatprep.subr.mxu0 0.0
        %3919 = vmatpush1.msra.mxu0 0.0
        %3920 = vmatprep.subr.mxu0 0.0
        %3921 = vmatpush1.msra.mxu0 0.0
        %3922 = vmatprep.subr.mxu0 0.0
        %3923 = vmatpush1.msra.mxu0 0.0
        %3924 = vmatprep.subr.mxu0 0.0
        %3925 = vmatpush1.msra.mxu0 0.0
        %3926 = vmatprep.subr.mxu0 0.0
        %3927 = vmatpush1.msra.mxu0 0.0
        %3928 = vmatprep.subr.mxu0 0.0
        %3929 = vmatpush1.msra.mxu0 0.0
        %3930 = vmatprep.subr.mxu0 0.0
        %3931 = vmatpush1.msra.mxu0 0.0
        %3932 = vmatprep.subr.mxu0 0.0
        %3933 = vmatpush1.msra.mxu0 0.0
        %3934 = vmatprep.subr.mxu0 0.0
        %3935 = vmatpush1.msra.mxu0 0.0
        %3936 = vmatprep.subr.mxu0 0.0
        %3937 = vmatpush1.msra.mxu0 0.0
        %3938 = vmatprep.subr.mxu0 0.0
        %3939 = vmatpush1.msra.mxu0 0.0
        %3940 = vmatprep.subr.mxu0 0.0
        %3941 = vmatpush1.msra.mxu0 0.0
        %3942 = vmatprep.subr.mxu0 0.0
        %3943 = vmatpush1.msra.mxu0 0.0
        %3944 = vmatprep.subr.mxu0 0.0
        %3945 = vmatpush1.msra.mxu0 0.0
        %3946 = vmatprep.subr.mxu0 0.0
        %3947 = vmatpush1.msra.mxu0 0.0
        %3948 = vmatprep.subr.mxu0 0.0
        %3949 = vmatpush1.msra.mxu0 0.0
        %3950 = vmatprep.subr.mxu0 0.0
        %3951 = vmatpush1.msra.mxu0 0.0
        %3952 = vmatprep.subr.mxu0 0.0
        %3953 = vmatpush1.msra.mxu0 0.0
        %3954 = vmatprep.subr.mxu0 0.0
        %3955 = vmatpush1.msra.mxu0 0.0
        %3956 = vmatprep.subr.mxu0 0.0
        %3957 = vmatpush1.msra.mxu0 0.0
        %3958 = vmatprep.subr.mxu0 0.0
        %3959 = vmatpush1.msra.mxu0 0.0
        %3960 = vmatprep.subr.mxu0 0.0
        %3961 = vmatpush1.msra.mxu0 0.0
        %3962 = vmatprep.subr.mxu0 0.0
        %3963 = vmatpush1.msra.mxu0 0.0
        %3964 = vmatprep.mubr.f32.mxu0 0.0
        %3965 = vmatmul.mubr.f32.gmra.mrb[0].mxu0 %v3892
        %v3966 = vpop.f32.mrb[0].mxu0
        %v3967 = vadd.f32 0.0, %v3966
        %v3968 = vpop.f32.mrb[0].mxu0
        %3969 = vmatprep.mubr.f32.mxu0 0.0
        %3970 = vmatmul.mubr.f32.gmra.mrb[0].mxu0 %v3895
        %v3971 = vpop.f32.mrb[0].mxu0
        %v3972 = vadd.f32 0.0, %v3971
        %v3973 = vpop.f32.mrb[0].mxu0
        %3974 = vmatprep.mubr.f32.mxu0 0.0
        %3975 = vmatmul.mubr.f32.gmra.mrb[0].mxu0 %v3898
        %v3976 = vpop.f32.mrb[0].mxu0
        %v3977 = vadd.f32 0.0, %v3976
        %v3978 = vpop.f32.mrb[0].mxu0
        %3979 = vdwg.mxu0
        %v3980 = vadd.f32 %v2716, %v3967
        %v3981 = vadd.f32 %v2717, %v3972
        %v3982 = vadd.f32 %v2718, %v3977
        %s3983 = scalar_lea.vmem %s13, 1
        %v3984 = vld [vmem:[%s3983] sm:$0x1]
        %v3986 = vlaneseq
        %v3987 = vshrl.u32 %v3986, 7
        %v3988 = vsub.s32 0, %v3987
        %v3989 = vrot.slane %v3984, %v3988
        %v3991 = vadd.f32 %v3980, %v3989
        %v3992 = vadd.f32 %v3981, %v3989
        %v3993 = vadd.f32 %v3982, %v3989
        %v3994 = vld [vmem:[#allocation14 + $0x6] sm:$0x1]
        %v3995 = vld [vmem:[#allocation14 + $0x7] sm:$0x1]
        %v3996 = vsel %vm882, %v3991, 0.0
        %3997 = vadd.xlane.f32.xlu0 %v3996
        %v3998 = vpop.xlane.xlu0 %3997
        %v3999 = vsel %vm882, %v3992, 0.0
        %4000 = vadd.xlane.f32.xlu0 %v3999
        %v4001 = vpop.xlane.xlu0 %4000
        %v4002 = vsel %vm1158, %v3993, 0.0
        %4003 = vadd.xlane.f32.xlu0 %v4002
        %v4004 = vpop.xlane.xlu0 %4003
        %v4005 = vmul.f32 %v3998, %v1162
        %v4006 = vmul.f32 %v4001, %v1162
        %v4007 = vmul.f32 %v4004, %v1162
        %v4008 = vsub.f32 %v3991, %v4005
        %v4009 = vsub.f32 %v3992, %v4006
        %v4010 = vsub.f32 %v3993, %v4007
        %v4011 = vmul.f32 %v4008, %v4008
        %v4012 = vmul.f32 %v4009, %v4009
        %v4013 = vmul.f32 %v4010, %v4010
        %v4014 = vsel %vm882, %v4011, 0.0
        %4015 = vadd.xlane.f32.xlu0 %v4014
        %v4016 = vpop.xlane.xlu0 %4015
        %v4017 = vsel %vm882, %v4012, 0.0
        %4018 = vadd.xlane.f32.xlu0 %v4017
        %v4019 = vpop.xlane.xlu0 %4018
        %v4020 = vsel %vm1158, %v4013, 0.0
        %4021 = vadd.xlane.f32.xlu0 %v4020
        %v4022 = vpop.xlane.xlu0 %4021
        %v4023 = vmul.f32 %v4016, %v1162
        %v4024 = vmul.f32 %v4019, %v1162
        %v4025 = vmul.f32 %v4022, %v1162
        %v4026 = vadd.f32 %v4023, 1e-05
        %v4027 = vadd.f32 %v4024, 1e-05
        %v4028 = vadd.f32 %v4025, 1e-05
        %v4029 = vrsqrt.pop %v4026
        %v4030 = vrsqrt.pop %v4027
        %v4031 = vrsqrt.pop %v4028
        %v4032 = vmul.f32 %v4008, %v4029
        %v4033 = vmul.f32 %v4009, %v4030
        %v4034 = vmul.f32 %v4010, %v4031
        %v4035 = vlaneseq
        %v4036 = vshrl.u32 %v4035, 7
        %v4037 = vsub.s32 0, %v4036
        %v4038 = vrot.slane %v3994, %v4037
        %v4039 = vmul.f32 %v4032, %v4038
        %v4040 = vmul.f32 %v4033, %v4038
        %v4041 = vmul.f32 %v4034, %v4038
        %v4042 = vlaneseq
        %v4043 = vshrl.u32 %v4042, 7
        %v4044 = vsub.s32 0, %v4043
        %v4045 = vrot.slane %v3995, %v4044
        %v4046 = vadd.f32 %v4039, %v4045
        %v4047 = vadd.f32 %v4040, %v4045
        %v4048 = vadd.f32 %v4041, %v4045
        %s4049 = scalar_lea.vmem %s14, 32
        %v4050 = vld [vmem:[%s4049] sm:$0xff]
        %v4051 = vld [vmem:[%s4049 + $0x8] sm:$0xff]
        %v4052 = vld [vmem:[%s4049 + $0x10] sm:$0xff]
        %v4053 = vld [vmem:[%s4049 + $0x18] sm:$0xff]
        %s4054 = scalar_lea.vmem %s15, 1
        %v4055 = vld [vmem:[%s4054] sm:$0x1]
        %v4057 = vlaneseq
        %v4058 = vshrl.u32 %v4057, 7
        %v4059 = vsub.s32 0, %v4058
        %v4060 = vrot.slane %v4055, %v4059
        %v4063 = vsel %vm882, %v4046, 0
        %v4066 = vsel %vm882, %v4047, 0
        %v4069 = vsel %vm882, %v4048, 0
        %4071 = vmatprep.subr.mxu0 0.0
        %4072 = vmatpush1.msra.mxu0 %v4050
        %4073 = vmatprep.subr.mxu0 0.0
        %4074 = vmatpush1.msra.mxu0 %v4051
        %4075 = vmatprep.subr.mxu0 0.0
        %4076 = vmatpush1.msra.mxu0 %v4052
        %4077 = vmatprep.subr.mxu0 0.0
        %4078 = vmatpush1.msra.mxu0 %v4053
        %4079 = vmatprep.subr.mxu0 0.0
        %4080 = vmatpush1.msra.mxu0 0.0
        %4081 = vmatprep.subr.mxu0 0.0
        %4082 = vmatpush1.msra.mxu0 0.0
        %4083 = vmatprep.subr.mxu0 0.0
        %4084 = vmatpush1.msra.mxu0 0.0
        %4085 = vmatprep.subr.mxu0 0.0
        %4086 = vmatpush1.msra.mxu0 0.0
        %4087 = vmatprep.subr.mxu0 0.0
        %4088 = vmatpush1.msra.mxu0 0.0
        %4089 = vmatprep.subr.mxu0 0.0
        %4090 = vmatpush1.msra.mxu0 0.0
        %4091 = vmatprep.subr.mxu0 0.0
        %4092 = vmatpush1.msra.mxu0 0.0
        %4093 = vmatprep.subr.mxu0 0.0
        %4094 = vmatpush1.msra.mxu0 0.0
        %4095 = vmatprep.subr.mxu0 0.0
        %4096 = vmatpush1.msra.mxu0 0.0
        %4097 = vmatprep.subr.mxu0 0.0
        %4098 = vmatpush1.msra.mxu0 0.0
        %4099 = vmatprep.subr.mxu0 0.0
        %4100 = vmatpush1.msra.mxu0 0.0
        %4101 = vmatprep.subr.mxu0 0.0
        %4102 = vmatpush1.msra.mxu0 0.0
        %4103 = vmatprep.subr.mxu0 0.0
        %4104 = vmatpush1.msra.mxu0 0.0
        %4105 = vmatprep.subr.mxu0 0.0
        %4106 = vmatpush1.msra.mxu0 0.0
        %4107 = vmatprep.subr.mxu0 0.0
        %4108 = vmatpush1.msra.mxu0 0.0
        %4109 = vmatprep.subr.mxu0 0.0
        %4110 = vmatpush1.msra.mxu0 0.0
        %4111 = vmatprep.subr.mxu0 0.0
        %4112 = vmatpush1.msra.mxu0 0.0
        %4113 = vmatprep.subr.mxu0 0.0
        %4114 = vmatpush1.msra.mxu0 0.0
        %4115 = vmatprep.subr.mxu0 0.0
        %4116 = vmatpush1.msra.mxu0 0.0
        %4117 = vmatprep.subr.mxu0 0.0
        %4118 = vmatpush1.msra.mxu0 0.0
        %4119 = vmatprep.subr.mxu0 0.0
        %4120 = vmatpush1.msra.mxu0 0.0
        %4121 = vmatprep.subr.mxu0 0.0
        %4122 = vmatpush1.msra.mxu0 0.0
        %4123 = vmatprep.subr.mxu0 0.0
        %4124 = vmatpush1.msra.mxu0 0.0
        %4125 = vmatprep.subr.mxu0 0.0
        %4126 = vmatpush1.msra.mxu0 0.0
        %4127 = vmatprep.subr.mxu0 0.0
        %4128 = vmatpush1.msra.mxu0 0.0
        %4129 = vmatprep.subr.mxu0 0.0
        %4130 = vmatpush1.msra.mxu0 0.0
        %4131 = vmatprep.subr.mxu0 0.0
        %4132 = vmatpush1.msra.mxu0 0.0
        %4133 = vmatprep.subr.mxu0 0.0
        %4134 = vmatpush1.msra.mxu0 0.0
        %4135 = vmatprep.mubr.f32.mxu0 0.0
        %4136 = vmatmul.mubr.f32.gmra.mrb[0].mxu0 %v4063
        %v4137 = vpop.f32.mrb[0].mxu0
        %v4138 = vadd.f32 %v4060, %v4137
        %v4139 = vpop.f32.mrb[0].mxu0
        %4140 = vmatprep.mubr.f32.mxu0 0.0
        %4141 = vmatmul.mubr.f32.gmra.mrb[0].mxu0 %v4066
        %v4142 = vpop.f32.mrb[0].mxu0
        %v4143 = vadd.f32 %v4060, %v4142
        %v4144 = vpop.f32.mrb[0].mxu0
        %4145 = vmatprep.mubr.f32.mxu0 0.0
        %4146 = vmatmul.mubr.f32.gmra.mrb[0].mxu0 %v4069
        %v4147 = vpop.f32.mrb[0].mxu0
        %v4148 = vadd.f32 %v4060, %v4147
        %v4149 = vpop.f32.mrb[0].mxu0
        %4150 = vdwg.mxu0
        %v4151 = vmul.f32 %v4138, 0.5
        %v4152 = vmul.f32 %v4143, 0.5
        %v4153 = vmul.f32 %v4148, 0.5
        %v4154 = vmul.f32 %v4138, 0.044715
        %v4155 = vmul.f32 %v4143, 0.044715
        %v4156 = vmul.f32 %v4148, 0.044715
        %v4157 = vmul.f32 %v4154, %v4138
        %v4158 = vmul.f32 %v4155, %v4143
        %v4159 = vmul.f32 %v4156, %v4148
        %v4160 = vmul.f32 %v4157, %v4138
        %v4161 = vmul.f32 %v4158, %v4143
        %v4162 = vmul.f32 %v4159, %v4148
        %v4163 = vadd.f32 %v4138, %v4160
        %v4164 = vadd.f32 %v4143, %v4161
        %v4165 = vadd.f32 %v4148, %v4162
        %v4166 = vmul.f32 %v4163, 0.7978846
        %v4167 = vmul.f32 %v4164, 0.7978846
        %v4168 = vmul.f32 %v4165, 0.7978846
        %v4169 = vtanh.pop %v4166
        %v4170 = vtanh.pop %v4167
        %v4171 = vtanh.pop %v4168
        %v4172 = vadd.f32 %v4169, 1.0
        %v4173 = vadd.f32 %v4170, 1.0
        %v4174 = vadd.f32 %v4171, 1.0
        %v4175 = vmul.f32 %v4151, %v4172
        %v4176 = vmul.f32 %v4152, %v4173
        %v4177 = vmul.f32 %v4153, %v4174
        %s4178 = scalar_lea.vmem [#allocation18], 128
        %v4179 = vld [vmem:[%s4178] sm:$0xff]
        %v4180 = vld [vmem:[%s4178 + $0x8] sm:$0xff]
        %v4181 = vld [vmem:[%s4178 + $0x10] sm:$0xff]
        %v4182 = vld [vmem:[%s4178 + $0x18] sm:$0xff]
        %v4183 = vld [vmem:[%s4178 + $0x20] sm:$0xff]
        %v4184 = vld [vmem:[%s4178 + $0x28] sm:$0xff]
        %v4185 = vld [vmem:[%s4178 + $0x30] sm:$0xff]
        %v4186 = vld [vmem:[%s4178 + $0x38] sm:$0xff]
        %v4187 = vld [vmem:[%s4178 + $0x40] sm:$0xff]
        %v4188 = vld [vmem:[%s4178 + $0x48] sm:$0xff]
        %v4189 = vld [vmem:[%s4178 + $0x50] sm:$0xff]
        %v4190 = vld [vmem:[%s4178 + $0x58] sm:$0xff]
        %v4191 = vld [vmem:[%s4178 + $0x60] sm:$0xff]
        %v4192 = vld [vmem:[%s4178 + $0x68] sm:$0xff]
        %v4193 = vld [vmem:[%s4178 + $0x70] sm:$0xff]
        %v4194 = vld [vmem:[%s4178 + $0x78] sm:$0xff]
        %4195 = vmatprep.subr.mxu0 0.0
        %4196 = vmatpush1.msra.mxu0 %v4179
        %4197 = vmatprep.subr.mxu0 0.0
        %4198 = vmatpush1.msra.mxu0 %v4180
        %4199 = vmatprep.subr.mxu0 0.0
        %4200 = vmatpush1.msra.mxu0 %v4181
        %4201 = vmatprep.subr.mxu0 0.0
        %4202 = vmatpush1.msra.mxu0 %v4182
        %4203 = vmatprep.subr.mxu0 0.0
        %4204 = vmatpush1.msra.mxu0 %v4183
        %4205 = vmatprep.subr.mxu0 0.0
        %4206 = vmatpush1.msra.mxu0 %v4184
        %4207 = vmatprep.subr.mxu0 0.0
        %4208 = vmatpush1.msra.mxu0 %v4185
        %4209 = vmatprep.subr.mxu0 0.0
        %4210 = vmatpush1.msra.mxu0 %v4186
        %4211 = vmatprep.subr.mxu0 0.0
        %4212 = vmatpush1.msra.mxu0 %v4187
        %4213 = vmatprep.subr.mxu0 0.0
        %4214 = vmatpush1.msra.mxu0 %v4188
        %4215 = vmatprep.subr.mxu0 0.0
        %4216 = vmatpush1.msra.mxu0 %v4189
        %4217 = vmatprep.subr.mxu0 0.0
        %4218 = vmatpush1.msra.mxu0 %v4190
        %4219 = vmatprep.subr.mxu0 0.0
        %4220 = vmatpush1.msra.mxu0 %v4191
        %4221 = vmatprep.subr.mxu0 0.0
        %4222 = vmatpush1.msra.mxu0 %v4192
        %4223 = vmatprep.subr.mxu0 0.0
        %4224 = vmatpush1.msra.mxu0 %v4193
        %4225 = vmatprep.subr.mxu0 0.0
        %4226 = vmatpush1.msra.mxu0 %v4194
        %4227 = vmatprep.subr.mxu0 0.0
        %4228 = vmatpush1.msra.mxu0 0.0
        %4229 = vmatprep.subr.mxu0 0.0
        %4230 = vmatpush1.msra.mxu0 0.0
        %4231 = vmatprep.subr.mxu0 0.0
        %4232 = vmatpush1.msra.mxu0 0.0
        %4233 = vmatprep.subr.mxu0 0.0
        %4234 = vmatpush1.msra.mxu0 0.0
        %4235 = vmatprep.subr.mxu0 0.0
        %4236 = vmatpush1.msra.mxu0 0.0
        %4237 = vmatprep.subr.mxu0 0.0
        %4238 = vmatpush1.msra.mxu0 0.0
        %4239 = vmatprep.subr.mxu0 0.0
        %4240 = vmatpush1.msra.mxu0 0.0
        %4241 = vmatprep.subr.mxu0 0.0
        %4242 = vmatpush1.msra.mxu0 0.0
        %4243 = vmatprep.subr.mxu0 0.0
        %4244 = vmatpush1.msra.mxu0 0.0
        %4245 = vmatprep.subr.mxu0 0.0
        %4246 = vmatpush1.msra.mxu0 0.0
        %4247 = vmatprep.subr.mxu0 0.0
        %4248 = vmatpush1.msra.mxu0 0.0
        %4249 = vmatprep.subr.mxu0 0.0
        %4250 = vmatpush1.msra.mxu0 0.0
        %4251 = vmatprep.subr.mxu0 0.0
        %4252 = vmatpush1.msra.mxu0 0.0
        %4253 = vmatprep.subr.mxu0 0.0
        %4254 = vmatpush1.msra.mxu0 0.0
        %4255 = vmatprep.subr.mxu0 0.0
        %4256 = vmatpush1.msra.mxu0 0.0
        %4257 = vmatprep.subr.mxu0 0.0
        %4258 = vmatpush1.msra.mxu0 0.0
        %4259 = vmatprep.mubr.f32.mxu0 0.0
        %4260 = vmatmul.mubr.f32.gmra.mrb[0].mxu0 %v4175
        %v4261 = vpop.f32.mrb[0].mxu0
        %v4262 = vadd.f32 0.0, %v4261
        %v4263 = vpop.f32.mrb[0].mxu0
        %4264 = vmatprep.mubr.f32.mxu0 0.0
        %4265 = vmatmul.mubr.f32.gmra.mrb[0].mxu0 %v4176
        %v4266 = vpop.f32.mrb[0].mxu0
        %v4267 = vadd.f32 0.0, %v4266
        %v4268 = vpop.f32.mrb[0].mxu0
        %4269 = vmatprep.mubr.f32.mxu0 0.0
        %4270 = vmatmul.mubr.f32.gmra.mrb[0].mxu0 %v4177
        %v4271 = vpop.f32.mrb[0].mxu0
        %v4272 = vadd.f32 0.0, %v4271
        %v4273 = vpop.f32.mrb[0].mxu0
        %4274 = vdwg.mxu0
        %v4275 = vadd.f32 %v3991, %v4262
        %v4276 = vadd.f32 %v3992, %v4267
        %v4277 = vadd.f32 %v3993, %v4272
        %s4278 = scalar_lea.vmem %s17, 1
        %v4279 = vld [vmem:[%s4278] sm:$0x1]
        %v4281 = vlaneseq
        %v4282 = vshrl.u32 %v4281, 7
        %v4283 = vsub.s32 0, %v4282
        %v4284 = vrot.slane %v4279, %v4283
        %v4286 = vadd.f32 %v4275, %v4284
        %v4287 = vadd.f32 %v4276, %v4284
        %v4288 = vadd.f32 %v4277, %v4284
        %v4289 = vld [vmem:[#allocation14 + $0x8] sm:$0x1]
        %v4290 = vld [vmem:[#allocation14 + $0x9] sm:$0x1]
        %v4291 = vsel %vm882, %v4286, 0.0
        %4292 = vadd.xlane.f32.xlu0 %v4291
        %v4293 = vpop.xlane.xlu0 %4292
        %v4294 = vsel %vm882, %v4287, 0.0
        %4295 = vadd.xlane.f32.xlu0 %v4294
        %v4296 = vpop.xlane.xlu0 %4295
        %v4297 = vsel %vm1158, %v4288, 0.0
        %4298 = vadd.xlane.f32.xlu0 %v4297
        %v4299 = vpop.xlane.xlu0 %4298
        %v4300 = vmul.f32 %v4293, %v1162
        %v4301 = vmul.f32 %v4296, %v1162
        %v4302 = vmul.f32 %v4299, %v1162
        %v4303 = vsub.f32 %v4286, %v4300
        %v4304 = vsub.f32 %v4287, %v4301
        %v4305 = vsub.f32 %v4288, %v4302
        %v4306 = vmul.f32 %v4303, %v4303
        %v4307 = vmul.f32 %v4304, %v4304
        %v4308 = vmul.f32 %v4305, %v4305
        %v4309 = vsel %vm882, %v4306, 0.0
        %4310 = vadd.xlane.f32.xlu0 %v4309
        %v4311 = vpop.xlane.xlu0 %4310
        %v4312 = vsel %vm882, %v4307, 0.0
        %4313 = vadd.xlane.f32.xlu0 %v4312
        %v4314 = vpop.xlane.xlu0 %4313
        %v4315 = vsel %vm1158, %v4308, 0.0
        %4316 = vadd.xlane.f32.xlu0 %v4315
        %v4317 = vpop.xlane.xlu0 %4316
        %v4318 = vmul.f32 %v4311, %v1162
        %v4319 = vmul.f32 %v4314, %v1162
        %v4320 = vmul.f32 %v4317, %v1162
        %v4321 = vadd.f32 %v4318, 1e-05
        %v4322 = vadd.f32 %v4319, 1e-05
        %v4323 = vadd.f32 %v4320, 1e-05
        %v4324 = vrsqrt.pop %v4321
        %v4325 = vrsqrt.pop %v4322
        %v4326 = vrsqrt.pop %v4323
        %v4327 = vmul.f32 %v4303, %v4324
        %v4328 = vmul.f32 %v4304, %v4325
        %v4329 = vmul.f32 %v4305, %v4326
        %v4330 = vlaneseq
        %v4331 = vshrl.u32 %v4330, 7
        %v4332 = vsub.s32 0, %v4331
        %v4333 = vrot.slane %v4289, %v4332
        %v4334 = vmul.f32 %v4327, %v4333
        %v4335 = vmul.f32 %v4328, %v4333
        %v4336 = vmul.f32 %v4329, %v4333
        %v4337 = vlaneseq
        %v4338 = vshrl.u32 %v4337, 7
        %v4339 = vsub.s32 0, %v4338
        %v4340 = vrot.slane %v4290, %v4339
        %v4341 = vadd.f32 %v4334, %v4340
        %v4342 = vadd.f32 %v4335, %v4340
        %v4343 = vadd.f32 %v4336, %v4340
        %v4344 = vld [vmem:[#allocation11] sm:$0xff]
        %v4345 = vld [vmem:[#allocation11 + $0x8] sm:$0xff]
        %v4346 = vld [vmem:[#allocation11 + $0x10] sm:$0xff]
        %v4347 = vld [vmem:[#allocation11 + $0x18] sm:$0xff]
        %v4348 = vld [vmem:[#allocation11 + $0x20] sm:$0xff]
        %v4349 = vld [vmem:[#allocation11 + $0x28] sm:$0xff]
        %v4350 = vld [vmem:[#allocation11 + $0x30] sm:$0xff]
        %v4351 = vld [vmem:[#allocation11 + $0x38] sm:$0xff]
        %v4353 = vsel %vm882, %v4341, 0
        %v4356 = vsel %vm882, %v4342, 0
        %v4359 = vsel %vm882, %v4343, 0
        %4361 = vmatprep.subr.mxu0 %v4345
        %4362 = vmatpush1.msra.mxu0 %v4344
        %4363 = vmatprep.subr.mxu0 %v4347
        %4364 = vmatpush1.msra.mxu0 %v4346
        %4365 = vmatprep.subr.mxu0 %v4349
        %4366 = vmatpush1.msra.mxu0 %v4348
        %4367 = vmatprep.subr.mxu0 %v4351
        %4368 = vmatpush1.msra.mxu0 %v4350
        %4369 = vmatprep.subr.mxu0 0.0
        %4370 = vmatpush1.msra.mxu0 0.0
        %4371 = vmatprep.subr.mxu0 0.0
        %4372 = vmatpush1.msra.mxu0 0.0
        %4373 = vmatprep.subr.mxu0 0.0
        %4374 = vmatpush1.msra.mxu0 0.0
        %4375 = vmatprep.subr.mxu0 0.0
        %4376 = vmatpush1.msra.mxu0 0.0
        %4377 = vmatprep.subr.mxu0 0.0
        %4378 = vmatpush1.msra.mxu0 0.0
        %4379 = vmatprep.subr.mxu0 0.0
        %4380 = vmatpush1.msra.mxu0 0.0
        %4381 = vmatprep.subr.mxu0 0.0
        %4382 = vmatpush1.msra.mxu0 0.0
        %4383 = vmatprep.subr.mxu0 0.0
        %4384 = vmatpush1.msra.mxu0 0.0
        %4385 = vmatprep.subr.mxu0 0.0
        %4386 = vmatpush1.msra.mxu0 0.0
        %4387 = vmatprep.subr.mxu0 0.0
        %4388 = vmatpush1.msra.mxu0 0.0
        %4389 = vmatprep.subr.mxu0 0.0
        %4390 = vmatpush1.msra.mxu0 0.0
        %4391 = vmatprep.subr.mxu0 0.0
        %4392 = vmatpush1.msra.mxu0 0.0
        %4393 = vmatprep.subr.mxu0 0.0
        %4394 = vmatpush1.msra.mxu0 0.0
        %4395 = vmatprep.subr.mxu0 0.0
        %4396 = vmatpush1.msra.mxu0 0.0
        %4397 = vmatprep.subr.mxu0 0.0
        %4398 = vmatpush1.msra.mxu0 0.0
        %4399 = vmatprep.subr.mxu0 0.0
        %4400 = vmatpush1.msra.mxu0 0.0
        %4401 = vmatprep.subr.mxu0 0.0
        %4402 = vmatpush1.msra.mxu0 0.0
        %4403 = vmatprep.subr.mxu0 0.0
        %4404 = vmatpush1.msra.mxu0 0.0
        %4405 = vmatprep.subr.mxu0 0.0
        %4406 = vmatpush1.msra.mxu0 0.0
        %4407 = vmatprep.subr.mxu0 0.0
        %4408 = vmatpush1.msra.mxu0 0.0
        %4409 = vmatprep.subr.mxu0 0.0
        %4410 = vmatpush1.msra.mxu0 0.0
        %4411 = vmatprep.subr.mxu0 0.0
        %4412 = vmatpush1.msra.mxu0 0.0
        %4413 = vmatprep.subr.mxu0 0.0
        %4414 = vmatpush1.msra.mxu0 0.0
        %4415 = vmatprep.subr.mxu0 0.0
        %4416 = vmatpush1.msra.mxu0 0.0
        %4417 = vmatprep.subr.mxu0 0.0
        %4418 = vmatpush1.msra.mxu0 0.0
        %4419 = vmatprep.subr.mxu0 0.0
        %4420 = vmatpush1.msra.mxu0 0.0
        %4421 = vmatprep.subr.mxu0 0.0
        %4422 = vmatpush1.msra.mxu0 0.0
        %4423 = vmatprep.subr.mxu0 0.0
        %4424 = vmatpush1.msra.mxu0 0.0
        %4425 = vmatprep.mubr.f32.mxu0 0.0
        %4426 = vmatmul.mubr.f32.gmra.mrb[0].mxu0 %v4353
        %v4427 = vpop.f32.mrb[0].mxu0
        %v4428 = vadd.f32 0.0, %v4427
        %v4429 = vpop.f32.mrb[0].mxu0
        %v4430 = vadd.f32 0.0, %v4429
        %4431 = vmatprep.mubr.f32.mxu0 0.0
        %4432 = vmatmul.mubr.f32.gmra.mrb[0].mxu0 %v4356
        %v4433 = vpop.f32.mrb[0].mxu0
        %v4434 = vadd.f32 0.0, %v4433
        %v4435 = vpop.f32.mrb[0].mxu0
        %v4436 = vadd.f32 0.0, %v4435
        %4437 = vmatprep.mubr.f32.mxu0 0.0
        %4438 = vmatmul.mubr.f32.gmra.mrb[0].mxu0 %v4359
        %v4439 = vpop.f32.mrb[0].mxu0
        %v4440 = vadd.f32 0.0, %v4439
        %v4441 = vpop.f32.mrb[0].mxu0
        %v4442 = vadd.f32 0.0, %v4441
        %4443 = vdwg.mxu0
        %4444 = vst [vmem:[%s698] sm:$0xff] %v4428
        %4445 = vst [vmem:[%s698 + $0x8] sm:$0xff] %v4430
        %4446 = vst [vmem:[%s698 + $0x10] sm:$0xff] %v4434
        %4447 = vst [vmem:[%s698 + $0x18] sm:$0xff] %v4436
        %4448 = vst [vmem:[%s698 + $0x20] sm:$0x3] %v4440
        %4449 = vst [vmem:[%s698 + $0x28] sm:$0x3] %v4442
        %p4450 = scmp.lt.s32.totalorder %s41, 1
        %s4451 = scalar_select %p4450, %s41, 1
        %s4452 = smul.addr %s4451, 6
        %s4453 = smul.addr %s4452, 8
        %s4454 = scalar_lea.vmem %s18, %s4453
        // Predicated region
        $region129: #{clip_caption_forward.1} parent=87 // pred_check
          %p4455 = pneg %p421
        $region130: #{clip_caption_forward.1} parent=87 // pred_check_branch
          %4457 = sbr.rel (%p4455) target = $region132
        $region131: #{clip_caption_forward.1} parent=87 // pred_region
          _
        $region132: #{clip_caption_forward.1} parent=87 // pred_fallthru
          _
      $region88: #{clip_caption_forward.1} parent=5 // pred_fallthru
        _
      %p4458 = scmp.le.s32.totalorder 2, %s36
      // Predicated region
      $region133: #{clip_caption_forward.1} parent=5 // pred_check
        %p4459 = pneg %p4458
      $region134: #{clip_caption_forward.1} parent=5 // pred_check_branch
        %4461 = sbr.rel (%p4459) target = $region136
      $region135: #{clip_caption_forward.1} parent=5 // pred_region
        %s4462 = ssub.s32 %s36, 2
        // Predicated region
        $region137: #{clip_caption_forward.1} parent=135 // pred_check
          %p4463 = pneg %p427
        $region138: #{clip_caption_forward.1} parent=135 // pred_check_branch
          %4465 = sbr.rel (%p4463) target = $region140
        $region139: #{clip_caption_forward.1} parent=135 // pred_region
          %p4466 = scmp.lt.s32.totalorder %s42, 1
          %s4467 = scalar_select %p4466, %s42, 1
          %s4468 = smul.addr %s4467, 6
          %s4469 = smul.addr %s4468, 8
          %s4470 = scalar_lea.vmem %s18, %s4469
        $region140: #{clip_caption_forward.1} parent=135 // pred_fallthru
          _
      $region136: #{clip_caption_forward.1} parent=5 // pred_fallthru
        _
    $region6: #{clip_caption_forward.1} parent=1 // loop_footer
      %s40 = sadd.s32 1, %s36
    $region7: #{clip_caption_forward.1} parent=1 // loop_footer_branch
      %35 = sbr.rel target = $region3
    $region8: #{clip_caption_forward.1} parent=1 // loop_exit
      _
    %4471 = vsyncpa [#allocation5], 1
    %s4472 = scalar_lea.sflag [#allocation5], 1
    %4473 = vsyncpa %s4472, 1
    %4474 = vsyncpa [#allocation7], 1
    %4475 = vsyncpa [#allocation10], 1
    %4476 = vsyncpa [#allocation13], 1
    %4477 = vsyncpa [#allocation16], 1
    %4478 = vsyncpa [#allocation19], 1

</llo_original>
